<compile_context>
chip_gen: v7x
topology: tpu7x:2x2x1
jax: 0.10.0
libtpu: 0.0.40
codegen_flags: <defaults>
</compile_context>

<pallas_src>
import functools

import jax
import jax.numpy as jnp
from jax import lax
from jax.experimental import pallas as pl
from jax.experimental.pallas import tpu as pltpu

n_embed = 384
n_head = 6
head_size = n_embed // n_head   # 64
HEAD_PAD = 128                  # per-head lane-aligned slot width


def _mha_kernel(x_ref, wqkv_ref, wp_ref, b_ref, o_ref, *, nh, hsp):
    # One grid step handles `bb` batch elements, all heads fused in-kernel.
    bb, T, C = x_ref.shape
    Cp = nh * hsp                                                     # padded concat width

    x = x_ref[...].reshape(bb * T, C)                                 # (bb*T, C) bf16

    # Fused (scaled-Q | K | V) projection: one dense MXU matmul, f32 accumulation.
    qkv = jnp.dot(x, wqkv_ref[...], preferred_element_type=jnp.float32)   # (bb*T, 3*Cp)
    qkv = qkv.astype(jnp.bfloat16).reshape(bb, T, 3 * Cp)

    # Causal mask, built once and reused by every head / batch element.
    rows = lax.broadcasted_iota(jnp.int32, (T, T), 0)
    cols = lax.broadcasted_iota(jnp.int32, (T, T), 1)
    causal = cols <= rows                                             # (T, T)

    head_outs = []
    for h in range(nh):                        # static unroll (nh = 6)
        lo = h * hsp                           # 128-lane aligned slice starts
        q = qkv[:, :, lo:lo + hsp]                                    # (bb, T, hsp) bf16
        k = qkv[:, :, Cp + lo:Cp + lo + hsp]                          # (bb, T, hsp) bf16
        v = qkv[:, :, 2 * Cp + lo:2 * Cp + lo + hsp]                  # (bb, T, hsp) bf16

        # q already carries the 1/sqrt(hs) scale (folded into the weights).
        s = jnp.einsum('bqd,bkd->bqk', q, k,
                       preferred_element_type=jnp.float32)            # (bb, T, T) f32

        # -inf is safe: the block covers full T and the diagonal guarantees a
        # finite entry per row.
        s = jnp.where(causal, s, -jnp.inf)
        s = s - jnp.max(s, axis=-1, keepdims=True)
        p = jnp.exp(s)
        p = p * pl.reciprocal(jnp.sum(p, axis=-1, keepdims=True), approx=True)

        head_outs.append(jnp.einsum('bqk,bkd->bqd', p.astype(jnp.bfloat16), v,
                                    preferred_element_type=jnp.float32))   # (bb, T, hsp)

    # Concat over heads on 128-lane boundaries -> (bb, T, Cp); single output projection.
    cat = jnp.concatenate(head_outs, axis=-1).astype(jnp.bfloat16)
    out = jnp.dot(cat.reshape(bb * T, Cp), wp_ref[...],
                  preferred_element_type=jnp.float32)                 # (bb*T, C) f32
    out = out + b_ref[...]                                            # bias add in f32
    o_ref[...] = out.reshape(bb, T, C).astype(o_ref.dtype)


def multi_head_attention(x, wq, wk, wv, wp, bias, *, block_b=None,
                         out_dtype=jnp.bfloat16):
    """x: (B, T, C); wq/wk/wv: (n_head, C, hs); wp: (n_head, hs, C); bias: (C,)."""
    B, T, C = x.shape
    nh, _, hs = wq.shape
    hsp = HEAD_PAD
    Cp = nh * hsp
    scale = float(hs) ** -0.5

    if block_b is None:
        # Two parallel grid steps keeps both v7x TensorCores busy; the block
        # still grows with B to amortize the per-step overhead on v5e/v6e.
        block_b = B // 2 if (B >= 2 and B % 2 == 0) else 1
    assert B % block_b == 0, "block_b must divide B"

    def pad_heads(w):
        # (nh, C, hs) -> (C, nh*hsp), each head's hs columns zero-padded to hsp.
        w = jnp.transpose(w, (1, 0, 2))                               # (C, nh, hs)
        w = jnp.pad(w, ((0, 0), (0, 0), (0, hsp - hs)))               # (C, nh, hsp)
        return w.reshape(C, Cp)

    # Fold the 1/sqrt(hs) scale into the Q columns (one-time weight transform).
    wq_f = pad_heads(wq) * scale
    wk_f = pad_heads(wk)
    wv_f = pad_heads(wv)
    wqkv = jnp.concatenate([wq_f, wk_f, wv_f], axis=-1)               # (C, 3*Cp)

    # Output projection with zero rows in the padded per-head slots: (Cp, C).
    wp_pad = jnp.pad(wp, ((0, 0), (0, hsp - hs), (0, 0))).reshape(Cp, C)

    # bf16 operand feed for the MXU; f32 accumulation + f32 softmax inside the kernel.
    x_bf = x.astype(jnp.bfloat16)
    wqkv = wqkv.astype(jnp.bfloat16)
    wp_pad = wp_pad.astype(jnp.bfloat16)
    bias2d = bias.reshape(1, C).astype(jnp.float32)

    kernel = functools.partial(_mha_kernel, nh=nh, hsp=hsp)

    cost = pl.CostEstimate(
        flops=2 * B * T * C * (3 * Cp)            # QKV projection
        + 4 * B * nh * T * T * hsp                # scores + p@v
        + 2 * B * T * Cp * C,                     # output projection
        transcendentals=B * nh * T * T,           # exp in softmax
        bytes_accessed=B * T * C * 2              # x (bf16)
        + (C * 3 * Cp + Cp * C) * 2 + C * 4       # weights + bias
        + B * T * C * jnp.dtype(out_dtype).itemsize,   # output
    )

    return pl.pallas_call(
        kernel,
        out_shape=jax.ShapeDtypeStruct((B, T, C), out_dtype),
        grid_spec=pltpu.PrefetchScalarGridSpec(
            num_scalar_prefetch=0,
            grid=(B // block_b,),
            in_specs=[
                pl.BlockSpec((block_b, T, C), lambda b: (b, 0, 0)),   # x
                pl.BlockSpec((C, 3 * Cp), lambda b: (0, 0)),          # fused Wqkv (resident)
                pl.BlockSpec((Cp, C), lambda b: (0, 0)),              # fused Wproj (resident)
                pl.BlockSpec((1, C), lambda b: (0, 0)),               # proj bias
            ],
            out_specs=pl.BlockSpec((block_b, T, C), lambda b: (b, 0, 0)),
        ),
        compiler_params=pltpu.CompilerParams(
            dimension_semantics=("parallel",)),
        cost_estimate=cost,
    )(x_bf, wqkv, wp_pad, bias2d)


def _reference(x, wq, wk, wv, wp, bias):
    """Plain-JAX (f32) reference matching the PyTorch forward (eval mode)."""
    B, T, C = x.shape
    nh, _, hs = wq.shape
    outs = []
    for h in range(nh):
        q = x @ wq[h]
        k = x @ wk[h]
        v = x @ wv[h]
        wei = (q @ jnp.swapaxes(k, -2, -1)) * (hs ** -0.5)
        mask = jnp.tril(jnp.ones((T, T), bool))
        wei = jnp.where(mask, wei, -jnp.inf)
        wei = jax.nn.softmax(wei, axis=-1)
        outs.append(wei @ v)
    cat = jnp.concatenate(outs, axis=-1)                              # (B, T, C)
    wproj_full = jnp.concatenate([wp[h] for h in range(nh)], axis=0)  # (C, C)
    return cat @ wproj_full + bias


if __name__ == "__main__":
    B, T = 2, 16
    key = jax.random.PRNGKey(0)
    kx, kq, kk, kv, kp, kb = jax.random.split(key, 6)

    x = jax.random.normal(kx, (B, T, n_embed), dtype=jnp.float32)
    # Per-head projection weights, stored as (n_head, C, head_size).
    wq = 0.02 * jax.random.normal(kq, (n_head, n_embed, head_size), jnp.float32)
    wk = 0.02 * jax.random.normal(kk, (n_head, n_embed, head_size), jnp.float32)
    wv = 0.02 * jax.random.normal(kv, (n_head, n_embed, head_size), jnp.float32)
    # Output projection split per head: (n_head, head_size, C); bias (C,).
    wp = 0.02 * jax.random.normal(kp, (n_head, head_size, n_embed), jnp.float32)
    bias = 0.02 * jax.random.normal(kb, (n_embed,), jnp.float32)

    out = multi_head_attention(x, wq, wk, wv, wp, bias)
    out = jax.block_until_ready(out)

    ref = _reference(x, wq, wk, wv, wp, bias)
    assert out.shape == (B, T, n_embed)
    # Kernel feeds the MXU bf16 operands (f32 accumulation) and writes bf16 output,
    # so compare at bf16-level tolerance.
    assert jnp.allclose(out.astype(jnp.float32), ref, atol=3e-2, rtol=3e-2), \
        "mismatch vs reference"

    print("KERNEL_OK")
</pallas_src>

<mosaic_0001>
module attributes {stable_mosaic.version = 11 : i64} {
  func.func @_mha_kernel(%arg0: i32, %arg1: memref<1x16x384xbf16, #tpu.memory_space<vmem>>, %arg2: memref<384x2304xbf16, #tpu.memory_space<vmem>>, %arg3: memref<768x384xbf16, #tpu.memory_space<vmem>>, %arg4: memref<1x384xf32, #tpu.memory_space<vmem>>, %arg5: memref<1x16x384xbf16, #tpu.memory_space<vmem>>) attributes {dimension_semantics = [#tpu.dimension_semantics<parallel>], iteration_bounds = array<i64: 2>, scalar_prefetch = 0 : i64, scratch_operands = 0 : i64, tpu.core_type = #tpu.core_type<tc>, window_params = [{transform_indices = @transform_0, window_bounds = array<i64: 1, 16, 384>}, {pipeline_mode = #tpu.pipeline_mode<synchronous>, transform_indices = @transform_1, window_bounds = array<i64: 384, 2304>}, {pipeline_mode = #tpu.pipeline_mode<synchronous>, transform_indices = @transform_2, window_bounds = array<i64: 768, 384>}, {pipeline_mode = #tpu.pipeline_mode<synchronous>, transform_indices = @transform_3, window_bounds = array<i64: 1, 384>}, {transform_indices = @transform_4, window_bounds = array<i64: 1, 16, 384>}]} {
    %c0 = arith.constant 0 : index
    %c0_0 = arith.constant 0 : index
    %c0_1 = arith.constant 0 : index
    %0 = vector.load %arg1[%c0, %c0_0, %c0_1] : memref<1x16x384xbf16, #tpu.memory_space<vmem>>, vector<1x16x384xbf16>
    %1 = vector.shape_cast %0 : vector<1x16x384xbf16> to vector<16x384xbf16>
    %c0_2 = arith.constant 0 : index
    %c0_3 = arith.constant 0 : index
    %2 = vector.load %arg2[%c0_2, %c0_3] : memref<384x2304xbf16, #tpu.memory_space<vmem>>, vector<384x2304xbf16>
    %cst = arith.constant dense<0.000000e+00> : vector<16x2304xf32>
    %3 = tpu.matmul %1, %2, %cst {dimension_numbers = #tpu.dot_dimension_numbers<[1], [0], [0], [1], [0, 0, 1, 1], [], []>} : vector<16x384xbf16>, vector<384x2304xbf16>, vector<16x2304xf32> -> vector<16x2304xf32>
    %4 = arith.truncf %3 : vector<16x2304xf32> to vector<16x2304xbf16>
    %5 = vector.shape_cast %4 : vector<16x2304xbf16> to vector<1x16x2304xbf16>
    %6 = tpu.iota {dimensions = array<i32: 0>} : vector<16x16xi32>
    %7 = tpu.iota {dimensions = array<i32: 1>} : vector<16x16xi32>
    %8 = arith.cmpi sle, %7, %6 : vector<16x16xi32>
    %9 = vector.extract_strided_slice %5 {offsets = [0, 0, 0], sizes = [1, 16, 128], strides = [1, 1, 1]} : vector<1x16x2304xbf16> to vector<1x16x128xbf16>
    %10 = vector.extract_strided_slice %5 {offsets = [0, 0, 768], sizes = [1, 16, 128], strides = [1, 1, 1]} : vector<1x16x2304xbf16> to vector<1x16x128xbf16>
    %11 = vector.extract_strided_slice %5 {offsets = [0, 0, 1536], sizes = [1, 16, 128], strides = [1, 1, 1]} : vector<1x16x2304xbf16> to vector<1x16x128xbf16>
    "tpu.trace_start"() <{level = 10 : i32, message = "bqd,bkd->bqk"}> : () -> ()
    %cst_4 = arith.constant dense<0.000000e+00> : vector<1x16x16xf32>
    %12 = tpu.matmul %9, %10, %cst_4 {dimension_numbers = #tpu.dot_dimension_numbers<[2], [2], [1], [1], [0, 0, 0, 1, 1, 1], [0], [0]>} : vector<1x16x128xbf16>, vector<1x16x128xbf16>, vector<1x16x16xf32> -> vector<1x16x16xf32>
    %cst_5 = arith.constant 0xFF800000 : f32
    "tpu.trace_stop"() : () -> ()
    %13 = vector.shape_cast %8 : vector<16x16xi1> to vector<1x16x16xi1>
    %14 = vector.broadcast %cst_5 : f32 to vector<1x16x16xf32>
    %15 = arith.select %13, %12, %14 : vector<1x16x16xi1>, vector<1x16x16xf32>
    %cst_6 = arith.constant dense<0xFF800000> : vector<1x16xf32>
    %16 = vector.multi_reduction <maximumf>, %15, %cst_6 [2] : vector<1x16x16xf32> to vector<1x16xf32>
    %17 = vector.shape_cast %16 : vector<1x16xf32> to vector<1x16x1xf32>
    %18 = vector.broadcast %17 : vector<1x16x1xf32> to vector<1x16x16xf32>
    %19 = arith.subf %15, %18 : vector<1x16x16xf32>
    %20 = math.exp %19 : vector<1x16x16xf32>
    %cst_7 = arith.constant dense<0.000000e+00> : vector<1x16xf32>
    %21 = vector.multi_reduction <add>, %20, %cst_7 [2] : vector<1x16x16xf32> to vector<1x16xf32>
    %22 = vector.shape_cast %21 : vector<1x16xf32> to vector<1x16x1xf32>
    %23 = tpu.reciprocal %22 {approx = true} : vector<1x16x1xf32> -> vector<1x16x1xf32>
    %24 = vector.broadcast %23 : vector<1x16x1xf32> to vector<1x16x16xf32>
    %25 = arith.mulf %20, %24 : vector<1x16x16xf32>
    %26 = arith.truncf %25 : vector<1x16x16xf32> to vector<1x16x16xbf16>
    "tpu.trace_start"() <{level = 10 : i32, message = "bqk,bkd->bqd"}> : () -> ()
    %cst_8 = arith.constant dense<0.000000e+00> : vector<1x16x128xf32>
    %27 = tpu.matmul %26, %11, %cst_8 {dimension_numbers = #tpu.dot_dimension_numbers<[2], [1], [1], [2], [0, 0, 0, 1, 1, 2], [0], [0]>} : vector<1x16x16xbf16>, vector<1x16x128xbf16>, vector<1x16x128xf32> -> vector<1x16x128xf32>
    "tpu.trace_stop"() : () -> ()
    %28 = vector.extract_strided_slice %5 {offsets = [0, 0, 128], sizes = [1, 16, 128], strides = [1, 1, 1]} : vector<1x16x2304xbf16> to vector<1x16x128xbf16>
    %29 = vector.extract_strided_slice %5 {offsets = [0, 0, 896], sizes = [1, 16, 128], strides = [1, 1, 1]} : vector<1x16x2304xbf16> to vector<1x16x128xbf16>
    %30 = vector.extract_strided_slice %5 {offsets = [0, 0, 1664], sizes = [1, 16, 128], strides = [1, 1, 1]} : vector<1x16x2304xbf16> to vector<1x16x128xbf16>
    "tpu.trace_start"() <{level = 10 : i32, message = "bqd,bkd->bqk"}> : () -> ()
    %cst_9 = arith.constant dense<0.000000e+00> : vector<1x16x16xf32>
    %31 = tpu.matmul %28, %29, %cst_9 {dimension_numbers = #tpu.dot_dimension_numbers<[2], [2], [1], [1], [0, 0, 0, 1, 1, 1], [0], [0]>} : vector<1x16x128xbf16>, vector<1x16x128xbf16>, vector<1x16x16xf32> -> vector<1x16x16xf32>
    %cst_10 = arith.constant 0xFF800000 : f32
    "tpu.trace_stop"() : () -> ()
    %32 = vector.shape_cast %8 : vector<16x16xi1> to vector<1x16x16xi1>
    %33 = vector.broadcast %cst_10 : f32 to vector<1x16x16xf32>
    %34 = arith.select %32, %31, %33 : vector<1x16x16xi1>, vector<1x16x16xf32>
    %cst_11 = arith.constant dense<0xFF800000> : vector<1x16xf32>
    %35 = vector.multi_reduction <maximumf>, %34, %cst_11 [2] : vector<1x16x16xf32> to vector<1x16xf32>
    %36 = vector.shape_cast %35 : vector<1x16xf32> to vector<1x16x1xf32>
    %37 = vector.broadcast %36 : vector<1x16x1xf32> to vector<1x16x16xf32>
    %38 = arith.subf %34, %37 : vector<1x16x16xf32>
    %39 = math.exp %38 : vector<1x16x16xf32>
    %cst_12 = arith.constant dense<0.000000e+00> : vector<1x16xf32>
    %40 = vector.multi_reduction <add>, %39, %cst_12 [2] : vector<1x16x16xf32> to vector<1x16xf32>
    %41 = vector.shape_cast %40 : vector<1x16xf32> to vector<1x16x1xf32>
    %42 = tpu.reciprocal %41 {approx = true} : vector<1x16x1xf32> -> vector<1x16x1xf32>
    %43 = vector.broadcast %42 : vector<1x16x1xf32> to vector<1x16x16xf32>
    %44 = arith.mulf %39, %43 : vector<1x16x16xf32>
    %45 = arith.truncf %44 : vector<1x16x16xf32> to vector<1x16x16xbf16>
    "tpu.trace_start"() <{level = 10 : i32, message = "bqk,bkd->bqd"}> : () -> ()
    %cst_13 = arith.constant dense<0.000000e+00> : vector<1x16x128xf32>
    %46 = tpu.matmul %45, %30, %cst_13 {dimension_numbers = #tpu.dot_dimension_numbers<[2], [1], [1], [2], [0, 0, 0, 1, 1, 2], [0], [0]>} : vector<1x16x16xbf16>, vector<1x16x128xbf16>, vector<1x16x128xf32> -> vector<1x16x128xf32>
    "tpu.trace_stop"() : () -> ()
    %47 = vector.extract_strided_slice %5 {offsets = [0, 0, 256], sizes = [1, 16, 128], strides = [1, 1, 1]} : vector<1x16x2304xbf16> to vector<1x16x128xbf16>
    %48 = vector.extract_strided_slice %5 {offsets = [0, 0, 1024], sizes = [1, 16, 128], strides = [1, 1, 1]} : vector<1x16x2304xbf16> to vector<1x16x128xbf16>
    %49 = vector.extract_strided_slice %5 {offsets = [0, 0, 1792], sizes = [1, 16, 128], strides = [1, 1, 1]} : vector<1x16x2304xbf16> to vector<1x16x128xbf16>
    "tpu.trace_start"() <{level = 10 : i32, message = "bqd,bkd->bqk"}> : () -> ()
    %cst_14 = arith.constant dense<0.000000e+00> : vector<1x16x16xf32>
    %50 = tpu.matmul %47, %48, %cst_14 {dimension_numbers = #tpu.dot_dimension_numbers<[2], [2], [1], [1], [0, 0, 0, 1, 1, 1], [0], [0]>} : vector<1x16x128xbf16>, vector<1x16x128xbf16>, vector<1x16x16xf32> -> vector<1x16x16xf32>
    %cst_15 = arith.constant 0xFF800000 : f32
    "tpu.trace_stop"() : () -> ()
    %51 = vector.shape_cast %8 : vector<16x16xi1> to vector<1x16x16xi1>
    %52 = vector.broadcast %cst_15 : f32 to vector<1x16x16xf32>
    %53 = arith.select %51, %50, %52 : vector<1x16x16xi1>, vector<1x16x16xf32>
    %cst_16 = arith.constant dense<0xFF800000> : vector<1x16xf32>
    %54 = vector.multi_reduction <maximumf>, %53, %cst_16 [2] : vector<1x16x16xf32> to vector<1x16xf32>
    %55 = vector.shape_cast %54 : vector<1x16xf32> to vector<1x16x1xf32>
    %56 = vector.broadcast %55 : vector<1x16x1xf32> to vector<1x16x16xf32>
    %57 = arith.subf %53, %56 : vector<1x16x16xf32>
    %58 = math.exp %57 : vector<1x16x16xf32>
    %cst_17 = arith.constant dense<0.000000e+00> : vector<1x16xf32>
    %59 = vector.multi_reduction <add>, %58, %cst_17 [2] : vector<1x16x16xf32> to vector<1x16xf32>
    %60 = vector.shape_cast %59 : vector<1x16xf32> to vector<1x16x1xf32>
    %61 = tpu.reciprocal %60 {approx = true} : vector<1x16x1xf32> -> vector<1x16x1xf32>
    %62 = vector.broadcast %61 : vector<1x16x1xf32> to vector<1x16x16xf32>
    %63 = arith.mulf %58, %62 : vector<1x16x16xf32>
    %64 = arith.truncf %63 : vector<1x16x16xf32> to vector<1x16x16xbf16>
    "tpu.trace_start"() <{level = 10 : i32, message = "bqk,bkd->bqd"}> : () -> ()
    %cst_18 = arith.constant dense<0.000000e+00> : vector<1x16x128xf32>
    %65 = tpu.matmul %64, %49, %cst_18 {dimension_numbers = #tpu.dot_dimension_numbers<[2], [1], [1], [2], [0, 0, 0, 1, 1, 2], [0], [0]>} : vector<1x16x16xbf16>, vector<1x16x128xbf16>, vector<1x16x128xf32> -> vector<1x16x128xf32>
    "tpu.trace_stop"() : () -> ()
    %66 = vector.extract_strided_slice %5 {offsets = [0, 0, 384], sizes = [1, 16, 128], strides = [1, 1, 1]} : vector<1x16x2304xbf16> to vector<1x16x128xbf16>
    %67 = vector.extract_strided_slice %5 {offsets = [0, 0, 1152], sizes = [1, 16, 128], strides = [1, 1, 1]} : vector<1x16x2304xbf16> to vector<1x16x128xbf16>
    %68 = vector.extract_strided_slice %5 {offsets = [0, 0, 1920], sizes = [1, 16, 128], strides = [1, 1, 1]} : vector<1x16x2304xbf16> to vector<1x16x128xbf16>
    "tpu.trace_start"() <{level = 10 : i32, message = "bqd,bkd->bqk"}> : () -> ()
    %cst_19 = arith.constant dense<0.000000e+00> : vector<1x16x16xf32>
    %69 = tpu.matmul %66, %67, %cst_19 {dimension_numbers = #tpu.dot_dimension_numbers<[2], [2], [1], [1], [0, 0, 0, 1, 1, 1], [0], [0]>} : vector<1x16x128xbf16>, vector<1x16x128xbf16>, vector<1x16x16xf32> -> vector<1x16x16xf32>
    %cst_20 = arith.constant 0xFF800000 : f32
    "tpu.trace_stop"() : () -> ()
    %70 = vector.shape_cast %8 : vector<16x16xi1> to vector<1x16x16xi1>
    %71 = vector.broadcast %cst_20 : f32 to vector<1x16x16xf32>
    %72 = arith.select %70, %69, %71 : vector<1x16x16xi1>, vector<1x16x16xf32>
    %cst_21 = arith.constant dense<0xFF800000> : vector<1x16xf32>
    %73 = vector.multi_reduction <maximumf>, %72, %cst_21 [2] : vector<1x16x16xf32> to vector<1x16xf32>
    %74 = vector.shape_cast %73 : vector<1x16xf32> to vector<1x16x1xf32>
    %75 = vector.broadcast %74 : vector<1x16x1xf32> to vector<1x16x16xf32>
    %76 = arith.subf %72, %75 : vector<1x16x16xf32>
    %77 = math.exp %76 : vector<1x16x16xf32>
    %cst_22 = arith.constant dense<0.000000e+00> : vector<1x16xf32>
    %78 = vector.multi_reduction <add>, %77, %cst_22 [2] : vector<1x16x16xf32> to vector<1x16xf32>
    %79 = vector.shape_cast %78 : vector<1x16xf32> to vector<1x16x1xf32>
    %80 = tpu.reciprocal %79 {approx = true} : vector<1x16x1xf32> -> vector<1x16x1xf32>
    %81 = vector.broadcast %80 : vector<1x16x1xf32> to vector<1x16x16xf32>
    %82 = arith.mulf %77, %81 : vector<1x16x16xf32>
    %83 = arith.truncf %82 : vector<1x16x16xf32> to vector<1x16x16xbf16>
    "tpu.trace_start"() <{level = 10 : i32, message = "bqk,bkd->bqd"}> : () -> ()
    %cst_23 = arith.constant dense<0.000000e+00> : vector<1x16x128xf32>
    %84 = tpu.matmul %83, %68, %cst_23 {dimension_numbers = #tpu.dot_dimension_numbers<[2], [1], [1], [2], [0, 0, 0, 1, 1, 2], [0], [0]>} : vector<1x16x16xbf16>, vector<1x16x128xbf16>, vector<1x16x128xf32> -> vector<1x16x128xf32>
    "tpu.trace_stop"() : () -> ()
    %85 = vector.extract_strided_slice %5 {offsets = [0, 0, 512], sizes = [1, 16, 128], strides = [1, 1, 1]} : vector<1x16x2304xbf16> to vector<1x16x128xbf16>
    %86 = vector.extract_strided_slice %5 {offsets = [0, 0, 1280], sizes = [1, 16, 128], strides = [1, 1, 1]} : vector<1x16x2304xbf16> to vector<1x16x128xbf16>
    %87 = vector.extract_strided_slice %5 {offsets = [0, 0, 2048], sizes = [1, 16, 128], strides = [1, 1, 1]} : vector<1x16x2304xbf16> to vector<1x16x128xbf16>
    "tpu.trace_start"() <{level = 10 : i32, message = "bqd,bkd->bqk"}> : () -> ()
    %cst_24 = arith.constant dense<0.000000e+00> : vector<1x16x16xf32>
    %88 = tpu.matmul %85, %86, %cst_24 {dimension_numbers = #tpu.dot_dimension_numbers<[2], [2], [1], [1], [0, 0, 0, 1, 1, 1], [0], [0]>} : vector<1x16x128xbf16>, vector<1x16x128xbf16>, vector<1x16x16xf32> -> vector<1x16x16xf32>
    %cst_25 = arith.constant 0xFF800000 : f32
    "tpu.trace_stop"() : () -> ()
    %89 = vector.shape_cast %8 : vector<16x16xi1> to vector<1x16x16xi1>
    %90 = vector.broadcast %cst_25 : f32 to vector<1x16x16xf32>
    %91 = arith.select %89, %88, %90 : vector<1x16x16xi1>, vector<1x16x16xf32>
    %cst_26 = arith.constant dense<0xFF800000> : vector<1x16xf32>
    %92 = vector.multi_reduction <maximumf>, %91, %cst_26 [2] : vector<1x16x16xf32> to vector<1x16xf32>
    %93 = vector.shape_cast %92 : vector<1x16xf32> to vector<1x16x1xf32>
    %94 = vector.broadcast %93 : vector<1x16x1xf32> to vector<1x16x16xf32>
    %95 = arith.subf %91, %94 : vector<1x16x16xf32>
    %96 = math.exp %95 : vector<1x16x16xf32>
    %cst_27 = arith.constant dense<0.000000e+00> : vector<1x16xf32>
    %97 = vector.multi_reduction <add>, %96, %cst_27 [2] : vector<1x16x16xf32> to vector<1x16xf32>
    %98 = vector.shape_cast %97 : vector<1x16xf32> to vector<1x16x1xf32>
    %99 = tpu.reciprocal %98 {approx = true} : vector<1x16x1xf32> -> vector<1x16x1xf32>
    %100 = vector.broadcast %99 : vector<1x16x1xf32> to vector<1x16x16xf32>
    %101 = arith.mulf %96, %100 : vector<1x16x16xf32>
    %102 = arith.truncf %101 : vector<1x16x16xf32> to vector<1x16x16xbf16>
    "tpu.trace_start"() <{level = 10 : i32, message = "bqk,bkd->bqd"}> : () -> ()
    %cst_28 = arith.constant dense<0.000000e+00> : vector<1x16x128xf32>
    %103 = tpu.matmul %102, %87, %cst_28 {dimension_numbers = #tpu.dot_dimension_numbers<[2], [1], [1], [2], [0, 0, 0, 1, 1, 2], [0], [0]>} : vector<1x16x16xbf16>, vector<1x16x128xbf16>, vector<1x16x128xf32> -> vector<1x16x128xf32>
    "tpu.trace_stop"() : () -> ()
    %104 = vector.extract_strided_slice %5 {offsets = [0, 0, 640], sizes = [1, 16, 128], strides = [1, 1, 1]} : vector<1x16x2304xbf16> to vector<1x16x128xbf16>
    %105 = vector.extract_strided_slice %5 {offsets = [0, 0, 1408], sizes = [1, 16, 128], strides = [1, 1, 1]} : vector<1x16x2304xbf16> to vector<1x16x128xbf16>
    %106 = vector.extract_strided_slice %5 {offsets = [0, 0, 2176], sizes = [1, 16, 128], strides = [1, 1, 1]} : vector<1x16x2304xbf16> to vector<1x16x128xbf16>
    "tpu.trace_start"() <{level = 10 : i32, message = "bqd,bkd->bqk"}> : () -> ()
    %cst_29 = arith.constant dense<0.000000e+00> : vector<1x16x16xf32>
    %107 = tpu.matmul %104, %105, %cst_29 {dimension_numbers = #tpu.dot_dimension_numbers<[2], [2], [1], [1], [0, 0, 0, 1, 1, 1], [0], [0]>} : vector<1x16x128xbf16>, vector<1x16x128xbf16>, vector<1x16x16xf32> -> vector<1x16x16xf32>
    %cst_30 = arith.constant 0xFF800000 : f32
    "tpu.trace_stop"() : () -> ()
    %108 = vector.shape_cast %8 : vector<16x16xi1> to vector<1x16x16xi1>
    %109 = vector.broadcast %cst_30 : f32 to vector<1x16x16xf32>
    %110 = arith.select %108, %107, %109 : vector<1x16x16xi1>, vector<1x16x16xf32>
    %cst_31 = arith.constant dense<0xFF800000> : vector<1x16xf32>
    %111 = vector.multi_reduction <maximumf>, %110, %cst_31 [2] : vector<1x16x16xf32> to vector<1x16xf32>
    %112 = vector.shape_cast %111 : vector<1x16xf32> to vector<1x16x1xf32>
    %113 = vector.broadcast %112 : vector<1x16x1xf32> to vector<1x16x16xf32>
    %114 = arith.subf %110, %113 : vector<1x16x16xf32>
    %115 = math.exp %114 : vector<1x16x16xf32>
    %cst_32 = arith.constant dense<0.000000e+00> : vector<1x16xf32>
    %116 = vector.multi_reduction <add>, %115, %cst_32 [2] : vector<1x16x16xf32> to vector<1x16xf32>
    %117 = vector.shape_cast %116 : vector<1x16xf32> to vector<1x16x1xf32>
    %118 = tpu.reciprocal %117 {approx = true} : vector<1x16x1xf32> -> vector<1x16x1xf32>
    %119 = vector.broadcast %118 : vector<1x16x1xf32> to vector<1x16x16xf32>
    %120 = arith.mulf %115, %119 : vector<1x16x16xf32>
    %121 = arith.truncf %120 : vector<1x16x16xf32> to vector<1x16x16xbf16>
    "tpu.trace_start"() <{level = 10 : i32, message = "bqk,bkd->bqd"}> : () -> ()
    %cst_33 = arith.constant dense<0.000000e+00> : vector<1x16x128xf32>
    %122 = tpu.matmul %121, %106, %cst_33 {dimension_numbers = #tpu.dot_dimension_numbers<[2], [1], [1], [2], [0, 0, 0, 1, 1, 2], [0], [0]>} : vector<1x16x16xbf16>, vector<1x16x128xbf16>, vector<1x16x128xf32> -> vector<1x16x128xf32>
    "tpu.trace_stop"() : () -> ()
    %123 = tpu.concatenate %27, %46, %65, %84, %103, %122 in 2 : vector<1x16x128xf32>, vector<1x16x128xf32>, vector<1x16x128xf32>, vector<1x16x128xf32>, vector<1x16x128xf32>, vector<1x16x128xf32> -> vector<1x16x768xf32>
    %124 = arith.truncf %123 : vector<1x16x768xf32> to vector<1x16x768xbf16>
    %125 = vector.shape_cast %124 : vector<1x16x768xbf16> to vector<16x768xbf16>
    %c0_34 = arith.constant 0 : index
    %c0_35 = arith.constant 0 : index
    %126 = vector.load %arg3[%c0_34, %c0_35] : memref<768x384xbf16, #tpu.memory_space<vmem>>, vector<768x384xbf16>
    %cst_36 = arith.constant dense<0.000000e+00> : vector<16x384xf32>
    %127 = tpu.matmul %125, %126, %cst_36 {dimension_numbers = #tpu.dot_dimension_numbers<[1], [0], [0], [1], [0, 0, 1, 1], [], []>} : vector<16x768xbf16>, vector<768x384xbf16>, vector<16x384xf32> -> vector<16x384xf32>
    %c0_37 = arith.constant 0 : index
    %c0_38 = arith.constant 0 : index
    %128 = vector.load %arg4[%c0_37, %c0_38] : memref<1x384xf32, #tpu.memory_space<vmem>>, vector<1x384xf32>
    %129 = vector.broadcast %128 : vector<1x384xf32> to vector<16x384xf32>
    %130 = arith.addf %127, %129 : vector<16x384xf32>
    %131 = vector.shape_cast %130 : vector<16x384xf32> to vector<1x16x384xf32>
    %132 = arith.truncf %131 : vector<1x16x384xf32> to vector<1x16x384xbf16>
    %c0_39 = arith.constant 0 : index
    %c0_40 = arith.constant 0 : index
    %c0_41 = arith.constant 0 : index
    %133 = vector.load %arg5[%c0_39, %c0_40, %c0_41] : memref<1x16x384xbf16, #tpu.memory_space<vmem>>, vector<1x16x384xbf16>
    tpu.vector_store %arg5[%c0_39, %c0_40, %c0_41], %132 {strides = array<i32>} : memref<1x16x384xbf16, #tpu.memory_space<vmem>>, vector<1x16x384xbf16>,
    return
  }
  func.func @transform_0(%arg0: i32) -> (i32, i32, i32) {
    %c0_i32 = arith.constant 0 : i32
    %c0_i32_0 = arith.constant 0 : i32
    %c0_i32_1 = arith.constant 0 : i32
    return %arg0, %c0_i32, %c0_i32_0 : i32, i32, i32
  }
  func.func @transform_1(%arg0: i32) -> (i32, i32) {
    %c0_i32 = arith.constant 0 : i32
    %c0_i32_0 = arith.constant 0 : i32
    %c0_i32_1 = arith.constant 0 : i32
    return %c0_i32, %c0_i32_0 : i32, i32
  }
  func.func @transform_2(%arg0: i32) -> (i32, i32) {
    %c0_i32 = arith.constant 0 : i32
    %c0_i32_0 = arith.constant 0 : i32
    %c0_i32_1 = arith.constant 0 : i32
    return %c0_i32, %c0_i32_0 : i32, i32
  }
  func.func @transform_3(%arg0: i32) -> (i32, i32) {
    %c0_i32 = arith.constant 0 : i32
    %c0_i32_0 = arith.constant 0 : i32
    %c0_i32_1 = arith.constant 0 : i32
    return %c0_i32, %c0_i32_0 : i32, i32
  }
  func.func @transform_4(%arg0: i32) -> (i32, i32, i32) {
    %c0_i32 = arith.constant 0 : i32
    %c0_i32_0 = arith.constant 0 : i32
    %c0_i32_1 = arith.constant 0 : i32
    return %arg0, %c0_i32, %c0_i32_0 : i32, i32, i32
  }
}

</mosaic_0001>

<llo_original>
// kernel: tpu_custom_call.1
$region0: #{tpu_custom_call.1}
  #allocation0 [shape = 'u32[]', space=smem, size = 0x4, offset = 0x4, fixed_abs, tag = 'smem constant byte address 0x4 - core index']
  #allocation1 [shape = 'u32[144,128]{1,0:T(1,128)}', space=vmem, size = 0x12000, scoped, tag = 'internal scratch']
  %s0 = inlined_call_operand.hbm [shape: bf16[2,16,384], index: 0, kind: input, shape index: {}]
  %s1 = inlined_call_operand.hbm [shape: bf16[384,2304], index: 1, kind: input, shape index: {}]
  %s2 = inlined_call_operand.hbm [shape: bf16[768,384], index: 2, kind: input, shape index: {}]
  %s3 = inlined_call_operand.hbm [shape: f32[1,384], index: 3, kind: input, shape index: {}]
  %s4 = inlined_call_operand.hbm [shape: bf16[2,16,384], index: 4, kind: output, shape index: {}]
  %s5 = sld [smem:[#allocation0]]
  $region65: #{tpu_custom_call.1} parent=0
    _
  %s7 = ssub.s32 1, %s5
  %s8 = scalar_select 0, %s7, %s5
  $region1: #{tpu_custom_call.1} parent=0
    #allocation2 [shape = 'u8[24576]{0}', space=vmem, size = 0x6000, scoped, tag = 'input window, operand 0']
    #allocation3 [shape = 's32[2]{0}', space=sflag, size = 0x8, scoped, tag = 'scoped memory for tpu_custom_call.1']
    #allocation4 [shape = 's32[2]{0}', space=sflag, size = 0x8, scoped, tag = 'scoped memory for tpu_custom_call.1']
    #allocation5 [shape = 'u8[1769472]{0}', space=vmem, size = 0x1b0000, scoped, tag = 'input window, operand 1, single buffered']
    #allocation6 [shape = 's32[1]{0}', space=sflag, size = 0x4, scoped, tag = 'scoped memory for tpu_custom_call.1']
    #allocation7 [shape = 'u8[589824]{0}', space=vmem, size = 0x90000, scoped, tag = 'input window, operand 2, single buffered']
    #allocation8 [shape = 'u8[1536]{0}', space=vmem, size = 0x800, scoped, tag = 'input window, operand 3, single buffered']
    #allocation9 [shape = 's32[1]{0}', space=sflag, size = 0x4, scoped, tag = 'scoped memory for tpu_custom_call.1']
    #allocation10 [shape = 'u8[24576]{0}', space=vmem, size = 0x6000, scoped, tag = 'output window, operand 0']
    %9 = vsyncpa [#allocation3], 0
    %s10 = scalar_lea.sflag [#allocation3], 1
    %11 = vsyncpa %s10, 0
    %12 = vsyncpa [#allocation6], 0
    %13 = vsyncpa [#allocation9], 0
    %14 = vsyncpa [#allocation4], 0
    %s15 = scalar_lea.sflag [#allocation4], 1
    %16 = vsyncpa %s15, 0
    loop: start=0, step=1, limit=4
    $region2: #{tpu_custom_call.1} parent=1 // loop_pre_header
      _
    $region3: #{tpu_custom_call.1} parent=1 // loop_header
      %s18 = sphi 0, %s22
      %p19 = scmp.ge.s32.totalorder %s18, 4
      %s28 = sphi 0, %s30
      %s31 = sphi 0, %s28
      %s32 = sphi 0, %s31
      %s48 = sphi 0, %s32
      %s52 = sphi 0, %s52
      %s54 = sphi 0, %s52
      %s55 = sphi 0, %s54
      %s69 = sphi 0, %s55
      %s73 = sphi 0, %s73
      %s75 = sphi 0, %s73
      %s76 = sphi 0, %s75
      %s90 = sphi 0, %s76
      %s94 = sphi 0, %s94
      %s96 = sphi 0, %s94
      %s97 = sphi 0, %s96
      %s111 = sphi 0, %s97
      %s117 = sphi 0, %s119
      %s120 = sphi 0, %s117
      %s121 = sphi 0, %s120
      %s137 = sphi 0, %s121
    $region4: #{tpu_custom_call.1} parent=1 // loop_header_branch
      %21 = sbr.rel (%p19) target = $region8
    $region5: #{tpu_custom_call.1} parent=1 // loop_body
      %s23 = ssub.s32 %s18, 1
      %s24 = ssub.s32 %s18, 2
      %s25 = sadd.s32 %s18, 1
      %s26 = ssub.s32 %s18, %s25
      %p27 = scmp.eq.s32.totalorder %s26, 0
      %s29 = sadd.s32 %s28, 1
      %s30 = scalar_select %p27, %s28, %s29
      %p33 = pneg %p27
      %p34 = scmp.eq.s32.totalorder %s18, 1
      %p35 = por %p33, %p34
      %p36 = scmp.ne.s32.totalorder %s28, %s31
      %p37 = scmp.eq.s32.totalorder %s18, 0
      %p38 = por %p36, %p37
      %p39 = scmp.ne.s32.totalorder %s28, %s31
      %p40 = scmp.eq.s32.totalorder %s23, 1
      %p41 = por %p39, %p40
      %p42 = scmp.ne.s32.totalorder %s31, %s32
      %p43 = scmp.eq.s32.totalorder %s23, 0
      %p44 = por %p42, %p43
      %p45 = scmp.ne.s32.totalorder %s31, %s32
      %p46 = scmp.eq.s32.totalorder %s24, 1
      %p47 = por %p45, %p46
      %p49 = scmp.ne.s32.totalorder %s32, %s48
      %p50 = scmp.eq.s32.totalorder %s24, 0
      %p51 = por %p49, %p50
      %s53 = sadd.s32 %s52, 1
      %p56 = scmp.eq.s32.totalorder %s18, 1
      %p57 = scmp.ne.s32.totalorder %s52, %s54
      %p58 = scmp.eq.s32.totalorder %s18, 0
      %p59 = por %p57, %p58
      %p60 = scmp.ne.s32.totalorder %s52, %s54
      %p61 = scmp.eq.s32.totalorder %s23, 1
      %p62 = por %p60, %p61
      %p63 = scmp.ne.s32.totalorder %s54, %s55
      %p64 = scmp.eq.s32.totalorder %s23, 0
      %p65 = por %p63, %p64
      %p66 = scmp.ne.s32.totalorder %s54, %s55
      %p67 = scmp.eq.s32.totalorder %s24, 1
      %p68 = por %p66, %p67
      %p70 = scmp.ne.s32.totalorder %s55, %s69
      %p71 = scmp.eq.s32.totalorder %s24, 0
      %p72 = por %p70, %p71
      %s74 = sadd.s32 %s73, 1
      %p77 = scmp.eq.s32.totalorder %s18, 1
      %p78 = scmp.ne.s32.totalorder %s73, %s75
      %p79 = scmp.eq.s32.totalorder %s18, 0
      %p80 = por %p78, %p79
      %p81 = scmp.ne.s32.totalorder %s73, %s75
      %p82 = scmp.eq.s32.totalorder %s23, 1
      %p83 = por %p81, %p82
      %p84 = scmp.ne.s32.totalorder %s75, %s76
      %p85 = scmp.eq.s32.totalorder %s23, 0
      %p86 = por %p84, %p85
      %p87 = scmp.ne.s32.totalorder %s75, %s76
      %p88 = scmp.eq.s32.totalorder %s24, 1
      %p89 = por %p87, %p88
      %p91 = scmp.ne.s32.totalorder %s76, %s90
      %p92 = scmp.eq.s32.totalorder %s24, 0
      %p93 = por %p91, %p92
      %s95 = sadd.s32 %s94, 1
      %p98 = scmp.eq.s32.totalorder %s18, 1
      %p99 = scmp.ne.s32.totalorder %s94, %s96
      %p100 = scmp.eq.s32.totalorder %s18, 0
      %p101 = por %p99, %p100
      %p102 = scmp.ne.s32.totalorder %s94, %s96
      %p103 = scmp.eq.s32.totalorder %s23, 1
      %p104 = por %p102, %p103
      %p105 = scmp.ne.s32.totalorder %s96, %s97
      %p106 = scmp.eq.s32.totalorder %s23, 0
      %p107 = por %p105, %p106
      %p108 = scmp.ne.s32.totalorder %s96, %s97
      %p109 = scmp.eq.s32.totalorder %s24, 1
      %p110 = por %p108, %p109
      %p112 = scmp.ne.s32.totalorder %s97, %s111
      %p113 = scmp.eq.s32.totalorder %s24, 0
      %p114 = por %p112, %p113
      %s115 = ssub.s32 %s18, %s25
      %p116 = scmp.eq.s32.totalorder %s115, 0
      %s118 = sadd.s32 %s117, 1
      %s119 = scalar_select %p116, %s117, %s118
      %p122 = pneg %p116
      %p123 = scmp.eq.s32.totalorder %s18, 1
      %p124 = por %p122, %p123
      %p125 = scmp.ne.s32.totalorder %s117, %s120
      %p126 = scmp.eq.s32.totalorder %s18, 0
      %p127 = por %p125, %p126
      %p128 = scmp.ne.s32.totalorder %s117, %s120
      %p129 = scmp.eq.s32.totalorder %s23, 1
      %p130 = por %p128, %p129
      %p131 = scmp.ne.s32.totalorder %s120, %s121
      %p132 = scmp.eq.s32.totalorder %s23, 0
      %p133 = por %p131, %p132
      %p134 = scmp.ne.s32.totalorder %s120, %s121
      %p135 = scmp.eq.s32.totalorder %s24, 1
      %p136 = por %p134, %p135
      %p138 = scmp.ne.s32.totalorder %s121, %s137
      %p139 = scmp.eq.s32.totalorder %s24, 0
      %p140 = por %p138, %p139
      %p141 = scmp.le.s32.totalorder 1, %s18
      %p142 = scmp.lt.s32.totalorder %s18, 3
      %p143 = pnand %p141, %p142
      %p144 = pneg %p143
      // Predicated region
      $region9: #{tpu_custom_call.1} parent=5 // pred_check
        _
      $region10: #{tpu_custom_call.1} parent=5 // pred_check_branch
        %146 = sbr.rel (%p143) target = $region12
      $region11: #{tpu_custom_call.1} parent=5 // pred_region
        %s147 = ssub.s32 %s18, 1
        // Predicated region
        $region13: #{tpu_custom_call.1} parent=11 // pred_check
          %p148 = pneg %p65
        $region14: #{tpu_custom_call.1} parent=11 // pred_check_branch
          %150 = sbr.rel (%p148) target = $region16
        $region15: #{tpu_custom_call.1} parent=11 // pred_region
          %s152 = ssub.s32 55296, 55296
          %153 = vsyncadd [#allocation6], %s152
          %s154 = sshll.u32 [#allocation5], 4
          %s155 = int_to_ptr.vmem [resolvable:$true] %s154
          %160 = dma.hbm_to_vmem [thread:$0]  %s1, 55296, %s155, [#allocation6], 1152, 1152, 72
        $region16: #{tpu_custom_call.1} parent=11 // pred_fallthru
          _
        // Predicated region
        $region17: #{tpu_custom_call.1} parent=11 // pred_check
          %p161 = pneg %p86
        $region18: #{tpu_custom_call.1} parent=11 // pred_check_branch
          %163 = sbr.rel (%p161) target = $region20
        $region19: #{tpu_custom_call.1} parent=11 // pred_region
          %s165 = ssub.s32 18432, 18432
          %166 = vsyncadd [#allocation6], %s165
          %s167 = sshll.u32 [#allocation7], 4
          %s168 = int_to_ptr.vmem [resolvable:$true] %s167
          %173 = dma.hbm_to_vmem [thread:$0]  %s2, 18432, %s168, [#allocation6], 192, 192, 12
        $region20: #{tpu_custom_call.1} parent=11 // pred_fallthru
          _
        // Predicated region
        $region21: #{tpu_custom_call.1} parent=11 // pred_check
          %p174 = pneg %p107
        $region22: #{tpu_custom_call.1} parent=11 // pred_check_branch
          %176 = sbr.rel (%p174) target = $region24
        $region23: #{tpu_custom_call.1} parent=11 // pred_region
          %s178 = ssub.s32 48, 48
          %179 = vsyncadd [#allocation9], %s178
          %s181 = sshll.u32 [#allocation8], 4
          %s182 = int_to_ptr.vmem [resolvable:$true] %s181
          %184 = dma.hbm_to_vmem [thread:$0]  %s3, 48, %s182, [#allocation9]
        $region24: #{tpu_custom_call.1} parent=11 // pred_fallthru
          _
      $region12: #{tpu_custom_call.1} parent=5 // pred_fallthru
        _
      %p185 = scmp.lt.s32.totalorder %s18, 2
      // Predicated region
      $region25: #{tpu_custom_call.1} parent=5 // pred_check
        %p186 = pneg %p185
      $region26: #{tpu_custom_call.1} parent=5 // pred_check_branch
        %188 = sbr.rel (%p186) target = $region28
      $region27: #{tpu_custom_call.1} parent=5 // pred_region
        // Predicated region
        $region29: #{tpu_custom_call.1} parent=27 // pred_check
          %p189 = pneg %p38
        $region30: #{tpu_custom_call.1} parent=27 // pred_check_branch
          %191 = sbr.rel (%p189) target = $region32
        $region31: #{tpu_custom_call.1} parent=27 // pred_region
          %s192 = sand.u32 %s28, 1
          %s193 = scalar_lea.sflag [#allocation3], %s192
          %s194 = sand.u32 %s28, 1
          %s195 = smul.addr %s194, 24
          %s196 = scalar_lea.vmem [#allocation2], %s195
          %s198 = ssub.s32 384, 384
          %199 = vsyncadd %s193, %s198
          %s200 = smul.addr %s18, 6
          %s201 = smul.addr %s200, 64
          %s202 = scalar_lea.hbm %s0, %s201
          %s203 = sshll.u32 %s196, 4
          %s204 = int_to_ptr.vmem [resolvable:$true] %s203
          %209 = dma.hbm_to_vmem [thread:$0]  %s202, 384, %s204, %s193, 192, 192, 12
        $region32: #{tpu_custom_call.1} parent=27 // pred_fallthru
          _
      $region28: #{tpu_custom_call.1} parent=5 // pred_fallthru
        _
      %p210 = scmp.le.s32.totalorder 1, %s18
      %p211 = scmp.lt.s32.totalorder %s18, 3
      %p212 = pnand %p210, %p211
      %p213 = pneg %p212
      // Predicated region
      $region33: #{tpu_custom_call.1} parent=5 // pred_check
        _
      $region34: #{tpu_custom_call.1} parent=5 // pred_check_branch
        %215 = sbr.rel (%p212) target = $region36
      $region35: #{tpu_custom_call.1} parent=5 // pred_region
        %s216 = ssub.s32 %s18, 1
        %s217 = sand.u32 %s31, 1
        %s218 = scalar_lea.sflag [#allocation3], %s217
        %s219 = sand.u32 %s31, 1
        %s220 = smul.addr %s219, 24
        %s221 = scalar_lea.vmem [#allocation2], %s220
        // Predicated region
        $region37: #{tpu_custom_call.1} parent=35 // pred_check
          %p222 = pneg %p44
        $region38: #{tpu_custom_call.1} parent=35 // pred_check_branch
          %224 = sbr.rel (%p222) target = $region40
        $region39: #{tpu_custom_call.1} parent=35 // pred_region
          %225 = dma.done %s218, 384
        $region40: #{tpu_custom_call.1} parent=35 // pred_fallthru
          _
        // Predicated region
        $region41: #{tpu_custom_call.1} parent=35 // pred_check
          %p226 = pneg %p65
        $region42: #{tpu_custom_call.1} parent=35 // pred_check_branch
          %228 = sbr.rel (%p226) target = $region44
        $region43: #{tpu_custom_call.1} parent=35 // pred_region
          %229 = dma.done [#allocation6], 55296
        $region44: #{tpu_custom_call.1} parent=35 // pred_fallthru
          _
        // Predicated region
        $region45: #{tpu_custom_call.1} parent=35 // pred_check
          %p230 = pneg %p86
        $region46: #{tpu_custom_call.1} parent=35 // pred_check_branch
          %232 = sbr.rel (%p230) target = $region48
        $region47: #{tpu_custom_call.1} parent=35 // pred_region
          %233 = dma.done [#allocation6], 18432
        $region48: #{tpu_custom_call.1} parent=35 // pred_fallthru
          _
        // Predicated region
        $region49: #{tpu_custom_call.1} parent=35 // pred_check
          %p234 = pneg %p107
        $region50: #{tpu_custom_call.1} parent=35 // pred_check_branch
          %236 = sbr.rel (%p234) target = $region52
        $region51: #{tpu_custom_call.1} parent=35 // pred_region
          %237 = dma.done [#allocation9], 48
        $region52: #{tpu_custom_call.1} parent=35 // pred_fallthru
          _
        %s238 = sand.u32 %s31, 1
        %s239 = scalar_lea.sflag [#allocation3], %s238
        %s240 = sand.u32 %s31, 1
        %s241 = smul.addr %s240, 24
        %s242 = scalar_lea.vmem [#allocation2], %s241
        %p243 = pneg %p44
        %p244 = pneg %p41
        %p245 = pneg %p65
        %p246 = pneg %p62
        %p247 = pneg %p86
        %p248 = pneg %p83
        %p249 = pneg %p107
        %p250 = pneg %p104
        %p251 = pneg %p133
        %p252 = pneg %p130
        %s253 = sand.u32 %s120, 1
        %s254 = scalar_lea.sflag [#allocation4], %s253
        %s255 = sand.u32 %s120, 1
        %s256 = smul.addr %s255, 24
        %s257 = scalar_lea.vmem [#allocation10], %s256
        %v259 = vld [vmem:[%s221] sm:$0xff]
        %v260 = vld [vmem:[%s221 + $0x8] sm:$0xf]
        %v261 = vld [vmem:[%s221 + $0xc] sm:$0xff]
        %v262 = vld [vmem:[%s221 + $0x14] sm:$0xf]
        %v263 = vld [vmem:[#allocation5] sm:$0xff]
        %v264 = vld [vmem:[#allocation5 + $0x8] sm:$0xff]
        %v265 = vld [vmem:[#allocation5 + $0x10] sm:$0xff]
        %v266 = vld [vmem:[#allocation5 + $0x18] sm:$0xff]
        %v267 = vld [vmem:[#allocation5 + $0x20] sm:$0xff]
        %v268 = vld [vmem:[#allocation5 + $0x28] sm:$0xff]
        %v269 = vld [vmem:[#allocation5 + $0x30] sm:$0xff]
        %v270 = vld [vmem:[#allocation5 + $0x38] sm:$0xff]
        %v271 = vld [vmem:[#allocation5 + $0x40] sm:$0xff]
        %v272 = vld [vmem:[#allocation5 + $0x48] sm:$0xff]
        %v273 = vld [vmem:[#allocation5 + $0x50] sm:$0xff]
        %v274 = vld [vmem:[#allocation5 + $0x58] sm:$0xff]
        %v275 = vld [vmem:[#allocation5 + $0x60] sm:$0xff]
        %v276 = vld [vmem:[#allocation5 + $0x68] sm:$0xff]
        %v277 = vld [vmem:[#allocation5 + $0x70] sm:$0xff]
        %v278 = vld [vmem:[#allocation5 + $0x78] sm:$0xff]
        %v279 = vld [vmem:[#allocation5 + $0x80] sm:$0xff]
        %v280 = vld [vmem:[#allocation5 + $0x88] sm:$0xff]
        %v281 = vld [vmem:[#allocation5 + $0x90] sm:$0xff]
        %v282 = vld [vmem:[#allocation5 + $0x98] sm:$0xff]
        %v283 = vld [vmem:[#allocation5 + $0xa0] sm:$0xff]
        %v284 = vld [vmem:[#allocation5 + $0xa8] sm:$0xff]
        %v285 = vld [vmem:[#allocation5 + $0xb0] sm:$0xff]
        %v286 = vld [vmem:[#allocation5 + $0xb8] sm:$0xff]
        %v287 = vld [vmem:[#allocation5 + $0xc0] sm:$0xff]
        %v288 = vld [vmem:[#allocation5 + $0xc8] sm:$0xff]
        %v289 = vld [vmem:[#allocation5 + $0xd0] sm:$0xff]
        %v290 = vld [vmem:[#allocation5 + $0xd8] sm:$0xff]
        %v291 = vld [vmem:[#allocation5 + $0xe0] sm:$0xff]
        %v292 = vld [vmem:[#allocation5 + $0xe8] sm:$0xff]
        %v293 = vld [vmem:[#allocation5 + $0xf0] sm:$0xff]
        %v294 = vld [vmem:[#allocation5 + $0xf8] sm:$0xff]
        %v295 = vld [vmem:[#allocation5 + $0x100] sm:$0xff]
        %v296 = vld [vmem:[#allocation5 + $0x108] sm:$0xff]
        %v297 = vld [vmem:[#allocation5 + $0x110] sm:$0xff]
        %v298 = vld [vmem:[#allocation5 + $0x118] sm:$0xff]
        %v299 = vld [vmem:[#allocation5 + $0x120] sm:$0xff]
        %v300 = vld [vmem:[#allocation5 + $0x128] sm:$0xff]
        %v301 = vld [vmem:[#allocation5 + $0x130] sm:$0xff]
        %v302 = vld [vmem:[#allocation5 + $0x138] sm:$0xff]
        %v303 = vld [vmem:[#allocation5 + $0x140] sm:$0xff]
        %v304 = vld [vmem:[#allocation5 + $0x148] sm:$0xff]
        %v305 = vld [vmem:[#allocation5 + $0x150] sm:$0xff]
        %v306 = vld [vmem:[#allocation5 + $0x158] sm:$0xff]
        %v307 = vld [vmem:[#allocation5 + $0x160] sm:$0xff]
        %v308 = vld [vmem:[#allocation5 + $0x168] sm:$0xff]
        %v309 = vld [vmem:[#allocation5 + $0x170] sm:$0xff]
        %v310 = vld [vmem:[#allocation5 + $0x178] sm:$0xff]
        %v311 = vld [vmem:[#allocation5 + $0x180] sm:$0xff]
        %v312 = vld [vmem:[#allocation5 + $0x188] sm:$0xff]
        %v313 = vld [vmem:[#allocation5 + $0x190] sm:$0xff]
        %v314 = vld [vmem:[#allocation5 + $0x198] sm:$0xff]
        %v315 = vld [vmem:[#allocation5 + $0x1a0] sm:$0xff]
        %v316 = vld [vmem:[#allocation5 + $0x1a8] sm:$0xff]
        %v317 = vld [vmem:[#allocation5 + $0x1b0] sm:$0xff]
        %v318 = vld [vmem:[#allocation5 + $0x1b8] sm:$0xff]
        %v319 = vld [vmem:[#allocation5 + $0x1c0] sm:$0xff]
        %v320 = vld [vmem:[#allocation5 + $0x1c8] sm:$0xff]
        %v321 = vld [vmem:[#allocation5 + $0x1d0] sm:$0xff]
        %v322 = vld [vmem:[#allocation5 + $0x1d8] sm:$0xff]
        %v323 = vld [vmem:[#allocation5 + $0x1e0] sm:$0xff]
        %v324 = vld [vmem:[#allocation5 + $0x1e8] sm:$0xff]
        %v325 = vld [vmem:[#allocation5 + $0x1f0] sm:$0xff]
        %v326 = vld [vmem:[#allocation5 + $0x1f8] sm:$0xff]
        %v327 = vld [vmem:[#allocation5 + $0x200] sm:$0xff]
        %v328 = vld [vmem:[#allocation5 + $0x208] sm:$0xff]
        %v329 = vld [vmem:[#allocation5 + $0x210] sm:$0xff]
        %v330 = vld [vmem:[#allocation5 + $0x218] sm:$0xff]
        %v331 = vld [vmem:[#allocation5 + $0x220] sm:$0xff]
        %v332 = vld [vmem:[#allocation5 + $0x228] sm:$0xff]
        %v333 = vld [vmem:[#allocation5 + $0x230] sm:$0xff]
        %v334 = vld [vmem:[#allocation5 + $0x238] sm:$0xff]
        %v335 = vld [vmem:[#allocation5 + $0x240] sm:$0xff]
        %v336 = vld [vmem:[#allocation5 + $0x248] sm:$0xff]
        %v337 = vld [vmem:[#allocation5 + $0x250] sm:$0xff]
        %v338 = vld [vmem:[#allocation5 + $0x258] sm:$0xff]
        %v339 = vld [vmem:[#allocation5 + $0x260] sm:$0xff]
        %v340 = vld [vmem:[#allocation5 + $0x268] sm:$0xff]
        %v341 = vld [vmem:[#allocation5 + $0x270] sm:$0xff]
        %v342 = vld [vmem:[#allocation5 + $0x278] sm:$0xff]
        %v343 = vld [vmem:[#allocation5 + $0x280] sm:$0xff]
        %v344 = vld [vmem:[#allocation5 + $0x288] sm:$0xff]
        %v345 = vld [vmem:[#allocation5 + $0x290] sm:$0xff]
        %v346 = vld [vmem:[#allocation5 + $0x298] sm:$0xff]
        %v347 = vld [vmem:[#allocation5 + $0x2a0] sm:$0xff]
        %v348 = vld [vmem:[#allocation5 + $0x2a8] sm:$0xff]
        %v349 = vld [vmem:[#allocation5 + $0x2b0] sm:$0xff]
        %v350 = vld [vmem:[#allocation5 + $0x2b8] sm:$0xff]
        %v351 = vld [vmem:[#allocation5 + $0x2c0] sm:$0xff]
        %v352 = vld [vmem:[#allocation5 + $0x2c8] sm:$0xff]
        %v353 = vld [vmem:[#allocation5 + $0x2d0] sm:$0xff]
        %v354 = vld [vmem:[#allocation5 + $0x2d8] sm:$0xff]
        %v355 = vld [vmem:[#allocation5 + $0x2e0] sm:$0xff]
        %v356 = vld [vmem:[#allocation5 + $0x2e8] sm:$0xff]
        %v357 = vld [vmem:[#allocation5 + $0x2f0] sm:$0xff]
        %v358 = vld [vmem:[#allocation5 + $0x2f8] sm:$0xff]
        %v359 = vld [vmem:[#allocation5 + $0x300] sm:$0xff]
        %v360 = vld [vmem:[#allocation5 + $0x308] sm:$0xff]
        %v361 = vld [vmem:[#allocation5 + $0x310] sm:$0xff]
        %v362 = vld [vmem:[#allocation5 + $0x318] sm:$0xff]
        %v363 = vld [vmem:[#allocation5 + $0x320] sm:$0xff]
        %v364 = vld [vmem:[#allocation5 + $0x328] sm:$0xff]
        %v365 = vld [vmem:[#allocation5 + $0x330] sm:$0xff]
        %v366 = vld [vmem:[#allocation5 + $0x338] sm:$0xff]
        %v367 = vld [vmem:[#allocation5 + $0x340] sm:$0xff]
        %v368 = vld [vmem:[#allocation5 + $0x348] sm:$0xff]
        %v369 = vld [vmem:[#allocation5 + $0x350] sm:$0xff]
        %v370 = vld [vmem:[#allocation5 + $0x358] sm:$0xff]
        %v371 = vld [vmem:[#allocation5 + $0x360] sm:$0xff]
        %v372 = vld [vmem:[#allocation5 + $0x368] sm:$0xff]
        %v373 = vld [vmem:[#allocation5 + $0x370] sm:$0xff]
        %v374 = vld [vmem:[#allocation5 + $0x378] sm:$0xff]
        %v375 = vld [vmem:[#allocation5 + $0x380] sm:$0xff]
        %v376 = vld [vmem:[#allocation5 + $0x388] sm:$0xff]
        %v377 = vld [vmem:[#allocation5 + $0x390] sm:$0xff]
        %v378 = vld [vmem:[#allocation5 + $0x398] sm:$0xff]
        %v379 = vld [vmem:[#allocation5 + $0x3a0] sm:$0xff]
        %v380 = vld [vmem:[#allocation5 + $0x3a8] sm:$0xff]
        %v381 = vld [vmem:[#allocation5 + $0x3b0] sm:$0xff]
        %v382 = vld [vmem:[#allocation5 + $0x3b8] sm:$0xff]
        %v383 = vld [vmem:[#allocation5 + $0x3c0] sm:$0xff]
        %v384 = vld [vmem:[#allocation5 + $0x3c8] sm:$0xff]
        %v385 = vld [vmem:[#allocation5 + $0x3d0] sm:$0xff]
        %v386 = vld [vmem:[#allocation5 + $0x3d8] sm:$0xff]
        %v387 = vld [vmem:[#allocation5 + $0x3e0] sm:$0xff]
        %v388 = vld [vmem:[#allocation5 + $0x3e8] sm:$0xff]
        %v389 = vld [vmem:[#allocation5 + $0x3f0] sm:$0xff]
        %v390 = vld [vmem:[#allocation5 + $0x3f8] sm:$0xff]
        %v391 = vld [vmem:[#allocation5 + $0x400] sm:$0xff]
        %v392 = vld [vmem:[#allocation5 + $0x408] sm:$0xff]
        %v393 = vld [vmem:[#allocation5 + $0x410] sm:$0xff]
        %v394 = vld [vmem:[#allocation5 + $0x418] sm:$0xff]
        %v395 = vld [vmem:[#allocation5 + $0x420] sm:$0xff]
        %v396 = vld [vmem:[#allocation5 + $0x428] sm:$0xff]
        %v397 = vld [vmem:[#allocation5 + $0x430] sm:$0xff]
        %v398 = vld [vmem:[#allocation5 + $0x438] sm:$0xff]
        %v399 = vld [vmem:[#allocation5 + $0x440] sm:$0xff]
        %v400 = vld [vmem:[#allocation5 + $0x448] sm:$0xff]
        %v401 = vld [vmem:[#allocation5 + $0x450] sm:$0xff]
        %v402 = vld [vmem:[#allocation5 + $0x458] sm:$0xff]
        %v403 = vld [vmem:[#allocation5 + $0x460] sm:$0xff]
        %v404 = vld [vmem:[#allocation5 + $0x468] sm:$0xff]
        %v405 = vld [vmem:[#allocation5 + $0x470] sm:$0xff]
        %v406 = vld [vmem:[#allocation5 + $0x478] sm:$0xff]
        %v407 = vld [vmem:[#allocation5 + $0x480] sm:$0xff]
        %v408 = vld [vmem:[#allocation5 + $0x488] sm:$0xff]
        %v409 = vld [vmem:[#allocation5 + $0x490] sm:$0xff]
        %v410 = vld [vmem:[#allocation5 + $0x498] sm:$0xff]
        %v411 = vld [vmem:[#allocation5 + $0x4a0] sm:$0xff]
        %v412 = vld [vmem:[#allocation5 + $0x4a8] sm:$0xff]
        %v413 = vld [vmem:[#allocation5 + $0x4b0] sm:$0xff]
        %v414 = vld [vmem:[#allocation5 + $0x4b8] sm:$0xff]
        %v415 = vld [vmem:[#allocation5 + $0x4c0] sm:$0xff]
        %v416 = vld [vmem:[#allocation5 + $0x4c8] sm:$0xff]
        %v417 = vld [vmem:[#allocation5 + $0x4d0] sm:$0xff]
        %v418 = vld [vmem:[#allocation5 + $0x4d8] sm:$0xff]
        %v419 = vld [vmem:[#allocation5 + $0x4e0] sm:$0xff]
        %v420 = vld [vmem:[#allocation5 + $0x4e8] sm:$0xff]
        %v421 = vld [vmem:[#allocation5 + $0x4f0] sm:$0xff]
        %v422 = vld [vmem:[#allocation5 + $0x4f8] sm:$0xff]
        %v423 = vld [vmem:[#allocation5 + $0x500] sm:$0xff]
        %v424 = vld [vmem:[#allocation5 + $0x508] sm:$0xff]
        %v425 = vld [vmem:[#allocation5 + $0x510] sm:$0xff]
        %v426 = vld [vmem:[#allocation5 + $0x518] sm:$0xff]
        %v427 = vld [vmem:[#allocation5 + $0x520] sm:$0xff]
        %v428 = vld [vmem:[#allocation5 + $0x528] sm:$0xff]
        %v429 = vld [vmem:[#allocation5 + $0x530] sm:$0xff]
        %v430 = vld [vmem:[#allocation5 + $0x538] sm:$0xff]
        %v431 = vld [vmem:[#allocation5 + $0x540] sm:$0xff]
        %v432 = vld [vmem:[#allocation5 + $0x548] sm:$0xff]
        %v433 = vld [vmem:[#allocation5 + $0x550] sm:$0xff]
        %v434 = vld [vmem:[#allocation5 + $0x558] sm:$0xff]
        %v435 = vld [vmem:[#allocation5 + $0x560] sm:$0xff]
        %v436 = vld [vmem:[#allocation5 + $0x568] sm:$0xff]
        %v437 = vld [vmem:[#allocation5 + $0x570] sm:$0xff]
        %v438 = vld [vmem:[#allocation5 + $0x578] sm:$0xff]
        %v439 = vld [vmem:[#allocation5 + $0x580] sm:$0xff]
        %v440 = vld [vmem:[#allocation5 + $0x588] sm:$0xff]
        %v441 = vld [vmem:[#allocation5 + $0x590] sm:$0xff]
        %v442 = vld [vmem:[#allocation5 + $0x598] sm:$0xff]
        %v443 = vld [vmem:[#allocation5 + $0x5a0] sm:$0xff]
        %v444 = vld [vmem:[#allocation5 + $0x5a8] sm:$0xff]
        %v445 = vld [vmem:[#allocation5 + $0x5b0] sm:$0xff]
        %v446 = vld [vmem:[#allocation5 + $0x5b8] sm:$0xff]
        %v447 = vld [vmem:[#allocation5 + $0x5c0] sm:$0xff]
        %v448 = vld [vmem:[#allocation5 + $0x5c8] sm:$0xff]
        %v449 = vld [vmem:[#allocation5 + $0x5d0] sm:$0xff]
        %v450 = vld [vmem:[#allocation5 + $0x5d8] sm:$0xff]
        %v451 = vld [vmem:[#allocation5 + $0x5e0] sm:$0xff]
        %v452 = vld [vmem:[#allocation5 + $0x5e8] sm:$0xff]
        %v453 = vld [vmem:[#allocation5 + $0x5f0] sm:$0xff]
        %v454 = vld [vmem:[#allocation5 + $0x5f8] sm:$0xff]
        %v455 = vld [vmem:[#allocation5 + $0x600] sm:$0xff]
        %v456 = vld [vmem:[#allocation5 + $0x608] sm:$0xff]
        %v457 = vld [vmem:[#allocation5 + $0x610] sm:$0xff]
        %v458 = vld [vmem:[#allocation5 + $0x618] sm:$0xff]
        %v459 = vld [vmem:[#allocation5 + $0x620] sm:$0xff]
        %v460 = vld [vmem:[#allocation5 + $0x628] sm:$0xff]
        %v461 = vld [vmem:[#allocation5 + $0x630] sm:$0xff]
        %v462 = vld [vmem:[#allocation5 + $0x638] sm:$0xff]
        %v463 = vld [vmem:[#allocation5 + $0x640] sm:$0xff]
        %v464 = vld [vmem:[#allocation5 + $0x648] sm:$0xff]
        %v465 = vld [vmem:[#allocation5 + $0x650] sm:$0xff]
        %v466 = vld [vmem:[#allocation5 + $0x658] sm:$0xff]
        %v467 = vld [vmem:[#allocation5 + $0x660] sm:$0xff]
        %v468 = vld [vmem:[#allocation5 + $0x668] sm:$0xff]
        %v469 = vld [vmem:[#allocation5 + $0x670] sm:$0xff]
        %v470 = vld [vmem:[#allocation5 + $0x678] sm:$0xff]
        %v471 = vld [vmem:[#allocation5 + $0x680] sm:$0xff]
        %v472 = vld [vmem:[#allocation5 + $0x688] sm:$0xff]
        %v473 = vld [vmem:[#allocation5 + $0x690] sm:$0xff]
        %v474 = vld [vmem:[#allocation5 + $0x698] sm:$0xff]
        %v475 = vld [vmem:[#allocation5 + $0x6a0] sm:$0xff]
        %v476 = vld [vmem:[#allocation5 + $0x6a8] sm:$0xff]
        %v477 = vld [vmem:[#allocation5 + $0x6b0] sm:$0xff]
        %v478 = vld [vmem:[#allocation5 + $0x6b8] sm:$0xff]
        %v479 = vld [vmem:[#allocation5 + $0x6c0] sm:$0xff]
        %v480 = vld [vmem:[#allocation5 + $0x6c8] sm:$0xff]
        %v481 = vld [vmem:[#allocation5 + $0x6d0] sm:$0xff]
        %v482 = vld [vmem:[#allocation5 + $0x6d8] sm:$0xff]
        %v483 = vld [vmem:[#allocation5 + $0x6e0] sm:$0xff]
        %v484 = vld [vmem:[#allocation5 + $0x6e8] sm:$0xff]
        %v485 = vld [vmem:[#allocation5 + $0x6f0] sm:$0xff]
        %v486 = vld [vmem:[#allocation5 + $0x6f8] sm:$0xff]
        %v487 = vld [vmem:[#allocation5 + $0x700] sm:$0xff]
        %v488 = vld [vmem:[#allocation5 + $0x708] sm:$0xff]
        %v489 = vld [vmem:[#allocation5 + $0x710] sm:$0xff]
        %v490 = vld [vmem:[#allocation5 + $0x718] sm:$0xff]
        %v491 = vld [vmem:[#allocation5 + $0x720] sm:$0xff]
        %v492 = vld [vmem:[#allocation5 + $0x728] sm:$0xff]
        %v493 = vld [vmem:[#allocation5 + $0x730] sm:$0xff]
        %v494 = vld [vmem:[#allocation5 + $0x738] sm:$0xff]
        %v495 = vld [vmem:[#allocation5 + $0x740] sm:$0xff]
        %v496 = vld [vmem:[#allocation5 + $0x748] sm:$0xff]
        %v497 = vld [vmem:[#allocation5 + $0x750] sm:$0xff]
        %v498 = vld [vmem:[#allocation5 + $0x758] sm:$0xff]
        %v499 = vld [vmem:[#allocation5 + $0x760] sm:$0xff]
        %v500 = vld [vmem:[#allocation5 + $0x768] sm:$0xff]
        %v501 = vld [vmem:[#allocation5 + $0x770] sm:$0xff]
        %v502 = vld [vmem:[#allocation5 + $0x778] sm:$0xff]
        %v503 = vld [vmem:[#allocation5 + $0x780] sm:$0xff]
        %v504 = vld [vmem:[#allocation5 + $0x788] sm:$0xff]
        %v505 = vld [vmem:[#allocation5 + $0x790] sm:$0xff]
        %v506 = vld [vmem:[#allocation5 + $0x798] sm:$0xff]
        %v507 = vld [vmem:[#allocation5 + $0x7a0] sm:$0xff]
        %v508 = vld [vmem:[#allocation5 + $0x7a8] sm:$0xff]
        %v509 = vld [vmem:[#allocation5 + $0x7b0] sm:$0xff]
        %v510 = vld [vmem:[#allocation5 + $0x7b8] sm:$0xff]
        %v511 = vld [vmem:[#allocation5 + $0x7c0] sm:$0xff]
        %v512 = vld [vmem:[#allocation5 + $0x7c8] sm:$0xff]
        %v513 = vld [vmem:[#allocation5 + $0x7d0] sm:$0xff]
        %v514 = vld [vmem:[#allocation5 + $0x7d8] sm:$0xff]
        %v515 = vld [vmem:[#allocation5 + $0x7e0] sm:$0xff]
        %v516 = vld [vmem:[#allocation5 + $0x7e8] sm:$0xff]
        %v517 = vld [vmem:[#allocation5 + $0x7f0] sm:$0xff]
        %v518 = vld [vmem:[#allocation5 + $0x7f8] sm:$0xff]
        %v519 = vld [vmem:[#allocation5 + $0x800] sm:$0xff]
        %v520 = vld [vmem:[#allocation5 + $0x808] sm:$0xff]
        %v521 = vld [vmem:[#allocation5 + $0x810] sm:$0xff]
        %v522 = vld [vmem:[#allocation5 + $0x818] sm:$0xff]
        %v523 = vld [vmem:[#allocation5 + $0x820] sm:$0xff]
        %v524 = vld [vmem:[#allocation5 + $0x828] sm:$0xff]
        %v525 = vld [vmem:[#allocation5 + $0x830] sm:$0xff]
        %v526 = vld [vmem:[#allocation5 + $0x838] sm:$0xff]
        %v527 = vld [vmem:[#allocation5 + $0x840] sm:$0xff]
        %v528 = vld [vmem:[#allocation5 + $0x848] sm:$0xff]
        %v529 = vld [vmem:[#allocation5 + $0x850] sm:$0xff]
        %v530 = vld [vmem:[#allocation5 + $0x858] sm:$0xff]
        %v531 = vld [vmem:[#allocation5 + $0x860] sm:$0xff]
        %v532 = vld [vmem:[#allocation5 + $0x868] sm:$0xff]
        %v533 = vld [vmem:[#allocation5 + $0x870] sm:$0xff]
        %v534 = vld [vmem:[#allocation5 + $0x878] sm:$0xff]
        %v535 = vld [vmem:[#allocation5 + $0x880] sm:$0xff]
        %v536 = vld [vmem:[#allocation5 + $0x888] sm:$0xff]
        %v537 = vld [vmem:[#allocation5 + $0x890] sm:$0xff]
        %v538 = vld [vmem:[#allocation5 + $0x898] sm:$0xff]
        %v539 = vld [vmem:[#allocation5 + $0x8a0] sm:$0xff]
        %v540 = vld [vmem:[#allocation5 + $0x8a8] sm:$0xff]
        %v541 = vld [vmem:[#allocation5 + $0x8b0] sm:$0xff]
        %v542 = vld [vmem:[#allocation5 + $0x8b8] sm:$0xff]
        %v543 = vld [vmem:[#allocation5 + $0x8c0] sm:$0xff]
        %v544 = vld [vmem:[#allocation5 + $0x8c8] sm:$0xff]
        %v545 = vld [vmem:[#allocation5 + $0x8d0] sm:$0xff]
        %v546 = vld [vmem:[#allocation5 + $0x8d8] sm:$0xff]
        %v547 = vld [vmem:[#allocation5 + $0x8e0] sm:$0xff]
        %v548 = vld [vmem:[#allocation5 + $0x8e8] sm:$0xff]
        %v549 = vld [vmem:[#allocation5 + $0x8f0] sm:$0xff]
        %v550 = vld [vmem:[#allocation5 + $0x8f8] sm:$0xff]
        %v551 = vld [vmem:[#allocation5 + $0x900] sm:$0xff]
        %v552 = vld [vmem:[#allocation5 + $0x908] sm:$0xff]
        %v553 = vld [vmem:[#allocation5 + $0x910] sm:$0xff]
        %v554 = vld [vmem:[#allocation5 + $0x918] sm:$0xff]
        %v555 = vld [vmem:[#allocation5 + $0x920] sm:$0xff]
        %v556 = vld [vmem:[#allocation5 + $0x928] sm:$0xff]
        %v557 = vld [vmem:[#allocation5 + $0x930] sm:$0xff]
        %v558 = vld [vmem:[#allocation5 + $0x938] sm:$0xff]
        %v559 = vld [vmem:[#allocation5 + $0x940] sm:$0xff]
        %v560 = vld [vmem:[#allocation5 + $0x948] sm:$0xff]
        %v561 = vld [vmem:[#allocation5 + $0x950] sm:$0xff]
        %v562 = vld [vmem:[#allocation5 + $0x958] sm:$0xff]
        %v563 = vld [vmem:[#allocation5 + $0x960] sm:$0xff]
        %v564 = vld [vmem:[#allocation5 + $0x968] sm:$0xff]
        %v565 = vld [vmem:[#allocation5 + $0x970] sm:$0xff]
        %v566 = vld [vmem:[#allocation5 + $0x978] sm:$0xff]
        %v567 = vld [vmem:[#allocation5 + $0x980] sm:$0xff]
        %v568 = vld [vmem:[#allocation5 + $0x988] sm:$0xff]
        %v569 = vld [vmem:[#allocation5 + $0x990] sm:$0xff]
        %v570 = vld [vmem:[#allocation5 + $0x998] sm:$0xff]
        %v571 = vld [vmem:[#allocation5 + $0x9a0] sm:$0xff]
        %v572 = vld [vmem:[#allocation5 + $0x9a8] sm:$0xff]
        %v573 = vld [vmem:[#allocation5 + $0x9b0] sm:$0xff]
        %v574 = vld [vmem:[#allocation5 + $0x9b8] sm:$0xff]
        %v575 = vld [vmem:[#allocation5 + $0x9c0] sm:$0xff]
        %v576 = vld [vmem:[#allocation5 + $0x9c8] sm:$0xff]
        %v577 = vld [vmem:[#allocation5 + $0x9d0] sm:$0xff]
        %v578 = vld [vmem:[#allocation5 + $0x9d8] sm:$0xff]
        %v579 = vld [vmem:[#allocation5 + $0x9e0] sm:$0xff]
        %v580 = vld [vmem:[#allocation5 + $0x9e8] sm:$0xff]
        %v581 = vld [vmem:[#allocation5 + $0x9f0] sm:$0xff]
        %v582 = vld [vmem:[#allocation5 + $0x9f8] sm:$0xff]
        %v583 = vld [vmem:[#allocation5 + $0xa00] sm:$0xff]
        %v584 = vld [vmem:[#allocation5 + $0xa08] sm:$0xff]
        %v585 = vld [vmem:[#allocation5 + $0xa10] sm:$0xff]
        %v586 = vld [vmem:[#allocation5 + $0xa18] sm:$0xff]
        %v587 = vld [vmem:[#allocation5 + $0xa20] sm:$0xff]
        %v588 = vld [vmem:[#allocation5 + $0xa28] sm:$0xff]
        %v589 = vld [vmem:[#allocation5 + $0xa30] sm:$0xff]
        %v590 = vld [vmem:[#allocation5 + $0xa38] sm:$0xff]
        %v591 = vld [vmem:[#allocation5 + $0xa40] sm:$0xff]
        %v592 = vld [vmem:[#allocation5 + $0xa48] sm:$0xff]
        %v593 = vld [vmem:[#allocation5 + $0xa50] sm:$0xff]
        %v594 = vld [vmem:[#allocation5 + $0xa58] sm:$0xff]
        %v595 = vld [vmem:[#allocation5 + $0xa60] sm:$0xff]
        %v596 = vld [vmem:[#allocation5 + $0xa68] sm:$0xff]
        %v597 = vld [vmem:[#allocation5 + $0xa70] sm:$0xff]
        %v598 = vld [vmem:[#allocation5 + $0xa78] sm:$0xff]
        %v599 = vld [vmem:[#allocation5 + $0xa80] sm:$0xff]
        %v600 = vld [vmem:[#allocation5 + $0xa88] sm:$0xff]
        %v601 = vld [vmem:[#allocation5 + $0xa90] sm:$0xff]
        %v602 = vld [vmem:[#allocation5 + $0xa98] sm:$0xff]
        %v603 = vld [vmem:[#allocation5 + $0xaa0] sm:$0xff]
        %v604 = vld [vmem:[#allocation5 + $0xaa8] sm:$0xff]
        %v605 = vld [vmem:[#allocation5 + $0xab0] sm:$0xff]
        %v606 = vld [vmem:[#allocation5 + $0xab8] sm:$0xff]
        %v607 = vld [vmem:[#allocation5 + $0xac0] sm:$0xff]
        %v608 = vld [vmem:[#allocation5 + $0xac8] sm:$0xff]
        %v609 = vld [vmem:[#allocation5 + $0xad0] sm:$0xff]
        %v610 = vld [vmem:[#allocation5 + $0xad8] sm:$0xff]
        %v611 = vld [vmem:[#allocation5 + $0xae0] sm:$0xff]
        %v612 = vld [vmem:[#allocation5 + $0xae8] sm:$0xff]
        %v613 = vld [vmem:[#allocation5 + $0xaf0] sm:$0xff]
        %v614 = vld [vmem:[#allocation5 + $0xaf8] sm:$0xff]
        %v615 = vld [vmem:[#allocation5 + $0xb00] sm:$0xff]
        %v616 = vld [vmem:[#allocation5 + $0xb08] sm:$0xff]
        %v617 = vld [vmem:[#allocation5 + $0xb10] sm:$0xff]
        %v618 = vld [vmem:[#allocation5 + $0xb18] sm:$0xff]
        %v619 = vld [vmem:[#allocation5 + $0xb20] sm:$0xff]
        %v620 = vld [vmem:[#allocation5 + $0xb28] sm:$0xff]
        %v621 = vld [vmem:[#allocation5 + $0xb30] sm:$0xff]
        %v622 = vld [vmem:[#allocation5 + $0xb38] sm:$0xff]
        %v623 = vld [vmem:[#allocation5 + $0xb40] sm:$0xff]
        %v624 = vld [vmem:[#allocation5 + $0xb48] sm:$0xff]
        %v625 = vld [vmem:[#allocation5 + $0xb50] sm:$0xff]
        %v626 = vld [vmem:[#allocation5 + $0xb58] sm:$0xff]
        %v627 = vld [vmem:[#allocation5 + $0xb60] sm:$0xff]
        %v628 = vld [vmem:[#allocation5 + $0xb68] sm:$0xff]
        %v629 = vld [vmem:[#allocation5 + $0xb70] sm:$0xff]
        %v630 = vld [vmem:[#allocation5 + $0xb78] sm:$0xff]
        %v631 = vld [vmem:[#allocation5 + $0xb80] sm:$0xff]
        %v632 = vld [vmem:[#allocation5 + $0xb88] sm:$0xff]
        %v633 = vld [vmem:[#allocation5 + $0xb90] sm:$0xff]
        %v634 = vld [vmem:[#allocation5 + $0xb98] sm:$0xff]
        %v635 = vld [vmem:[#allocation5 + $0xba0] sm:$0xff]
        %v636 = vld [vmem:[#allocation5 + $0xba8] sm:$0xff]
        %v637 = vld [vmem:[#allocation5 + $0xbb0] sm:$0xff]
        %v638 = vld [vmem:[#allocation5 + $0xbb8] sm:$0xff]
        %v639 = vld [vmem:[#allocation5 + $0xbc0] sm:$0xff]
        %v640 = vld [vmem:[#allocation5 + $0xbc8] sm:$0xff]
        %v641 = vld [vmem:[#allocation5 + $0xbd0] sm:$0xff]
        %v642 = vld [vmem:[#allocation5 + $0xbd8] sm:$0xff]
        %v643 = vld [vmem:[#allocation5 + $0xbe0] sm:$0xff]
        %v644 = vld [vmem:[#allocation5 + $0xbe8] sm:$0xff]
        %v645 = vld [vmem:[#allocation5 + $0xbf0] sm:$0xff]
        %v646 = vld [vmem:[#allocation5 + $0xbf8] sm:$0xff]
        %v647 = vld [vmem:[#allocation5 + $0xc00] sm:$0xff]
        %v648 = vld [vmem:[#allocation5 + $0xc08] sm:$0xff]
        %v649 = vld [vmem:[#allocation5 + $0xc10] sm:$0xff]
        %v650 = vld [vmem:[#allocation5 + $0xc18] sm:$0xff]
        %v651 = vld [vmem:[#allocation5 + $0xc20] sm:$0xff]
        %v652 = vld [vmem:[#allocation5 + $0xc28] sm:$0xff]
        %v653 = vld [vmem:[#allocation5 + $0xc30] sm:$0xff]
        %v654 = vld [vmem:[#allocation5 + $0xc38] sm:$0xff]
        %v655 = vld [vmem:[#allocation5 + $0xc40] sm:$0xff]
        %v656 = vld [vmem:[#allocation5 + $0xc48] sm:$0xff]
        %v657 = vld [vmem:[#allocation5 + $0xc50] sm:$0xff]
        %v658 = vld [vmem:[#allocation5 + $0xc58] sm:$0xff]
        %v659 = vld [vmem:[#allocation5 + $0xc60] sm:$0xff]
        %v660 = vld [vmem:[#allocation5 + $0xc68] sm:$0xff]
        %v661 = vld [vmem:[#allocation5 + $0xc70] sm:$0xff]
        %v662 = vld [vmem:[#allocation5 + $0xc78] sm:$0xff]
        %v663 = vld [vmem:[#allocation5 + $0xc80] sm:$0xff]
        %v664 = vld [vmem:[#allocation5 + $0xc88] sm:$0xff]
        %v665 = vld [vmem:[#allocation5 + $0xc90] sm:$0xff]
        %v666 = vld [vmem:[#allocation5 + $0xc98] sm:$0xff]
        %v667 = vld [vmem:[#allocation5 + $0xca0] sm:$0xff]
        %v668 = vld [vmem:[#allocation5 + $0xca8] sm:$0xff]
        %v669 = vld [vmem:[#allocation5 + $0xcb0] sm:$0xff]
        %v670 = vld [vmem:[#allocation5 + $0xcb8] sm:$0xff]
        %v671 = vld [vmem:[#allocation5 + $0xcc0] sm:$0xff]
        %v672 = vld [vmem:[#allocation5 + $0xcc8] sm:$0xff]
        %v673 = vld [vmem:[#allocation5 + $0xcd0] sm:$0xff]
        %v674 = vld [vmem:[#allocation5 + $0xcd8] sm:$0xff]
        %v675 = vld [vmem:[#allocation5 + $0xce0] sm:$0xff]
        %v676 = vld [vmem:[#allocation5 + $0xce8] sm:$0xff]
        %v677 = vld [vmem:[#allocation5 + $0xcf0] sm:$0xff]
        %v678 = vld [vmem:[#allocation5 + $0xcf8] sm:$0xff]
        %v679 = vld [vmem:[#allocation5 + $0xd00] sm:$0xff]
        %v680 = vld [vmem:[#allocation5 + $0xd08] sm:$0xff]
        %v681 = vld [vmem:[#allocation5 + $0xd10] sm:$0xff]
        %v682 = vld [vmem:[#allocation5 + $0xd18] sm:$0xff]
        %v683 = vld [vmem:[#allocation5 + $0xd20] sm:$0xff]
        %v684 = vld [vmem:[#allocation5 + $0xd28] sm:$0xff]
        %v685 = vld [vmem:[#allocation5 + $0xd30] sm:$0xff]
        %v686 = vld [vmem:[#allocation5 + $0xd38] sm:$0xff]
        %v687 = vld [vmem:[#allocation5 + $0xd40] sm:$0xff]
        %v688 = vld [vmem:[#allocation5 + $0xd48] sm:$0xff]
        %v689 = vld [vmem:[#allocation5 + $0xd50] sm:$0xff]
        %v690 = vld [vmem:[#allocation5 + $0xd58] sm:$0xff]
        %v691 = vld [vmem:[#allocation5 + $0xd60] sm:$0xff]
        %v692 = vld [vmem:[#allocation5 + $0xd68] sm:$0xff]
        %v693 = vld [vmem:[#allocation5 + $0xd70] sm:$0xff]
        %v694 = vld [vmem:[#allocation5 + $0xd78] sm:$0xff]
        %v699 = vunpack.c.l.b16 %v259
        %v700 = vunpack.c.h.b16 %v259
        %v701 = vunpack.c.l.b16 %v260
        %v702 = vunpack.c.l.b16 %v261
        %v703 = vunpack.c.h.b16 %v261
        %v704 = vunpack.c.l.b16 %v262
        %v705 = vpack.c.b16 %v702, %v699
        %v706 = vpack.c.b16 %v703, %v700
        %v707 = vpack.c.b16 %v704, %v701
        %v1143 = vunpack.c.l.b16 %v263
        %v1144 = vunpack.c.h.b16 %v263
        %v1145 = vunpack.c.l.b16 %v264
        %v1146 = vunpack.c.h.b16 %v264
        %v1147 = vunpack.c.l.b16 %v265
        %v1148 = vunpack.c.h.b16 %v265
        %v1149 = vunpack.c.l.b16 %v266
        %v1150 = vunpack.c.h.b16 %v266
        %v1151 = vunpack.c.l.b16 %v267
        %v1152 = vunpack.c.h.b16 %v267
        %v1153 = vunpack.c.l.b16 %v268
        %v1154 = vunpack.c.h.b16 %v268
        %v1155 = vunpack.c.l.b16 %v269
        %v1156 = vunpack.c.h.b16 %v269
        %v1157 = vunpack.c.l.b16 %v270
        %v1158 = vunpack.c.h.b16 %v270
        %v1159 = vunpack.c.l.b16 %v271
        %v1160 = vunpack.c.h.b16 %v271
        %v1161 = vunpack.c.l.b16 %v272
        %v1162 = vunpack.c.h.b16 %v272
        %v1163 = vunpack.c.l.b16 %v273
        %v1164 = vunpack.c.h.b16 %v273
        %v1165 = vunpack.c.l.b16 %v274
        %v1166 = vunpack.c.h.b16 %v274
        %v1167 = vunpack.c.l.b16 %v275
        %v1168 = vunpack.c.h.b16 %v275
        %v1169 = vunpack.c.l.b16 %v276
        %v1170 = vunpack.c.h.b16 %v276
        %v1171 = vunpack.c.l.b16 %v277
        %v1172 = vunpack.c.h.b16 %v277
        %v1173 = vunpack.c.l.b16 %v278
        %v1174 = vunpack.c.h.b16 %v278
        %v1175 = vunpack.c.l.b16 %v279
        %v1176 = vunpack.c.h.b16 %v279
        %v1177 = vunpack.c.l.b16 %v280
        %v1178 = vunpack.c.h.b16 %v280
        %v1179 = vunpack.c.l.b16 %v281
        %v1180 = vunpack.c.h.b16 %v281
        %v1181 = vunpack.c.l.b16 %v282
        %v1182 = vunpack.c.h.b16 %v282
        %v1183 = vunpack.c.l.b16 %v283
        %v1184 = vunpack.c.h.b16 %v283
        %v1185 = vunpack.c.l.b16 %v284
        %v1186 = vunpack.c.h.b16 %v284
        %v1187 = vunpack.c.l.b16 %v285
        %v1188 = vunpack.c.h.b16 %v285
        %v1189 = vunpack.c.l.b16 %v286
        %v1190 = vunpack.c.h.b16 %v286
        %v1191 = vunpack.c.l.b16 %v287
        %v1192 = vunpack.c.h.b16 %v287
        %v1193 = vunpack.c.l.b16 %v288
        %v1194 = vunpack.c.h.b16 %v288
        %v1195 = vunpack.c.l.b16 %v289
        %v1196 = vunpack.c.h.b16 %v289
        %v1197 = vunpack.c.l.b16 %v290
        %v1198 = vunpack.c.h.b16 %v290
        %v1199 = vunpack.c.l.b16 %v291
        %v1200 = vunpack.c.h.b16 %v291
        %v1201 = vunpack.c.l.b16 %v292
        %v1202 = vunpack.c.h.b16 %v292
        %v1203 = vunpack.c.l.b16 %v293
        %v1204 = vunpack.c.h.b16 %v293
        %v1205 = vunpack.c.l.b16 %v294
        %v1206 = vunpack.c.h.b16 %v294
        %v1207 = vunpack.c.l.b16 %v295
        %v1208 = vunpack.c.h.b16 %v295
        %v1209 = vunpack.c.l.b16 %v296
        %v1210 = vunpack.c.h.b16 %v296
        %v1211 = vunpack.c.l.b16 %v297
        %v1212 = vunpack.c.h.b16 %v297
        %v1213 = vunpack.c.l.b16 %v298
        %v1214 = vunpack.c.h.b16 %v298
        %v1215 = vunpack.c.l.b16 %v299
        %v1216 = vunpack.c.h.b16 %v299
        %v1217 = vunpack.c.l.b16 %v300
        %v1218 = vunpack.c.h.b16 %v300
        %v1219 = vunpack.c.l.b16 %v301
        %v1220 = vunpack.c.h.b16 %v301
        %v1221 = vunpack.c.l.b16 %v302
        %v1222 = vunpack.c.h.b16 %v302
        %v1223 = vunpack.c.l.b16 %v303
        %v1224 = vunpack.c.h.b16 %v303
        %v1225 = vunpack.c.l.b16 %v304
        %v1226 = vunpack.c.h.b16 %v304
        %v1227 = vunpack.c.l.b16 %v305
        %v1228 = vunpack.c.h.b16 %v305
        %v1229 = vunpack.c.l.b16 %v306
        %v1230 = vunpack.c.h.b16 %v306
        %v1231 = vunpack.c.l.b16 %v307
        %v1232 = vunpack.c.h.b16 %v307
        %v1233 = vunpack.c.l.b16 %v308
        %v1234 = vunpack.c.h.b16 %v308
        %v1235 = vunpack.c.l.b16 %v309
        %v1236 = vunpack.c.h.b16 %v309
        %v1237 = vunpack.c.l.b16 %v310
        %v1238 = vunpack.c.h.b16 %v310
        %v1239 = vunpack.c.l.b16 %v311
        %v1240 = vunpack.c.h.b16 %v311
        %v1241 = vunpack.c.l.b16 %v312
        %v1242 = vunpack.c.h.b16 %v312
        %v1243 = vunpack.c.l.b16 %v313
        %v1244 = vunpack.c.h.b16 %v313
        %v1245 = vunpack.c.l.b16 %v314
        %v1246 = vunpack.c.h.b16 %v314
        %v1247 = vunpack.c.l.b16 %v315
        %v1248 = vunpack.c.h.b16 %v315
        %v1249 = vunpack.c.l.b16 %v316
        %v1250 = vunpack.c.h.b16 %v316
        %v1251 = vunpack.c.l.b16 %v317
        %v1252 = vunpack.c.h.b16 %v317
        %v1253 = vunpack.c.l.b16 %v318
        %v1254 = vunpack.c.h.b16 %v318
        %v1255 = vunpack.c.l.b16 %v319
        %v1256 = vunpack.c.h.b16 %v319
        %v1257 = vunpack.c.l.b16 %v320
        %v1258 = vunpack.c.h.b16 %v320
        %v1259 = vunpack.c.l.b16 %v321
        %v1260 = vunpack.c.h.b16 %v321
        %v1261 = vunpack.c.l.b16 %v322
        %v1262 = vunpack.c.h.b16 %v322
        %v1263 = vunpack.c.l.b16 %v323
        %v1264 = vunpack.c.h.b16 %v323
        %v1265 = vunpack.c.l.b16 %v324
        %v1266 = vunpack.c.h.b16 %v324
        %v1267 = vunpack.c.l.b16 %v325
        %v1268 = vunpack.c.h.b16 %v325
        %v1269 = vunpack.c.l.b16 %v326
        %v1270 = vunpack.c.h.b16 %v326
        %v1271 = vunpack.c.l.b16 %v327
        %v1272 = vunpack.c.h.b16 %v327
        %v1273 = vunpack.c.l.b16 %v328
        %v1274 = vunpack.c.h.b16 %v328
        %v1275 = vunpack.c.l.b16 %v329
        %v1276 = vunpack.c.h.b16 %v329
        %v1277 = vunpack.c.l.b16 %v330
        %v1278 = vunpack.c.h.b16 %v330
        %v1279 = vunpack.c.l.b16 %v331
        %v1280 = vunpack.c.h.b16 %v331
        %v1281 = vunpack.c.l.b16 %v332
        %v1282 = vunpack.c.h.b16 %v332
        %v1283 = vunpack.c.l.b16 %v333
        %v1284 = vunpack.c.h.b16 %v333
        %v1285 = vunpack.c.l.b16 %v334
        %v1286 = vunpack.c.h.b16 %v334
        %v1287 = vunpack.c.l.b16 %v335
        %v1288 = vunpack.c.h.b16 %v335
        %v1289 = vunpack.c.l.b16 %v336
        %v1290 = vunpack.c.h.b16 %v336
        %v1291 = vunpack.c.l.b16 %v337
        %v1292 = vunpack.c.h.b16 %v337
        %v1293 = vunpack.c.l.b16 %v338
        %v1294 = vunpack.c.h.b16 %v338
        %v1295 = vunpack.c.l.b16 %v339
        %v1296 = vunpack.c.h.b16 %v339
        %v1297 = vunpack.c.l.b16 %v340
        %v1298 = vunpack.c.h.b16 %v340
        %v1299 = vunpack.c.l.b16 %v341
        %v1300 = vunpack.c.h.b16 %v341
        %v1301 = vunpack.c.l.b16 %v342
        %v1302 = vunpack.c.h.b16 %v342
        %v1303 = vunpack.c.l.b16 %v343
        %v1304 = vunpack.c.h.b16 %v343
        %v1305 = vunpack.c.l.b16 %v344
        %v1306 = vunpack.c.h.b16 %v344
        %v1307 = vunpack.c.l.b16 %v345
        %v1308 = vunpack.c.h.b16 %v345
        %v1309 = vunpack.c.l.b16 %v346
        %v1310 = vunpack.c.h.b16 %v346
        %v1311 = vunpack.c.l.b16 %v347
        %v1312 = vunpack.c.h.b16 %v347
        %v1313 = vunpack.c.l.b16 %v348
        %v1314 = vunpack.c.h.b16 %v348
        %v1315 = vunpack.c.l.b16 %v349
        %v1316 = vunpack.c.h.b16 %v349
        %v1317 = vunpack.c.l.b16 %v350
        %v1318 = vunpack.c.h.b16 %v350
        %v1319 = vunpack.c.l.b16 %v351
        %v1320 = vunpack.c.h.b16 %v351
        %v1321 = vunpack.c.l.b16 %v352
        %v1322 = vunpack.c.h.b16 %v352
        %v1323 = vunpack.c.l.b16 %v353
        %v1324 = vunpack.c.h.b16 %v353
        %v1325 = vunpack.c.l.b16 %v354
        %v1326 = vunpack.c.h.b16 %v354
        %v1327 = vunpack.c.l.b16 %v355
        %v1328 = vunpack.c.h.b16 %v355
        %v1329 = vunpack.c.l.b16 %v356
        %v1330 = vunpack.c.h.b16 %v356
        %v1331 = vunpack.c.l.b16 %v357
        %v1332 = vunpack.c.h.b16 %v357
        %v1333 = vunpack.c.l.b16 %v358
        %v1334 = vunpack.c.h.b16 %v358
        %v1335 = vunpack.c.l.b16 %v359
        %v1336 = vunpack.c.h.b16 %v359
        %v1337 = vunpack.c.l.b16 %v360
        %v1338 = vunpack.c.h.b16 %v360
        %v1339 = vunpack.c.l.b16 %v361
        %v1340 = vunpack.c.h.b16 %v361
        %v1341 = vunpack.c.l.b16 %v362
        %v1342 = vunpack.c.h.b16 %v362
        %v1343 = vunpack.c.l.b16 %v363
        %v1344 = vunpack.c.h.b16 %v363
        %v1345 = vunpack.c.l.b16 %v364
        %v1346 = vunpack.c.h.b16 %v364
        %v1347 = vunpack.c.l.b16 %v365
        %v1348 = vunpack.c.h.b16 %v365
        %v1349 = vunpack.c.l.b16 %v366
        %v1350 = vunpack.c.h.b16 %v366
        %v1351 = vunpack.c.l.b16 %v367
        %v1352 = vunpack.c.h.b16 %v367
        %v1353 = vunpack.c.l.b16 %v368
        %v1354 = vunpack.c.h.b16 %v368
        %v1355 = vunpack.c.l.b16 %v369
        %v1356 = vunpack.c.h.b16 %v369
        %v1357 = vunpack.c.l.b16 %v370
        %v1358 = vunpack.c.h.b16 %v370
        %v1359 = vunpack.c.l.b16 %v371
        %v1360 = vunpack.c.h.b16 %v371
        %v1361 = vunpack.c.l.b16 %v372
        %v1362 = vunpack.c.h.b16 %v372
        %v1363 = vunpack.c.l.b16 %v373
        %v1364 = vunpack.c.h.b16 %v373
        %v1365 = vunpack.c.l.b16 %v374
        %v1366 = vunpack.c.h.b16 %v374
        %v1367 = vunpack.c.l.b16 %v375
        %v1368 = vunpack.c.h.b16 %v375
        %v1369 = vunpack.c.l.b16 %v376
        %v1370 = vunpack.c.h.b16 %v376
        %v1371 = vunpack.c.l.b16 %v377
        %v1372 = vunpack.c.h.b16 %v377
        %v1373 = vunpack.c.l.b16 %v378
        %v1374 = vunpack.c.h.b16 %v378
        %v1375 = vunpack.c.l.b16 %v379
        %v1376 = vunpack.c.h.b16 %v379
        %v1377 = vunpack.c.l.b16 %v380
        %v1378 = vunpack.c.h.b16 %v380
        %v1379 = vunpack.c.l.b16 %v381
        %v1380 = vunpack.c.h.b16 %v381
        %v1381 = vunpack.c.l.b16 %v382
        %v1382 = vunpack.c.h.b16 %v382
        %v1383 = vunpack.c.l.b16 %v383
        %v1384 = vunpack.c.h.b16 %v383
        %v1385 = vunpack.c.l.b16 %v384
        %v1386 = vunpack.c.h.b16 %v384
        %v1387 = vunpack.c.l.b16 %v385
        %v1388 = vunpack.c.h.b16 %v385
        %v1389 = vunpack.c.l.b16 %v386
        %v1390 = vunpack.c.h.b16 %v386
        %v1391 = vunpack.c.l.b16 %v387
        %v1392 = vunpack.c.h.b16 %v387
        %v1393 = vunpack.c.l.b16 %v388
        %v1394 = vunpack.c.h.b16 %v388
        %v1395 = vunpack.c.l.b16 %v389
        %v1396 = vunpack.c.h.b16 %v389
        %v1397 = vunpack.c.l.b16 %v390
        %v1398 = vunpack.c.h.b16 %v390
        %v1399 = vunpack.c.l.b16 %v391
        %v1400 = vunpack.c.h.b16 %v391
        %v1401 = vunpack.c.l.b16 %v392
        %v1402 = vunpack.c.h.b16 %v392
        %v1403 = vunpack.c.l.b16 %v393
        %v1404 = vunpack.c.h.b16 %v393
        %v1405 = vunpack.c.l.b16 %v394
        %v1406 = vunpack.c.h.b16 %v394
        %v1407 = vunpack.c.l.b16 %v395
        %v1408 = vunpack.c.h.b16 %v395
        %v1409 = vunpack.c.l.b16 %v396
        %v1410 = vunpack.c.h.b16 %v396
        %v1411 = vunpack.c.l.b16 %v397
        %v1412 = vunpack.c.h.b16 %v397
        %v1413 = vunpack.c.l.b16 %v398
        %v1414 = vunpack.c.h.b16 %v398
        %v1415 = vunpack.c.l.b16 %v399
        %v1416 = vunpack.c.h.b16 %v399
        %v1417 = vunpack.c.l.b16 %v400
        %v1418 = vunpack.c.h.b16 %v400
        %v1419 = vunpack.c.l.b16 %v401
        %v1420 = vunpack.c.h.b16 %v401
        %v1421 = vunpack.c.l.b16 %v402
        %v1422 = vunpack.c.h.b16 %v402
        %v1423 = vunpack.c.l.b16 %v403
        %v1424 = vunpack.c.h.b16 %v403
        %v1425 = vunpack.c.l.b16 %v404
        %v1426 = vunpack.c.h.b16 %v404
        %v1427 = vunpack.c.l.b16 %v405
        %v1428 = vunpack.c.h.b16 %v405
        %v1429 = vunpack.c.l.b16 %v406
        %v1430 = vunpack.c.h.b16 %v406
        %v1431 = vunpack.c.l.b16 %v407
        %v1432 = vunpack.c.h.b16 %v407
        %v1433 = vunpack.c.l.b16 %v408
        %v1434 = vunpack.c.h.b16 %v408
        %v1435 = vunpack.c.l.b16 %v409
        %v1436 = vunpack.c.h.b16 %v409
        %v1437 = vunpack.c.l.b16 %v410
        %v1438 = vunpack.c.h.b16 %v410
        %v1439 = vunpack.c.l.b16 %v411
        %v1440 = vunpack.c.h.b16 %v411
        %v1441 = vunpack.c.l.b16 %v412
        %v1442 = vunpack.c.h.b16 %v412
        %v1443 = vunpack.c.l.b16 %v413
        %v1444 = vunpack.c.h.b16 %v413
        %v1445 = vunpack.c.l.b16 %v414
        %v1446 = vunpack.c.h.b16 %v414
        %v1447 = vunpack.c.l.b16 %v415
        %v1448 = vunpack.c.h.b16 %v415
        %v1449 = vunpack.c.l.b16 %v416
        %v1450 = vunpack.c.h.b16 %v416
        %v1451 = vunpack.c.l.b16 %v417
        %v1452 = vunpack.c.h.b16 %v417
        %v1453 = vunpack.c.l.b16 %v418
        %v1454 = vunpack.c.h.b16 %v418
        %v1455 = vunpack.c.l.b16 %v419
        %v1456 = vunpack.c.h.b16 %v419
        %v1457 = vunpack.c.l.b16 %v420
        %v1458 = vunpack.c.h.b16 %v420
        %v1459 = vunpack.c.l.b16 %v421
        %v1460 = vunpack.c.h.b16 %v421
        %v1461 = vunpack.c.l.b16 %v422
        %v1462 = vunpack.c.h.b16 %v422
        %v1463 = vunpack.c.l.b16 %v423
        %v1464 = vunpack.c.h.b16 %v423
        %v1465 = vunpack.c.l.b16 %v424
        %v1466 = vunpack.c.h.b16 %v424
        %v1467 = vunpack.c.l.b16 %v425
        %v1468 = vunpack.c.h.b16 %v425
        %v1469 = vunpack.c.l.b16 %v426
        %v1470 = vunpack.c.h.b16 %v426
        %v1471 = vunpack.c.l.b16 %v427
        %v1472 = vunpack.c.h.b16 %v427
        %v1473 = vunpack.c.l.b16 %v428
        %v1474 = vunpack.c.h.b16 %v428
        %v1475 = vunpack.c.l.b16 %v429
        %v1476 = vunpack.c.h.b16 %v429
        %v1477 = vunpack.c.l.b16 %v430
        %v1478 = vunpack.c.h.b16 %v430
        %v1479 = vunpack.c.l.b16 %v431
        %v1480 = vunpack.c.h.b16 %v431
        %v1481 = vunpack.c.l.b16 %v432
        %v1482 = vunpack.c.h.b16 %v432
        %v1483 = vunpack.c.l.b16 %v433
        %v1484 = vunpack.c.h.b16 %v433
        %v1485 = vunpack.c.l.b16 %v434
        %v1486 = vunpack.c.h.b16 %v434
        %v1487 = vunpack.c.l.b16 %v435
        %v1488 = vunpack.c.h.b16 %v435
        %v1489 = vunpack.c.l.b16 %v436
        %v1490 = vunpack.c.h.b16 %v436
        %v1491 = vunpack.c.l.b16 %v437
        %v1492 = vunpack.c.h.b16 %v437
        %v1493 = vunpack.c.l.b16 %v438
        %v1494 = vunpack.c.h.b16 %v438
        %v1495 = vunpack.c.l.b16 %v439
        %v1496 = vunpack.c.h.b16 %v439
        %v1497 = vunpack.c.l.b16 %v440
        %v1498 = vunpack.c.h.b16 %v440
        %v1499 = vunpack.c.l.b16 %v441
        %v1500 = vunpack.c.h.b16 %v441
        %v1501 = vunpack.c.l.b16 %v442
        %v1502 = vunpack.c.h.b16 %v442
        %v1503 = vunpack.c.l.b16 %v443
        %v1504 = vunpack.c.h.b16 %v443
        %v1505 = vunpack.c.l.b16 %v444
        %v1506 = vunpack.c.h.b16 %v444
        %v1507 = vunpack.c.l.b16 %v445
        %v1508 = vunpack.c.h.b16 %v445
        %v1509 = vunpack.c.l.b16 %v446
        %v1510 = vunpack.c.h.b16 %v446
        %v1511 = vunpack.c.l.b16 %v447
        %v1512 = vunpack.c.h.b16 %v447
        %v1513 = vunpack.c.l.b16 %v448
        %v1514 = vunpack.c.h.b16 %v448
        %v1515 = vunpack.c.l.b16 %v449
        %v1516 = vunpack.c.h.b16 %v449
        %v1517 = vunpack.c.l.b16 %v450
        %v1518 = vunpack.c.h.b16 %v450
        %v1519 = vunpack.c.l.b16 %v451
        %v1520 = vunpack.c.h.b16 %v451
        %v1521 = vunpack.c.l.b16 %v452
        %v1522 = vunpack.c.h.b16 %v452
        %v1523 = vunpack.c.l.b16 %v453
        %v1524 = vunpack.c.h.b16 %v453
        %v1525 = vunpack.c.l.b16 %v454
        %v1526 = vunpack.c.h.b16 %v454
        %v1527 = vunpack.c.l.b16 %v455
        %v1528 = vunpack.c.h.b16 %v455
        %v1529 = vunpack.c.l.b16 %v456
        %v1530 = vunpack.c.h.b16 %v456
        %v1531 = vunpack.c.l.b16 %v457
        %v1532 = vunpack.c.h.b16 %v457
        %v1533 = vunpack.c.l.b16 %v458
        %v1534 = vunpack.c.h.b16 %v458
        %v1535 = vunpack.c.l.b16 %v459
        %v1536 = vunpack.c.h.b16 %v459
        %v1537 = vunpack.c.l.b16 %v460
        %v1538 = vunpack.c.h.b16 %v460
        %v1539 = vunpack.c.l.b16 %v461
        %v1540 = vunpack.c.h.b16 %v461
        %v1541 = vunpack.c.l.b16 %v462
        %v1542 = vunpack.c.h.b16 %v462
        %v1543 = vunpack.c.l.b16 %v463
        %v1544 = vunpack.c.h.b16 %v463
        %v1545 = vunpack.c.l.b16 %v464
        %v1546 = vunpack.c.h.b16 %v464
        %v1547 = vunpack.c.l.b16 %v465
        %v1548 = vunpack.c.h.b16 %v465
        %v1549 = vunpack.c.l.b16 %v466
        %v1550 = vunpack.c.h.b16 %v466
        %v1551 = vunpack.c.l.b16 %v467
        %v1552 = vunpack.c.h.b16 %v467
        %v1553 = vunpack.c.l.b16 %v468
        %v1554 = vunpack.c.h.b16 %v468
        %v1555 = vunpack.c.l.b16 %v469
        %v1556 = vunpack.c.h.b16 %v469
        %v1557 = vunpack.c.l.b16 %v470
        %v1558 = vunpack.c.h.b16 %v470
        %v1559 = vunpack.c.l.b16 %v471
        %v1560 = vunpack.c.h.b16 %v471
        %v1561 = vunpack.c.l.b16 %v472
        %v1562 = vunpack.c.h.b16 %v472
        %v1563 = vunpack.c.l.b16 %v473
        %v1564 = vunpack.c.h.b16 %v473
        %v1565 = vunpack.c.l.b16 %v474
        %v1566 = vunpack.c.h.b16 %v474
        %v1567 = vunpack.c.l.b16 %v475
        %v1568 = vunpack.c.h.b16 %v475
        %v1569 = vunpack.c.l.b16 %v476
        %v1570 = vunpack.c.h.b16 %v476
        %v1571 = vunpack.c.l.b16 %v477
        %v1572 = vunpack.c.h.b16 %v477
        %v1573 = vunpack.c.l.b16 %v478
        %v1574 = vunpack.c.h.b16 %v478
        %v1575 = vunpack.c.l.b16 %v479
        %v1576 = vunpack.c.h.b16 %v479
        %v1577 = vunpack.c.l.b16 %v480
        %v1578 = vunpack.c.h.b16 %v480
        %v1579 = vunpack.c.l.b16 %v481
        %v1580 = vunpack.c.h.b16 %v481
        %v1581 = vunpack.c.l.b16 %v482
        %v1582 = vunpack.c.h.b16 %v482
        %v1583 = vunpack.c.l.b16 %v483
        %v1584 = vunpack.c.h.b16 %v483
        %v1585 = vunpack.c.l.b16 %v484
        %v1586 = vunpack.c.h.b16 %v484
        %v1587 = vunpack.c.l.b16 %v485
        %v1588 = vunpack.c.h.b16 %v485
        %v1589 = vunpack.c.l.b16 %v486
        %v1590 = vunpack.c.h.b16 %v486
        %v1591 = vunpack.c.l.b16 %v487
        %v1592 = vunpack.c.h.b16 %v487
        %v1593 = vunpack.c.l.b16 %v488
        %v1594 = vunpack.c.h.b16 %v488
        %v1595 = vunpack.c.l.b16 %v489
        %v1596 = vunpack.c.h.b16 %v489
        %v1597 = vunpack.c.l.b16 %v490
        %v1598 = vunpack.c.h.b16 %v490
        %v1599 = vunpack.c.l.b16 %v491
        %v1600 = vunpack.c.h.b16 %v491
        %v1601 = vunpack.c.l.b16 %v492
        %v1602 = vunpack.c.h.b16 %v492
        %v1603 = vunpack.c.l.b16 %v493
        %v1604 = vunpack.c.h.b16 %v493
        %v1605 = vunpack.c.l.b16 %v494
        %v1606 = vunpack.c.h.b16 %v494
        %v1607 = vunpack.c.l.b16 %v495
        %v1608 = vunpack.c.h.b16 %v495
        %v1609 = vunpack.c.l.b16 %v496
        %v1610 = vunpack.c.h.b16 %v496
        %v1611 = vunpack.c.l.b16 %v497
        %v1612 = vunpack.c.h.b16 %v497
        %v1613 = vunpack.c.l.b16 %v498
        %v1614 = vunpack.c.h.b16 %v498
        %v1615 = vunpack.c.l.b16 %v499
        %v1616 = vunpack.c.h.b16 %v499
        %v1617 = vunpack.c.l.b16 %v500
        %v1618 = vunpack.c.h.b16 %v500
        %v1619 = vunpack.c.l.b16 %v501
        %v1620 = vunpack.c.h.b16 %v501
        %v1621 = vunpack.c.l.b16 %v502
        %v1622 = vunpack.c.h.b16 %v502
        %v1623 = vunpack.c.l.b16 %v503
        %v1624 = vunpack.c.h.b16 %v503
        %v1625 = vunpack.c.l.b16 %v504
        %v1626 = vunpack.c.h.b16 %v504
        %v1627 = vunpack.c.l.b16 %v505
        %v1628 = vunpack.c.h.b16 %v505
        %v1629 = vunpack.c.l.b16 %v506
        %v1630 = vunpack.c.h.b16 %v506
        %v1631 = vunpack.c.l.b16 %v507
        %v1632 = vunpack.c.h.b16 %v507
        %v1633 = vunpack.c.l.b16 %v508
        %v1634 = vunpack.c.h.b16 %v508
        %v1635 = vunpack.c.l.b16 %v509
        %v1636 = vunpack.c.h.b16 %v509
        %v1637 = vunpack.c.l.b16 %v510
        %v1638 = vunpack.c.h.b16 %v510
        %v1639 = vunpack.c.l.b16 %v511
        %v1640 = vunpack.c.h.b16 %v511
        %v1641 = vunpack.c.l.b16 %v512
        %v1642 = vunpack.c.h.b16 %v512
        %v1643 = vunpack.c.l.b16 %v513
        %v1644 = vunpack.c.h.b16 %v513
        %v1645 = vunpack.c.l.b16 %v514
        %v1646 = vunpack.c.h.b16 %v514
        %v1647 = vunpack.c.l.b16 %v515
        %v1648 = vunpack.c.h.b16 %v515
        %v1649 = vunpack.c.l.b16 %v516
        %v1650 = vunpack.c.h.b16 %v516
        %v1651 = vunpack.c.l.b16 %v517
        %v1652 = vunpack.c.h.b16 %v517
        %v1653 = vunpack.c.l.b16 %v518
        %v1654 = vunpack.c.h.b16 %v518
        %v1655 = vunpack.c.l.b16 %v519
        %v1656 = vunpack.c.h.b16 %v519
        %v1657 = vunpack.c.l.b16 %v520
        %v1658 = vunpack.c.h.b16 %v520
        %v1659 = vunpack.c.l.b16 %v521
        %v1660 = vunpack.c.h.b16 %v521
        %v1661 = vunpack.c.l.b16 %v522
        %v1662 = vunpack.c.h.b16 %v522
        %v1663 = vunpack.c.l.b16 %v523
        %v1664 = vunpack.c.h.b16 %v523
        %v1665 = vunpack.c.l.b16 %v524
        %v1666 = vunpack.c.h.b16 %v524
        %v1667 = vunpack.c.l.b16 %v525
        %v1668 = vunpack.c.h.b16 %v525
        %v1669 = vunpack.c.l.b16 %v526
        %v1670 = vunpack.c.h.b16 %v526
        %v1671 = vunpack.c.l.b16 %v527
        %v1672 = vunpack.c.h.b16 %v527
        %v1673 = vunpack.c.l.b16 %v528
        %v1674 = vunpack.c.h.b16 %v528
        %v1675 = vunpack.c.l.b16 %v529
        %v1676 = vunpack.c.h.b16 %v529
        %v1677 = vunpack.c.l.b16 %v530
        %v1678 = vunpack.c.h.b16 %v530
        %v1679 = vunpack.c.l.b16 %v531
        %v1680 = vunpack.c.h.b16 %v531
        %v1681 = vunpack.c.l.b16 %v532
        %v1682 = vunpack.c.h.b16 %v532
        %v1683 = vunpack.c.l.b16 %v533
        %v1684 = vunpack.c.h.b16 %v533
        %v1685 = vunpack.c.l.b16 %v534
        %v1686 = vunpack.c.h.b16 %v534
        %v1687 = vunpack.c.l.b16 %v535
        %v1688 = vunpack.c.h.b16 %v535
        %v1689 = vunpack.c.l.b16 %v536
        %v1690 = vunpack.c.h.b16 %v536
        %v1691 = vunpack.c.l.b16 %v537
        %v1692 = vunpack.c.h.b16 %v537
        %v1693 = vunpack.c.l.b16 %v538
        %v1694 = vunpack.c.h.b16 %v538
        %v1695 = vunpack.c.l.b16 %v539
        %v1696 = vunpack.c.h.b16 %v539
        %v1697 = vunpack.c.l.b16 %v540
        %v1698 = vunpack.c.h.b16 %v540
        %v1699 = vunpack.c.l.b16 %v541
        %v1700 = vunpack.c.h.b16 %v541
        %v1701 = vunpack.c.l.b16 %v542
        %v1702 = vunpack.c.h.b16 %v542
        %v1703 = vunpack.c.l.b16 %v543
        %v1704 = vunpack.c.h.b16 %v543
        %v1705 = vunpack.c.l.b16 %v544
        %v1706 = vunpack.c.h.b16 %v544
        %v1707 = vunpack.c.l.b16 %v545
        %v1708 = vunpack.c.h.b16 %v545
        %v1709 = vunpack.c.l.b16 %v546
        %v1710 = vunpack.c.h.b16 %v546
        %v1711 = vunpack.c.l.b16 %v547
        %v1712 = vunpack.c.h.b16 %v547
        %v1713 = vunpack.c.l.b16 %v548
        %v1714 = vunpack.c.h.b16 %v548
        %v1715 = vunpack.c.l.b16 %v549
        %v1716 = vunpack.c.h.b16 %v549
        %v1717 = vunpack.c.l.b16 %v550
        %v1718 = vunpack.c.h.b16 %v550
        %v1719 = vunpack.c.l.b16 %v551
        %v1720 = vunpack.c.h.b16 %v551
        %v1721 = vunpack.c.l.b16 %v552
        %v1722 = vunpack.c.h.b16 %v552
        %v1723 = vunpack.c.l.b16 %v553
        %v1724 = vunpack.c.h.b16 %v553
        %v1725 = vunpack.c.l.b16 %v554
        %v1726 = vunpack.c.h.b16 %v554
        %v1727 = vunpack.c.l.b16 %v555
        %v1728 = vunpack.c.h.b16 %v555
        %v1729 = vunpack.c.l.b16 %v556
        %v1730 = vunpack.c.h.b16 %v556
        %v1731 = vunpack.c.l.b16 %v557
        %v1732 = vunpack.c.h.b16 %v557
        %v1733 = vunpack.c.l.b16 %v558
        %v1734 = vunpack.c.h.b16 %v558
        %v1735 = vunpack.c.l.b16 %v559
        %v1736 = vunpack.c.h.b16 %v559
        %v1737 = vunpack.c.l.b16 %v560
        %v1738 = vunpack.c.h.b16 %v560
        %v1739 = vunpack.c.l.b16 %v561
        %v1740 = vunpack.c.h.b16 %v561
        %v1741 = vunpack.c.l.b16 %v562
        %v1742 = vunpack.c.h.b16 %v562
        %v1743 = vunpack.c.l.b16 %v563
        %v1744 = vunpack.c.h.b16 %v563
        %v1745 = vunpack.c.l.b16 %v564
        %v1746 = vunpack.c.h.b16 %v564
        %v1747 = vunpack.c.l.b16 %v565
        %v1748 = vunpack.c.h.b16 %v565
        %v1749 = vunpack.c.l.b16 %v566
        %v1750 = vunpack.c.h.b16 %v566
        %v1751 = vunpack.c.l.b16 %v567
        %v1752 = vunpack.c.h.b16 %v567
        %v1753 = vunpack.c.l.b16 %v568
        %v1754 = vunpack.c.h.b16 %v568
        %v1755 = vunpack.c.l.b16 %v569
        %v1756 = vunpack.c.h.b16 %v569
        %v1757 = vunpack.c.l.b16 %v570
        %v1758 = vunpack.c.h.b16 %v570
        %v1759 = vunpack.c.l.b16 %v571
        %v1760 = vunpack.c.h.b16 %v571
        %v1761 = vunpack.c.l.b16 %v572
        %v1762 = vunpack.c.h.b16 %v572
        %v1763 = vunpack.c.l.b16 %v573
        %v1764 = vunpack.c.h.b16 %v573
        %v1765 = vunpack.c.l.b16 %v574
        %v1766 = vunpack.c.h.b16 %v574
        %v1767 = vunpack.c.l.b16 %v575
        %v1768 = vunpack.c.h.b16 %v575
        %v1769 = vunpack.c.l.b16 %v576
        %v1770 = vunpack.c.h.b16 %v576
        %v1771 = vunpack.c.l.b16 %v577
        %v1772 = vunpack.c.h.b16 %v577
        %v1773 = vunpack.c.l.b16 %v578
        %v1774 = vunpack.c.h.b16 %v578
        %v1775 = vunpack.c.l.b16 %v579
        %v1776 = vunpack.c.h.b16 %v579
        %v1777 = vunpack.c.l.b16 %v580
        %v1778 = vunpack.c.h.b16 %v580
        %v1779 = vunpack.c.l.b16 %v581
        %v1780 = vunpack.c.h.b16 %v581
        %v1781 = vunpack.c.l.b16 %v582
        %v1782 = vunpack.c.h.b16 %v582
        %v1783 = vunpack.c.l.b16 %v583
        %v1784 = vunpack.c.h.b16 %v583
        %v1785 = vunpack.c.l.b16 %v584
        %v1786 = vunpack.c.h.b16 %v584
        %v1787 = vunpack.c.l.b16 %v585
        %v1788 = vunpack.c.h.b16 %v585
        %v1789 = vunpack.c.l.b16 %v586
        %v1790 = vunpack.c.h.b16 %v586
        %v1791 = vunpack.c.l.b16 %v587
        %v1792 = vunpack.c.h.b16 %v587
        %v1793 = vunpack.c.l.b16 %v588
        %v1794 = vunpack.c.h.b16 %v588
        %v1795 = vunpack.c.l.b16 %v589
        %v1796 = vunpack.c.h.b16 %v589
        %v1797 = vunpack.c.l.b16 %v590
        %v1798 = vunpack.c.h.b16 %v590
        %v1799 = vunpack.c.l.b16 %v591
        %v1800 = vunpack.c.h.b16 %v591
        %v1801 = vunpack.c.l.b16 %v592
        %v1802 = vunpack.c.h.b16 %v592
        %v1803 = vunpack.c.l.b16 %v593
        %v1804 = vunpack.c.h.b16 %v593
        %v1805 = vunpack.c.l.b16 %v594
        %v1806 = vunpack.c.h.b16 %v594
        %v1807 = vunpack.c.l.b16 %v595
        %v1808 = vunpack.c.h.b16 %v595
        %v1809 = vunpack.c.l.b16 %v596
        %v1810 = vunpack.c.h.b16 %v596
        %v1811 = vunpack.c.l.b16 %v597
        %v1812 = vunpack.c.h.b16 %v597
        %v1813 = vunpack.c.l.b16 %v598
        %v1814 = vunpack.c.h.b16 %v598
        %v1815 = vunpack.c.l.b16 %v599
        %v1816 = vunpack.c.h.b16 %v599
        %v1817 = vunpack.c.l.b16 %v600
        %v1818 = vunpack.c.h.b16 %v600
        %v1819 = vunpack.c.l.b16 %v601
        %v1820 = vunpack.c.h.b16 %v601
        %v1821 = vunpack.c.l.b16 %v602
        %v1822 = vunpack.c.h.b16 %v602
        %v1823 = vunpack.c.l.b16 %v603
        %v1824 = vunpack.c.h.b16 %v603
        %v1825 = vunpack.c.l.b16 %v604
        %v1826 = vunpack.c.h.b16 %v604
        %v1827 = vunpack.c.l.b16 %v605
        %v1828 = vunpack.c.h.b16 %v605
        %v1829 = vunpack.c.l.b16 %v606
        %v1830 = vunpack.c.h.b16 %v606
        %v1831 = vunpack.c.l.b16 %v607
        %v1832 = vunpack.c.h.b16 %v607
        %v1833 = vunpack.c.l.b16 %v608
        %v1834 = vunpack.c.h.b16 %v608
        %v1835 = vunpack.c.l.b16 %v609
        %v1836 = vunpack.c.h.b16 %v609
        %v1837 = vunpack.c.l.b16 %v610
        %v1838 = vunpack.c.h.b16 %v610
        %v1839 = vunpack.c.l.b16 %v611
        %v1840 = vunpack.c.h.b16 %v611
        %v1841 = vunpack.c.l.b16 %v612
        %v1842 = vunpack.c.h.b16 %v612
        %v1843 = vunpack.c.l.b16 %v613
        %v1844 = vunpack.c.h.b16 %v613
        %v1845 = vunpack.c.l.b16 %v614
        %v1846 = vunpack.c.h.b16 %v614
        %v1847 = vunpack.c.l.b16 %v615
        %v1848 = vunpack.c.h.b16 %v615
        %v1849 = vunpack.c.l.b16 %v616
        %v1850 = vunpack.c.h.b16 %v616
        %v1851 = vunpack.c.l.b16 %v617
        %v1852 = vunpack.c.h.b16 %v617
        %v1853 = vunpack.c.l.b16 %v618
        %v1854 = vunpack.c.h.b16 %v618
        %v1855 = vunpack.c.l.b16 %v619
        %v1856 = vunpack.c.h.b16 %v619
        %v1857 = vunpack.c.l.b16 %v620
        %v1858 = vunpack.c.h.b16 %v620
        %v1859 = vunpack.c.l.b16 %v621
        %v1860 = vunpack.c.h.b16 %v621
        %v1861 = vunpack.c.l.b16 %v622
        %v1862 = vunpack.c.h.b16 %v622
        %v1863 = vunpack.c.l.b16 %v623
        %v1864 = vunpack.c.h.b16 %v623
        %v1865 = vunpack.c.l.b16 %v624
        %v1866 = vunpack.c.h.b16 %v624
        %v1867 = vunpack.c.l.b16 %v625
        %v1868 = vunpack.c.h.b16 %v625
        %v1869 = vunpack.c.l.b16 %v626
        %v1870 = vunpack.c.h.b16 %v626
        %v1871 = vunpack.c.l.b16 %v627
        %v1872 = vunpack.c.h.b16 %v627
        %v1873 = vunpack.c.l.b16 %v628
        %v1874 = vunpack.c.h.b16 %v628
        %v1875 = vunpack.c.l.b16 %v629
        %v1876 = vunpack.c.h.b16 %v629
        %v1877 = vunpack.c.l.b16 %v630
        %v1878 = vunpack.c.h.b16 %v630
        %v1879 = vunpack.c.l.b16 %v631
        %v1880 = vunpack.c.h.b16 %v631
        %v1881 = vunpack.c.l.b16 %v632
        %v1882 = vunpack.c.h.b16 %v632
        %v1883 = vunpack.c.l.b16 %v633
        %v1884 = vunpack.c.h.b16 %v633
        %v1885 = vunpack.c.l.b16 %v634
        %v1886 = vunpack.c.h.b16 %v634
        %v1887 = vunpack.c.l.b16 %v635
        %v1888 = vunpack.c.h.b16 %v635
        %v1889 = vunpack.c.l.b16 %v636
        %v1890 = vunpack.c.h.b16 %v636
        %v1891 = vunpack.c.l.b16 %v637
        %v1892 = vunpack.c.h.b16 %v637
        %v1893 = vunpack.c.l.b16 %v638
        %v1894 = vunpack.c.h.b16 %v638
        %v1895 = vunpack.c.l.b16 %v639
        %v1896 = vunpack.c.h.b16 %v639
        %v1897 = vunpack.c.l.b16 %v640
        %v1898 = vunpack.c.h.b16 %v640
        %v1899 = vunpack.c.l.b16 %v641
        %v1900 = vunpack.c.h.b16 %v641
        %v1901 = vunpack.c.l.b16 %v642
        %v1902 = vunpack.c.h.b16 %v642
        %v1903 = vunpack.c.l.b16 %v643
        %v1904 = vunpack.c.h.b16 %v643
        %v1905 = vunpack.c.l.b16 %v644
        %v1906 = vunpack.c.h.b16 %v644
        %v1907 = vunpack.c.l.b16 %v645
        %v1908 = vunpack.c.h.b16 %v645
        %v1909 = vunpack.c.l.b16 %v646
        %v1910 = vunpack.c.h.b16 %v646
        %v1911 = vunpack.c.l.b16 %v647
        %v1912 = vunpack.c.h.b16 %v647
        %v1913 = vunpack.c.l.b16 %v648
        %v1914 = vunpack.c.h.b16 %v648
        %v1915 = vunpack.c.l.b16 %v649
        %v1916 = vunpack.c.h.b16 %v649
        %v1917 = vunpack.c.l.b16 %v650
        %v1918 = vunpack.c.h.b16 %v650
        %v1919 = vunpack.c.l.b16 %v651
        %v1920 = vunpack.c.h.b16 %v651
        %v1921 = vunpack.c.l.b16 %v652
        %v1922 = vunpack.c.h.b16 %v652
        %v1923 = vunpack.c.l.b16 %v653
        %v1924 = vunpack.c.h.b16 %v653
        %v1925 = vunpack.c.l.b16 %v654
        %v1926 = vunpack.c.h.b16 %v654
        %v1927 = vunpack.c.l.b16 %v655
        %v1928 = vunpack.c.h.b16 %v655
        %v1929 = vunpack.c.l.b16 %v656
        %v1930 = vunpack.c.h.b16 %v656
        %v1931 = vunpack.c.l.b16 %v657
        %v1932 = vunpack.c.h.b16 %v657
        %v1933 = vunpack.c.l.b16 %v658
        %v1934 = vunpack.c.h.b16 %v658
        %v1935 = vunpack.c.l.b16 %v659
        %v1936 = vunpack.c.h.b16 %v659
        %v1937 = vunpack.c.l.b16 %v660
        %v1938 = vunpack.c.h.b16 %v660
        %v1939 = vunpack.c.l.b16 %v661
        %v1940 = vunpack.c.h.b16 %v661
        %v1941 = vunpack.c.l.b16 %v662
        %v1942 = vunpack.c.h.b16 %v662
        %v1943 = vunpack.c.l.b16 %v663
        %v1944 = vunpack.c.h.b16 %v663
        %v1945 = vunpack.c.l.b16 %v664
        %v1946 = vunpack.c.h.b16 %v664
        %v1947 = vunpack.c.l.b16 %v665
        %v1948 = vunpack.c.h.b16 %v665
        %v1949 = vunpack.c.l.b16 %v666
        %v1950 = vunpack.c.h.b16 %v666
        %v1951 = vunpack.c.l.b16 %v667
        %v1952 = vunpack.c.h.b16 %v667
        %v1953 = vunpack.c.l.b16 %v668
        %v1954 = vunpack.c.h.b16 %v668
        %v1955 = vunpack.c.l.b16 %v669
        %v1956 = vunpack.c.h.b16 %v669
        %v1957 = vunpack.c.l.b16 %v670
        %v1958 = vunpack.c.h.b16 %v670
        %v1959 = vunpack.c.l.b16 %v671
        %v1960 = vunpack.c.h.b16 %v671
        %v1961 = vunpack.c.l.b16 %v672
        %v1962 = vunpack.c.h.b16 %v672
        %v1963 = vunpack.c.l.b16 %v673
        %v1964 = vunpack.c.h.b16 %v673
        %v1965 = vunpack.c.l.b16 %v674
        %v1966 = vunpack.c.h.b16 %v674
        %v1967 = vunpack.c.l.b16 %v675
        %v1968 = vunpack.c.h.b16 %v675
        %v1969 = vunpack.c.l.b16 %v676
        %v1970 = vunpack.c.h.b16 %v676
        %v1971 = vunpack.c.l.b16 %v677
        %v1972 = vunpack.c.h.b16 %v677
        %v1973 = vunpack.c.l.b16 %v678
        %v1974 = vunpack.c.h.b16 %v678
        %v1975 = vunpack.c.l.b16 %v679
        %v1976 = vunpack.c.h.b16 %v679
        %v1977 = vunpack.c.l.b16 %v680
        %v1978 = vunpack.c.h.b16 %v680
        %v1979 = vunpack.c.l.b16 %v681
        %v1980 = vunpack.c.h.b16 %v681
        %v1981 = vunpack.c.l.b16 %v682
        %v1982 = vunpack.c.h.b16 %v682
        %v1983 = vunpack.c.l.b16 %v683
        %v1984 = vunpack.c.h.b16 %v683
        %v1985 = vunpack.c.l.b16 %v684
        %v1986 = vunpack.c.h.b16 %v684
        %v1987 = vunpack.c.l.b16 %v685
        %v1988 = vunpack.c.h.b16 %v685
        %v1989 = vunpack.c.l.b16 %v686
        %v1990 = vunpack.c.h.b16 %v686
        %v1991 = vunpack.c.l.b16 %v687
        %v1992 = vunpack.c.h.b16 %v687
        %v1993 = vunpack.c.l.b16 %v688
        %v1994 = vunpack.c.h.b16 %v688
        %v1995 = vunpack.c.l.b16 %v689
        %v1996 = vunpack.c.h.b16 %v689
        %v1997 = vunpack.c.l.b16 %v690
        %v1998 = vunpack.c.h.b16 %v690
        %v1999 = vunpack.c.l.b16 %v691
        %v2000 = vunpack.c.h.b16 %v691
        %v2001 = vunpack.c.l.b16 %v692
        %v2002 = vunpack.c.h.b16 %v692
        %v2003 = vunpack.c.l.b16 %v693
        %v2004 = vunpack.c.h.b16 %v693
        %v2005 = vunpack.c.l.b16 %v694
        %v2006 = vunpack.c.h.b16 %v694
        %v2007 = vpack.c.b16 %v1161, %v1143
        %v2008 = vpack.c.b16 %v1162, %v1144
        %v2009 = vpack.c.b16 %v1163, %v1145
        %v2010 = vpack.c.b16 %v1164, %v1146
        %v2011 = vpack.c.b16 %v1165, %v1147
        %v2012 = vpack.c.b16 %v1166, %v1148
        %v2013 = vpack.c.b16 %v1167, %v1149
        %v2014 = vpack.c.b16 %v1168, %v1150
        %v2015 = vpack.c.b16 %v1169, %v1151
        %v2016 = vpack.c.b16 %v1170, %v1152
        %v2017 = vpack.c.b16 %v1171, %v1153
        %v2018 = vpack.c.b16 %v1172, %v1154
        %v2019 = vpack.c.b16 %v1173, %v1155
        %v2020 = vpack.c.b16 %v1174, %v1156
        %v2021 = vpack.c.b16 %v1175, %v1157
        %v2022 = vpack.c.b16 %v1176, %v1158
        %v2023 = vpack.c.b16 %v1177, %v1159
        %v2024 = vpack.c.b16 %v1178, %v1160
        %v2025 = vpack.c.b16 %v1197, %v1179
        %v2026 = vpack.c.b16 %v1198, %v1180
        %v2027 = vpack.c.b16 %v1199, %v1181
        %v2028 = vpack.c.b16 %v1200, %v1182
        %v2029 = vpack.c.b16 %v1201, %v1183
        %v2030 = vpack.c.b16 %v1202, %v1184
        %v2031 = vpack.c.b16 %v1203, %v1185
        %v2032 = vpack.c.b16 %v1204, %v1186
        %v2033 = vpack.c.b16 %v1205, %v1187
        %v2034 = vpack.c.b16 %v1206, %v1188
        %v2035 = vpack.c.b16 %v1207, %v1189
        %v2036 = vpack.c.b16 %v1208, %v1190
        %v2037 = vpack.c.b16 %v1209, %v1191
        %v2038 = vpack.c.b16 %v1210, %v1192
        %v2039 = vpack.c.b16 %v1211, %v1193
        %v2040 = vpack.c.b16 %v1212, %v1194
        %v2041 = vpack.c.b16 %v1213, %v1195
        %v2042 = vpack.c.b16 %v1214, %v1196
        %v2043 = vpack.c.b16 %v1233, %v1215
        %v2044 = vpack.c.b16 %v1234, %v1216
        %v2045 = vpack.c.b16 %v1235, %v1217
        %v2046 = vpack.c.b16 %v1236, %v1218
        %v2047 = vpack.c.b16 %v1237, %v1219
        %v2048 = vpack.c.b16 %v1238, %v1220
        %v2049 = vpack.c.b16 %v1239, %v1221
        %v2050 = vpack.c.b16 %v1240, %v1222
        %v2051 = vpack.c.b16 %v1241, %v1223
        %v2052 = vpack.c.b16 %v1242, %v1224
        %v2053 = vpack.c.b16 %v1243, %v1225
        %v2054 = vpack.c.b16 %v1244, %v1226
        %v2055 = vpack.c.b16 %v1245, %v1227
        %v2056 = vpack.c.b16 %v1246, %v1228
        %v2057 = vpack.c.b16 %v1247, %v1229
        %v2058 = vpack.c.b16 %v1248, %v1230
        %v2059 = vpack.c.b16 %v1249, %v1231
        %v2060 = vpack.c.b16 %v1250, %v1232
        %v2061 = vpack.c.b16 %v1269, %v1251
        %v2062 = vpack.c.b16 %v1270, %v1252
        %v2063 = vpack.c.b16 %v1271, %v1253
        %v2064 = vpack.c.b16 %v1272, %v1254
        %v2065 = vpack.c.b16 %v1273, %v1255
        %v2066 = vpack.c.b16 %v1274, %v1256
        %v2067 = vpack.c.b16 %v1275, %v1257
        %v2068 = vpack.c.b16 %v1276, %v1258
        %v2069 = vpack.c.b16 %v1277, %v1259
        %v2070 = vpack.c.b16 %v1278, %v1260
        %v2071 = vpack.c.b16 %v1279, %v1261
        %v2072 = vpack.c.b16 %v1280, %v1262
        %v2073 = vpack.c.b16 %v1281, %v1263
        %v2074 = vpack.c.b16 %v1282, %v1264
        %v2075 = vpack.c.b16 %v1283, %v1265
        %v2076 = vpack.c.b16 %v1284, %v1266
        %v2077 = vpack.c.b16 %v1285, %v1267
        %v2078 = vpack.c.b16 %v1286, %v1268
        %v2079 = vpack.c.b16 %v1305, %v1287
        %v2080 = vpack.c.b16 %v1306, %v1288
        %v2081 = vpack.c.b16 %v1307, %v1289
        %v2082 = vpack.c.b16 %v1308, %v1290
        %v2083 = vpack.c.b16 %v1309, %v1291
        %v2084 = vpack.c.b16 %v1310, %v1292
        %v2085 = vpack.c.b16 %v1311, %v1293
        %v2086 = vpack.c.b16 %v1312, %v1294
        %v2087 = vpack.c.b16 %v1313, %v1295
        %v2088 = vpack.c.b16 %v1314, %v1296
        %v2089 = vpack.c.b16 %v1315, %v1297
        %v2090 = vpack.c.b16 %v1316, %v1298
        %v2091 = vpack.c.b16 %v1317, %v1299
        %v2092 = vpack.c.b16 %v1318, %v1300
        %v2093 = vpack.c.b16 %v1319, %v1301
        %v2094 = vpack.c.b16 %v1320, %v1302
        %v2095 = vpack.c.b16 %v1321, %v1303
        %v2096 = vpack.c.b16 %v1322, %v1304
        %v2097 = vpack.c.b16 %v1341, %v1323
        %v2098 = vpack.c.b16 %v1342, %v1324
        %v2099 = vpack.c.b16 %v1343, %v1325
        %v2100 = vpack.c.b16 %v1344, %v1326
        %v2101 = vpack.c.b16 %v1345, %v1327
        %v2102 = vpack.c.b16 %v1346, %v1328
        %v2103 = vpack.c.b16 %v1347, %v1329
        %v2104 = vpack.c.b16 %v1348, %v1330
        %v2105 = vpack.c.b16 %v1349, %v1331
        %v2106 = vpack.c.b16 %v1350, %v1332
        %v2107 = vpack.c.b16 %v1351, %v1333
        %v2108 = vpack.c.b16 %v1352, %v1334
        %v2109 = vpack.c.b16 %v1353, %v1335
        %v2110 = vpack.c.b16 %v1354, %v1336
        %v2111 = vpack.c.b16 %v1355, %v1337
        %v2112 = vpack.c.b16 %v1356, %v1338
        %v2113 = vpack.c.b16 %v1357, %v1339
        %v2114 = vpack.c.b16 %v1358, %v1340
        %v2115 = vpack.c.b16 %v1377, %v1359
        %v2116 = vpack.c.b16 %v1378, %v1360
        %v2117 = vpack.c.b16 %v1379, %v1361
        %v2118 = vpack.c.b16 %v1380, %v1362
        %v2119 = vpack.c.b16 %v1381, %v1363
        %v2120 = vpack.c.b16 %v1382, %v1364
        %v2121 = vpack.c.b16 %v1383, %v1365
        %v2122 = vpack.c.b16 %v1384, %v1366
        %v2123 = vpack.c.b16 %v1385, %v1367
        %v2124 = vpack.c.b16 %v1386, %v1368
        %v2125 = vpack.c.b16 %v1387, %v1369
        %v2126 = vpack.c.b16 %v1388, %v1370
        %v2127 = vpack.c.b16 %v1389, %v1371
        %v2128 = vpack.c.b16 %v1390, %v1372
        %v2129 = vpack.c.b16 %v1391, %v1373
        %v2130 = vpack.c.b16 %v1392, %v1374
        %v2131 = vpack.c.b16 %v1393, %v1375
        %v2132 = vpack.c.b16 %v1394, %v1376
        %v2133 = vpack.c.b16 %v1413, %v1395
        %v2134 = vpack.c.b16 %v1414, %v1396
        %v2135 = vpack.c.b16 %v1415, %v1397
        %v2136 = vpack.c.b16 %v1416, %v1398
        %v2137 = vpack.c.b16 %v1417, %v1399
        %v2138 = vpack.c.b16 %v1418, %v1400
        %v2139 = vpack.c.b16 %v1419, %v1401
        %v2140 = vpack.c.b16 %v1420, %v1402
        %v2141 = vpack.c.b16 %v1421, %v1403
        %v2142 = vpack.c.b16 %v1422, %v1404
        %v2143 = vpack.c.b16 %v1423, %v1405
        %v2144 = vpack.c.b16 %v1424, %v1406
        %v2145 = vpack.c.b16 %v1425, %v1407
        %v2146 = vpack.c.b16 %v1426, %v1408
        %v2147 = vpack.c.b16 %v1427, %v1409
        %v2148 = vpack.c.b16 %v1428, %v1410
        %v2149 = vpack.c.b16 %v1429, %v1411
        %v2150 = vpack.c.b16 %v1430, %v1412
        %v2151 = vpack.c.b16 %v1449, %v1431
        %v2152 = vpack.c.b16 %v1450, %v1432
        %v2153 = vpack.c.b16 %v1451, %v1433
        %v2154 = vpack.c.b16 %v1452, %v1434
        %v2155 = vpack.c.b16 %v1453, %v1435
        %v2156 = vpack.c.b16 %v1454, %v1436
        %v2157 = vpack.c.b16 %v1455, %v1437
        %v2158 = vpack.c.b16 %v1456, %v1438
        %v2159 = vpack.c.b16 %v1457, %v1439
        %v2160 = vpack.c.b16 %v1458, %v1440
        %v2161 = vpack.c.b16 %v1459, %v1441
        %v2162 = vpack.c.b16 %v1460, %v1442
        %v2163 = vpack.c.b16 %v1461, %v1443
        %v2164 = vpack.c.b16 %v1462, %v1444
        %v2165 = vpack.c.b16 %v1463, %v1445
        %v2166 = vpack.c.b16 %v1464, %v1446
        %v2167 = vpack.c.b16 %v1465, %v1447
        %v2168 = vpack.c.b16 %v1466, %v1448
        %v2169 = vpack.c.b16 %v1485, %v1467
        %v2170 = vpack.c.b16 %v1486, %v1468
        %v2171 = vpack.c.b16 %v1487, %v1469
        %v2172 = vpack.c.b16 %v1488, %v1470
        %v2173 = vpack.c.b16 %v1489, %v1471
        %v2174 = vpack.c.b16 %v1490, %v1472
        %v2175 = vpack.c.b16 %v1491, %v1473
        %v2176 = vpack.c.b16 %v1492, %v1474
        %v2177 = vpack.c.b16 %v1493, %v1475
        %v2178 = vpack.c.b16 %v1494, %v1476
        %v2179 = vpack.c.b16 %v1495, %v1477
        %v2180 = vpack.c.b16 %v1496, %v1478
        %v2181 = vpack.c.b16 %v1497, %v1479
        %v2182 = vpack.c.b16 %v1498, %v1480
        %v2183 = vpack.c.b16 %v1499, %v1481
        %v2184 = vpack.c.b16 %v1500, %v1482
        %v2185 = vpack.c.b16 %v1501, %v1483
        %v2186 = vpack.c.b16 %v1502, %v1484
        %v2187 = vpack.c.b16 %v1521, %v1503
        %v2188 = vpack.c.b16 %v1522, %v1504
        %v2189 = vpack.c.b16 %v1523, %v1505
        %v2190 = vpack.c.b16 %v1524, %v1506
        %v2191 = vpack.c.b16 %v1525, %v1507
        %v2192 = vpack.c.b16 %v1526, %v1508
        %v2193 = vpack.c.b16 %v1527, %v1509
        %v2194 = vpack.c.b16 %v1528, %v1510
        %v2195 = vpack.c.b16 %v1529, %v1511
        %v2196 = vpack.c.b16 %v1530, %v1512
        %v2197 = vpack.c.b16 %v1531, %v1513
        %v2198 = vpack.c.b16 %v1532, %v1514
        %v2199 = vpack.c.b16 %v1533, %v1515
        %v2200 = vpack.c.b16 %v1534, %v1516
        %v2201 = vpack.c.b16 %v1535, %v1517
        %v2202 = vpack.c.b16 %v1536, %v1518
        %v2203 = vpack.c.b16 %v1537, %v1519
        %v2204 = vpack.c.b16 %v1538, %v1520
        %v2205 = vpack.c.b16 %v1557, %v1539
        %v2206 = vpack.c.b16 %v1558, %v1540
        %v2207 = vpack.c.b16 %v1559, %v1541
        %v2208 = vpack.c.b16 %v1560, %v1542
        %v2209 = vpack.c.b16 %v1561, %v1543
        %v2210 = vpack.c.b16 %v1562, %v1544
        %v2211 = vpack.c.b16 %v1563, %v1545
        %v2212 = vpack.c.b16 %v1564, %v1546
        %v2213 = vpack.c.b16 %v1565, %v1547
        %v2214 = vpack.c.b16 %v1566, %v1548
        %v2215 = vpack.c.b16 %v1567, %v1549
        %v2216 = vpack.c.b16 %v1568, %v1550
        %v2217 = vpack.c.b16 %v1569, %v1551
        %v2218 = vpack.c.b16 %v1570, %v1552
        %v2219 = vpack.c.b16 %v1571, %v1553
        %v2220 = vpack.c.b16 %v1572, %v1554
        %v2221 = vpack.c.b16 %v1573, %v1555
        %v2222 = vpack.c.b16 %v1574, %v1556
        %v2223 = vpack.c.b16 %v1593, %v1575
        %v2224 = vpack.c.b16 %v1594, %v1576
        %v2225 = vpack.c.b16 %v1595, %v1577
        %v2226 = vpack.c.b16 %v1596, %v1578
        %v2227 = vpack.c.b16 %v1597, %v1579
        %v2228 = vpack.c.b16 %v1598, %v1580
        %v2229 = vpack.c.b16 %v1599, %v1581
        %v2230 = vpack.c.b16 %v1600, %v1582
        %v2231 = vpack.c.b16 %v1601, %v1583
        %v2232 = vpack.c.b16 %v1602, %v1584
        %v2233 = vpack.c.b16 %v1603, %v1585
        %v2234 = vpack.c.b16 %v1604, %v1586
        %v2235 = vpack.c.b16 %v1605, %v1587
        %v2236 = vpack.c.b16 %v1606, %v1588
        %v2237 = vpack.c.b16 %v1607, %v1589
        %v2238 = vpack.c.b16 %v1608, %v1590
        %v2239 = vpack.c.b16 %v1609, %v1591
        %v2240 = vpack.c.b16 %v1610, %v1592
        %v2241 = vpack.c.b16 %v1629, %v1611
        %v2242 = vpack.c.b16 %v1630, %v1612
        %v2243 = vpack.c.b16 %v1631, %v1613
        %v2244 = vpack.c.b16 %v1632, %v1614
        %v2245 = vpack.c.b16 %v1633, %v1615
        %v2246 = vpack.c.b16 %v1634, %v1616
        %v2247 = vpack.c.b16 %v1635, %v1617
        %v2248 = vpack.c.b16 %v1636, %v1618
        %v2249 = vpack.c.b16 %v1637, %v1619
        %v2250 = vpack.c.b16 %v1638, %v1620
        %v2251 = vpack.c.b16 %v1639, %v1621
        %v2252 = vpack.c.b16 %v1640, %v1622
        %v2253 = vpack.c.b16 %v1641, %v1623
        %v2254 = vpack.c.b16 %v1642, %v1624
        %v2255 = vpack.c.b16 %v1643, %v1625
        %v2256 = vpack.c.b16 %v1644, %v1626
        %v2257 = vpack.c.b16 %v1645, %v1627
        %v2258 = vpack.c.b16 %v1646, %v1628
        %v2259 = vpack.c.b16 %v1665, %v1647
        %v2260 = vpack.c.b16 %v1666, %v1648
        %v2261 = vpack.c.b16 %v1667, %v1649
        %v2262 = vpack.c.b16 %v1668, %v1650
        %v2263 = vpack.c.b16 %v1669, %v1651
        %v2264 = vpack.c.b16 %v1670, %v1652
        %v2265 = vpack.c.b16 %v1671, %v1653
        %v2266 = vpack.c.b16 %v1672, %v1654
        %v2267 = vpack.c.b16 %v1673, %v1655
        %v2268 = vpack.c.b16 %v1674, %v1656
        %v2269 = vpack.c.b16 %v1675, %v1657
        %v2270 = vpack.c.b16 %v1676, %v1658
        %v2271 = vpack.c.b16 %v1677, %v1659
        %v2272 = vpack.c.b16 %v1678, %v1660
        %v2273 = vpack.c.b16 %v1679, %v1661
        %v2274 = vpack.c.b16 %v1680, %v1662
        %v2275 = vpack.c.b16 %v1681, %v1663
        %v2276 = vpack.c.b16 %v1682, %v1664
        %v2277 = vpack.c.b16 %v1701, %v1683
        %v2278 = vpack.c.b16 %v1702, %v1684
        %v2279 = vpack.c.b16 %v1703, %v1685
        %v2280 = vpack.c.b16 %v1704, %v1686
        %v2281 = vpack.c.b16 %v1705, %v1687
        %v2282 = vpack.c.b16 %v1706, %v1688
        %v2283 = vpack.c.b16 %v1707, %v1689
        %v2284 = vpack.c.b16 %v1708, %v1690
        %v2285 = vpack.c.b16 %v1709, %v1691
        %v2286 = vpack.c.b16 %v1710, %v1692
        %v2287 = vpack.c.b16 %v1711, %v1693
        %v2288 = vpack.c.b16 %v1712, %v1694
        %v2289 = vpack.c.b16 %v1713, %v1695
        %v2290 = vpack.c.b16 %v1714, %v1696
        %v2291 = vpack.c.b16 %v1715, %v1697
        %v2292 = vpack.c.b16 %v1716, %v1698
        %v2293 = vpack.c.b16 %v1717, %v1699
        %v2294 = vpack.c.b16 %v1718, %v1700
        %v2295 = vpack.c.b16 %v1737, %v1719
        %v2296 = vpack.c.b16 %v1738, %v1720
        %v2297 = vpack.c.b16 %v1739, %v1721
        %v2298 = vpack.c.b16 %v1740, %v1722
        %v2299 = vpack.c.b16 %v1741, %v1723
        %v2300 = vpack.c.b16 %v1742, %v1724
        %v2301 = vpack.c.b16 %v1743, %v1725
        %v2302 = vpack.c.b16 %v1744, %v1726
        %v2303 = vpack.c.b16 %v1745, %v1727
        %v2304 = vpack.c.b16 %v1746, %v1728
        %v2305 = vpack.c.b16 %v1747, %v1729
        %v2306 = vpack.c.b16 %v1748, %v1730
        %v2307 = vpack.c.b16 %v1749, %v1731
        %v2308 = vpack.c.b16 %v1750, %v1732
        %v2309 = vpack.c.b16 %v1751, %v1733
        %v2310 = vpack.c.b16 %v1752, %v1734
        %v2311 = vpack.c.b16 %v1753, %v1735
        %v2312 = vpack.c.b16 %v1754, %v1736
        %v2313 = vpack.c.b16 %v1773, %v1755
        %v2314 = vpack.c.b16 %v1774, %v1756
        %v2315 = vpack.c.b16 %v1775, %v1757
        %v2316 = vpack.c.b16 %v1776, %v1758
        %v2317 = vpack.c.b16 %v1777, %v1759
        %v2318 = vpack.c.b16 %v1778, %v1760
        %v2319 = vpack.c.b16 %v1779, %v1761
        %v2320 = vpack.c.b16 %v1780, %v1762
        %v2321 = vpack.c.b16 %v1781, %v1763
        %v2322 = vpack.c.b16 %v1782, %v1764
        %v2323 = vpack.c.b16 %v1783, %v1765
        %v2324 = vpack.c.b16 %v1784, %v1766
        %v2325 = vpack.c.b16 %v1785, %v1767
        %v2326 = vpack.c.b16 %v1786, %v1768
        %v2327 = vpack.c.b16 %v1787, %v1769
        %v2328 = vpack.c.b16 %v1788, %v1770
        %v2329 = vpack.c.b16 %v1789, %v1771
        %v2330 = vpack.c.b16 %v1790, %v1772
        %v2331 = vpack.c.b16 %v1809, %v1791
        %v2332 = vpack.c.b16 %v1810, %v1792
        %v2333 = vpack.c.b16 %v1811, %v1793
        %v2334 = vpack.c.b16 %v1812, %v1794
        %v2335 = vpack.c.b16 %v1813, %v1795
        %v2336 = vpack.c.b16 %v1814, %v1796
        %v2337 = vpack.c.b16 %v1815, %v1797
        %v2338 = vpack.c.b16 %v1816, %v1798
        %v2339 = vpack.c.b16 %v1817, %v1799
        %v2340 = vpack.c.b16 %v1818, %v1800
        %v2341 = vpack.c.b16 %v1819, %v1801
        %v2342 = vpack.c.b16 %v1820, %v1802
        %v2343 = vpack.c.b16 %v1821, %v1803
        %v2344 = vpack.c.b16 %v1822, %v1804
        %v2345 = vpack.c.b16 %v1823, %v1805
        %v2346 = vpack.c.b16 %v1824, %v1806
        %v2347 = vpack.c.b16 %v1825, %v1807
        %v2348 = vpack.c.b16 %v1826, %v1808
        %v2349 = vpack.c.b16 %v1845, %v1827
        %v2350 = vpack.c.b16 %v1846, %v1828
        %v2351 = vpack.c.b16 %v1847, %v1829
        %v2352 = vpack.c.b16 %v1848, %v1830
        %v2353 = vpack.c.b16 %v1849, %v1831
        %v2354 = vpack.c.b16 %v1850, %v1832
        %v2355 = vpack.c.b16 %v1851, %v1833
        %v2356 = vpack.c.b16 %v1852, %v1834
        %v2357 = vpack.c.b16 %v1853, %v1835
        %v2358 = vpack.c.b16 %v1854, %v1836
        %v2359 = vpack.c.b16 %v1855, %v1837
        %v2360 = vpack.c.b16 %v1856, %v1838
        %v2361 = vpack.c.b16 %v1857, %v1839
        %v2362 = vpack.c.b16 %v1858, %v1840
        %v2363 = vpack.c.b16 %v1859, %v1841
        %v2364 = vpack.c.b16 %v1860, %v1842
        %v2365 = vpack.c.b16 %v1861, %v1843
        %v2366 = vpack.c.b16 %v1862, %v1844
        %v2367 = vpack.c.b16 %v1881, %v1863
        %v2368 = vpack.c.b16 %v1882, %v1864
        %v2369 = vpack.c.b16 %v1883, %v1865
        %v2370 = vpack.c.b16 %v1884, %v1866
        %v2371 = vpack.c.b16 %v1885, %v1867
        %v2372 = vpack.c.b16 %v1886, %v1868
        %v2373 = vpack.c.b16 %v1887, %v1869
        %v2374 = vpack.c.b16 %v1888, %v1870
        %v2375 = vpack.c.b16 %v1889, %v1871
        %v2376 = vpack.c.b16 %v1890, %v1872
        %v2377 = vpack.c.b16 %v1891, %v1873
        %v2378 = vpack.c.b16 %v1892, %v1874
        %v2379 = vpack.c.b16 %v1893, %v1875
        %v2380 = vpack.c.b16 %v1894, %v1876
        %v2381 = vpack.c.b16 %v1895, %v1877
        %v2382 = vpack.c.b16 %v1896, %v1878
        %v2383 = vpack.c.b16 %v1897, %v1879
        %v2384 = vpack.c.b16 %v1898, %v1880
        %v2385 = vpack.c.b16 %v1917, %v1899
        %v2386 = vpack.c.b16 %v1918, %v1900
        %v2387 = vpack.c.b16 %v1919, %v1901
        %v2388 = vpack.c.b16 %v1920, %v1902
        %v2389 = vpack.c.b16 %v1921, %v1903
        %v2390 = vpack.c.b16 %v1922, %v1904
        %v2391 = vpack.c.b16 %v1923, %v1905
        %v2392 = vpack.c.b16 %v1924, %v1906
        %v2393 = vpack.c.b16 %v1925, %v1907
        %v2394 = vpack.c.b16 %v1926, %v1908
        %v2395 = vpack.c.b16 %v1927, %v1909
        %v2396 = vpack.c.b16 %v1928, %v1910
        %v2397 = vpack.c.b16 %v1929, %v1911
        %v2398 = vpack.c.b16 %v1930, %v1912
        %v2399 = vpack.c.b16 %v1931, %v1913
        %v2400 = vpack.c.b16 %v1932, %v1914
        %v2401 = vpack.c.b16 %v1933, %v1915
        %v2402 = vpack.c.b16 %v1934, %v1916
        %v2403 = vpack.c.b16 %v1953, %v1935
        %v2404 = vpack.c.b16 %v1954, %v1936
        %v2405 = vpack.c.b16 %v1955, %v1937
        %v2406 = vpack.c.b16 %v1956, %v1938
        %v2407 = vpack.c.b16 %v1957, %v1939
        %v2408 = vpack.c.b16 %v1958, %v1940
        %v2409 = vpack.c.b16 %v1959, %v1941
        %v2410 = vpack.c.b16 %v1960, %v1942
        %v2411 = vpack.c.b16 %v1961, %v1943
        %v2412 = vpack.c.b16 %v1962, %v1944
        %v2413 = vpack.c.b16 %v1963, %v1945
        %v2414 = vpack.c.b16 %v1964, %v1946
        %v2415 = vpack.c.b16 %v1965, %v1947
        %v2416 = vpack.c.b16 %v1966, %v1948
        %v2417 = vpack.c.b16 %v1967, %v1949
        %v2418 = vpack.c.b16 %v1968, %v1950
        %v2419 = vpack.c.b16 %v1969, %v1951
        %v2420 = vpack.c.b16 %v1970, %v1952
        %v2421 = vpack.c.b16 %v1989, %v1971
        %v2422 = vpack.c.b16 %v1990, %v1972
        %v2423 = vpack.c.b16 %v1991, %v1973
        %v2424 = vpack.c.b16 %v1992, %v1974
        %v2425 = vpack.c.b16 %v1993, %v1975
        %v2426 = vpack.c.b16 %v1994, %v1976
        %v2427 = vpack.c.b16 %v1995, %v1977
        %v2428 = vpack.c.b16 %v1996, %v1978
        %v2429 = vpack.c.b16 %v1997, %v1979
        %v2430 = vpack.c.b16 %v1998, %v1980
        %v2431 = vpack.c.b16 %v1999, %v1981
        %v2432 = vpack.c.b16 %v2000, %v1982
        %v2433 = vpack.c.b16 %v2001, %v1983
        %v2434 = vpack.c.b16 %v2002, %v1984
        %v2435 = vpack.c.b16 %v2003, %v1985
        %v2436 = vpack.c.b16 %v2004, %v1986
        %v2437 = vpack.c.b16 %v2005, %v1987
        %v2438 = vpack.c.b16 %v2006, %v1988
        %2871 = vmatprep.subr.bf16.mxu0 %v2008
        %2872 = vmatpush1.bf16.msra.mxu0 %v2007
        %2873 = vmatprep.subr.bf16.mxu0 %v2026
        %2874 = vmatpush1.bf16.msra.mxu0 %v2025
        %2875 = vmatprep.subr.bf16.mxu0 %v2044
        %2876 = vmatpush1.bf16.msra.mxu0 %v2043
        %2877 = vmatprep.subr.bf16.mxu0 %v2062
        %2878 = vmatpush1.bf16.msra.mxu0 %v2061
        %2879 = vmatprep.subr.bf16.mxu0 %v2080
        %2880 = vmatpush1.bf16.msra.mxu0 %v2079
        %2881 = vmatprep.subr.bf16.mxu0 %v2098
        %2882 = vmatpush1.bf16.msra.mxu0 %v2097
        %2883 = vmatprep.subr.bf16.mxu0 %v2116
        %2884 = vmatpush1.bf16.msra.mxu0 %v2115
        %2885 = vmatprep.subr.bf16.mxu0 %v2134
        %2886 = vmatpush1.bf16.msra.mxu0 %v2133
        %2887 = vmatprep.subr.bf16.mxu0 %v2152
        %2888 = vmatpush1.bf16.msra.mxu0 %v2151
        %2889 = vmatprep.subr.bf16.mxu0 %v2170
        %2890 = vmatpush1.bf16.msra.mxu0 %v2169
        %2891 = vmatprep.subr.bf16.mxu0 %v2188
        %2892 = vmatpush1.bf16.msra.mxu0 %v2187
        %2893 = vmatprep.subr.bf16.mxu0 %v2206
        %2894 = vmatpush1.bf16.msra.mxu0 %v2205
        %2895 = vmatprep.subr.bf16.mxu0 %v2224
        %2896 = vmatpush1.bf16.msra.mxu0 %v2223
        %2897 = vmatprep.subr.bf16.mxu0 %v2242
        %2898 = vmatpush1.bf16.msra.mxu0 %v2241
        %2899 = vmatprep.subr.bf16.mxu0 %v2260
        %2900 = vmatpush1.bf16.msra.mxu0 %v2259
        %2901 = vmatprep.subr.bf16.mxu0 %v2278
        %2902 = vmatpush1.bf16.msra.mxu0 %v2277
        %2903 = vmatprep.mubr.bf16.mxu0 %v706
        %2904 = vmatmul.mubr.bf16.gmra.mrb[0].mxu0 %v705
        %v2905 = vpop.f32.mrb[0].mxu0
        %v2906 = vadd.f32 0.0, %v2905
        %v2907 = vpop.f32.mrb[0].mxu0
        %v2908 = vadd.f32 0.0, %v2907
        %v2909 = vpop.f32.mrb[0].mxu0
        %v2910 = vadd.f32 0.0, %v2909
        %v2911 = vpop.f32.mrb[0].mxu0
        %v2912 = vadd.f32 0.0, %v2911
        %2913 = vdwg.mxu0
        %2914 = vmatprep.subr.bf16.mxu0 %v2296
        %2915 = vmatpush1.bf16.msra.mxu0 %v2295
        %2916 = vmatprep.subr.bf16.mxu0 %v2314
        %2917 = vmatpush1.bf16.msra.mxu0 %v2313
        %2918 = vmatprep.subr.bf16.mxu0 %v2332
        %2919 = vmatpush1.bf16.msra.mxu0 %v2331
        %2920 = vmatprep.subr.bf16.mxu0 %v2350
        %2921 = vmatpush1.bf16.msra.mxu0 %v2349
        %2922 = vmatprep.subr.bf16.mxu0 %v2368
        %2923 = vmatpush1.bf16.msra.mxu0 %v2367
        %2924 = vmatprep.subr.bf16.mxu0 %v2386
        %2925 = vmatpush1.bf16.msra.mxu0 %v2385
        %2926 = vmatprep.subr.bf16.mxu0 %v2404
        %2927 = vmatpush1.bf16.msra.mxu0 %v2403
        %2928 = vmatprep.subr.bf16.mxu0 %v2422
        %2929 = vmatpush1.bf16.msra.mxu0 %v2421
        %2930 = vmatprep.subr.bf16.mxu0 0
        %2931 = vmatpush1.bf16.msra.mxu0 0
        %2932 = vmatprep.subr.bf16.mxu0 0
        %2933 = vmatpush1.bf16.msra.mxu0 0
        %2934 = vmatprep.subr.bf16.mxu0 0
        %2935 = vmatpush1.bf16.msra.mxu0 0
        %2936 = vmatprep.subr.bf16.mxu0 0
        %2937 = vmatpush1.bf16.msra.mxu0 0
        %2938 = vmatprep.subr.bf16.mxu0 0
        %2939 = vmatpush1.bf16.msra.mxu0 0
        %2940 = vmatprep.subr.bf16.mxu0 0
        %2941 = vmatpush1.bf16.msra.mxu0 0
        %2942 = vmatprep.subr.bf16.mxu0 0
        %2943 = vmatpush1.bf16.msra.mxu0 0
        %2944 = vmatprep.subr.bf16.mxu0 0
        %2945 = vmatpush1.bf16.msra.mxu0 0
        %2946 = vmatprep.mubr.bf16.mxu0 0
        %2947 = vmatmul.mubr.bf16.gmra.mrb[0].mxu0 %v707
        %v2948 = vpop.f32.mrb[0].mxu0
        %v2949 = vadd.f32 %v2906, %v2948
        %v2950 = vpop.f32.mrb[0].mxu0
        %v2951 = vadd.f32 %v2908, %v2950
        %v2952 = vpop.f32.mrb[0].mxu0
        %v2953 = vadd.f32 %v2910, %v2952
        %v2954 = vpop.f32.mrb[0].mxu0
        %v2955 = vadd.f32 %v2912, %v2954
        %2956 = vdwg.mxu0
        %2957 = vmatprep.subr.bf16.mxu0 %v2010
        %2958 = vmatpush1.bf16.msra.mxu0 %v2009
        %2959 = vmatprep.subr.bf16.mxu0 %v2028
        %2960 = vmatpush1.bf16.msra.mxu0 %v2027
        %2961 = vmatprep.subr.bf16.mxu0 %v2046
        %2962 = vmatpush1.bf16.msra.mxu0 %v2045
        %2963 = vmatprep.subr.bf16.mxu0 %v2064
        %2964 = vmatpush1.bf16.msra.mxu0 %v2063
        %2965 = vmatprep.subr.bf16.mxu0 %v2082
        %2966 = vmatpush1.bf16.msra.mxu0 %v2081
        %2967 = vmatprep.subr.bf16.mxu0 %v2100
        %2968 = vmatpush1.bf16.msra.mxu0 %v2099
        %2969 = vmatprep.subr.bf16.mxu0 %v2118
        %2970 = vmatpush1.bf16.msra.mxu0 %v2117
        %2971 = vmatprep.subr.bf16.mxu0 %v2136
        %2972 = vmatpush1.bf16.msra.mxu0 %v2135
        %2973 = vmatprep.subr.bf16.mxu0 %v2154
        %2974 = vmatpush1.bf16.msra.mxu0 %v2153
        %2975 = vmatprep.subr.bf16.mxu0 %v2172
        %2976 = vmatpush1.bf16.msra.mxu0 %v2171
        %2977 = vmatprep.subr.bf16.mxu0 %v2190
        %2978 = vmatpush1.bf16.msra.mxu0 %v2189
        %2979 = vmatprep.subr.bf16.mxu0 %v2208
        %2980 = vmatpush1.bf16.msra.mxu0 %v2207
        %2981 = vmatprep.subr.bf16.mxu0 %v2226
        %2982 = vmatpush1.bf16.msra.mxu0 %v2225
        %2983 = vmatprep.subr.bf16.mxu0 %v2244
        %2984 = vmatpush1.bf16.msra.mxu0 %v2243
        %2985 = vmatprep.subr.bf16.mxu0 %v2262
        %2986 = vmatpush1.bf16.msra.mxu0 %v2261
        %2987 = vmatprep.subr.bf16.mxu0 %v2280
        %2988 = vmatpush1.bf16.msra.mxu0 %v2279
        %2989 = vmatprep.mubr.bf16.mxu0 %v706
        %2990 = vmatmul.mubr.bf16.gmra.mrb[0].mxu0 %v705
        %v2991 = vpop.f32.mrb[0].mxu0
        %v2992 = vadd.f32 0.0, %v2991
        %v2993 = vpop.f32.mrb[0].mxu0
        %v2994 = vadd.f32 0.0, %v2993
        %v2995 = vpop.f32.mrb[0].mxu0
        %v2996 = vadd.f32 0.0, %v2995
        %v2997 = vpop.f32.mrb[0].mxu0
        %v2998 = vadd.f32 0.0, %v2997
        %2999 = vdwg.mxu0
        %3000 = vmatprep.subr.bf16.mxu0 %v2298
        %3001 = vmatpush1.bf16.msra.mxu0 %v2297
        %3002 = vmatprep.subr.bf16.mxu0 %v2316
        %3003 = vmatpush1.bf16.msra.mxu0 %v2315
        %3004 = vmatprep.subr.bf16.mxu0 %v2334
        %3005 = vmatpush1.bf16.msra.mxu0 %v2333
        %3006 = vmatprep.subr.bf16.mxu0 %v2352
        %3007 = vmatpush1.bf16.msra.mxu0 %v2351
        %3008 = vmatprep.subr.bf16.mxu0 %v2370
        %3009 = vmatpush1.bf16.msra.mxu0 %v2369
        %3010 = vmatprep.subr.bf16.mxu0 %v2388
        %3011 = vmatpush1.bf16.msra.mxu0 %v2387
        %3012 = vmatprep.subr.bf16.mxu0 %v2406
        %3013 = vmatpush1.bf16.msra.mxu0 %v2405
        %3014 = vmatprep.subr.bf16.mxu0 %v2424
        %3015 = vmatpush1.bf16.msra.mxu0 %v2423
        %3016 = vmatprep.subr.bf16.mxu0 0
        %3017 = vmatpush1.bf16.msra.mxu0 0
        %3018 = vmatprep.subr.bf16.mxu0 0
        %3019 = vmatpush1.bf16.msra.mxu0 0
        %3020 = vmatprep.subr.bf16.mxu0 0
        %3021 = vmatpush1.bf16.msra.mxu0 0
        %3022 = vmatprep.subr.bf16.mxu0 0
        %3023 = vmatpush1.bf16.msra.mxu0 0
        %3024 = vmatprep.subr.bf16.mxu0 0
        %3025 = vmatpush1.bf16.msra.mxu0 0
        %3026 = vmatprep.subr.bf16.mxu0 0
        %3027 = vmatpush1.bf16.msra.mxu0 0
        %3028 = vmatprep.subr.bf16.mxu0 0
        %3029 = vmatpush1.bf16.msra.mxu0 0
        %3030 = vmatprep.subr.bf16.mxu0 0
        %3031 = vmatpush1.bf16.msra.mxu0 0
        %3032 = vmatprep.mubr.bf16.mxu0 0
        %3033 = vmatmul.mubr.bf16.gmra.mrb[0].mxu0 %v707
        %v3034 = vpop.f32.mrb[0].mxu0
        %v3035 = vadd.f32 %v2992, %v3034
        %v3036 = vpop.f32.mrb[0].mxu0
        %v3037 = vadd.f32 %v2994, %v3036
        %v3038 = vpop.f32.mrb[0].mxu0
        %v3039 = vadd.f32 %v2996, %v3038
        %v3040 = vpop.f32.mrb[0].mxu0
        %v3041 = vadd.f32 %v2998, %v3040
        %3042 = vdwg.mxu0
        %3043 = vmatprep.subr.bf16.mxu0 %v2012
        %3044 = vmatpush1.bf16.msra.mxu0 %v2011
        %3045 = vmatprep.subr.bf16.mxu0 %v2030
        %3046 = vmatpush1.bf16.msra.mxu0 %v2029
        %3047 = vmatprep.subr.bf16.mxu0 %v2048
        %3048 = vmatpush1.bf16.msra.mxu0 %v2047
        %3049 = vmatprep.subr.bf16.mxu0 %v2066
        %3050 = vmatpush1.bf16.msra.mxu0 %v2065
        %3051 = vmatprep.subr.bf16.mxu0 %v2084
        %3052 = vmatpush1.bf16.msra.mxu0 %v2083
        %3053 = vmatprep.subr.bf16.mxu0 %v2102
        %3054 = vmatpush1.bf16.msra.mxu0 %v2101
        %3055 = vmatprep.subr.bf16.mxu0 %v2120
        %3056 = vmatpush1.bf16.msra.mxu0 %v2119
        %3057 = vmatprep.subr.bf16.mxu0 %v2138
        %3058 = vmatpush1.bf16.msra.mxu0 %v2137
        %3059 = vmatprep.subr.bf16.mxu0 %v2156
        %3060 = vmatpush1.bf16.msra.mxu0 %v2155
        %3061 = vmatprep.subr.bf16.mxu0 %v2174
        %3062 = vmatpush1.bf16.msra.mxu0 %v2173
        %3063 = vmatprep.subr.bf16.mxu0 %v2192
        %3064 = vmatpush1.bf16.msra.mxu0 %v2191
        %3065 = vmatprep.subr.bf16.mxu0 %v2210
        %3066 = vmatpush1.bf16.msra.mxu0 %v2209
        %3067 = vmatprep.subr.bf16.mxu0 %v2228
        %3068 = vmatpush1.bf16.msra.mxu0 %v2227
        %3069 = vmatprep.subr.bf16.mxu0 %v2246
        %3070 = vmatpush1.bf16.msra.mxu0 %v2245
        %3071 = vmatprep.subr.bf16.mxu0 %v2264
        %3072 = vmatpush1.bf16.msra.mxu0 %v2263
        %3073 = vmatprep.subr.bf16.mxu0 %v2282
        %3074 = vmatpush1.bf16.msra.mxu0 %v2281
        %3075 = vmatprep.mubr.bf16.mxu0 %v706
        %3076 = vmatmul.mubr.bf16.gmra.mrb[0].mxu0 %v705
        %v3077 = vpop.f32.mrb[0].mxu0
        %v3078 = vadd.f32 0.0, %v3077
        %v3079 = vpop.f32.mrb[0].mxu0
        %v3080 = vadd.f32 0.0, %v3079
        %v3081 = vpop.f32.mrb[0].mxu0
        %v3082 = vadd.f32 0.0, %v3081
        %v3083 = vpop.f32.mrb[0].mxu0
        %v3084 = vadd.f32 0.0, %v3083
        %3085 = vdwg.mxu0
        %3086 = vmatprep.subr.bf16.mxu0 %v2300
        %3087 = vmatpush1.bf16.msra.mxu0 %v2299
        %3088 = vmatprep.subr.bf16.mxu0 %v2318
        %3089 = vmatpush1.bf16.msra.mxu0 %v2317
        %3090 = vmatprep.subr.bf16.mxu0 %v2336
        %3091 = vmatpush1.bf16.msra.mxu0 %v2335
        %3092 = vmatprep.subr.bf16.mxu0 %v2354
        %3093 = vmatpush1.bf16.msra.mxu0 %v2353
        %3094 = vmatprep.subr.bf16.mxu0 %v2372
        %3095 = vmatpush1.bf16.msra.mxu0 %v2371
        %3096 = vmatprep.subr.bf16.mxu0 %v2390
        %3097 = vmatpush1.bf16.msra.mxu0 %v2389
        %3098 = vmatprep.subr.bf16.mxu0 %v2408
        %3099 = vmatpush1.bf16.msra.mxu0 %v2407
        %3100 = vmatprep.subr.bf16.mxu0 %v2426
        %3101 = vmatpush1.bf16.msra.mxu0 %v2425
        %3102 = vmatprep.subr.bf16.mxu0 0
        %3103 = vmatpush1.bf16.msra.mxu0 0
        %3104 = vmatprep.subr.bf16.mxu0 0
        %3105 = vmatpush1.bf16.msra.mxu0 0
        %3106 = vmatprep.subr.bf16.mxu0 0
        %3107 = vmatpush1.bf16.msra.mxu0 0
        %3108 = vmatprep.subr.bf16.mxu0 0
        %3109 = vmatpush1.bf16.msra.mxu0 0
        %3110 = vmatprep.subr.bf16.mxu0 0
        %3111 = vmatpush1.bf16.msra.mxu0 0
        %3112 = vmatprep.subr.bf16.mxu0 0
        %3113 = vmatpush1.bf16.msra.mxu0 0
        %3114 = vmatprep.subr.bf16.mxu0 0
        %3115 = vmatpush1.bf16.msra.mxu0 0
        %3116 = vmatprep.subr.bf16.mxu0 0
        %3117 = vmatpush1.bf16.msra.mxu0 0
        %3118 = vmatprep.mubr.bf16.mxu0 0
        %3119 = vmatmul.mubr.bf16.gmra.mrb[0].mxu0 %v707
        %v3120 = vpop.f32.mrb[0].mxu0
        %v3121 = vadd.f32 %v3078, %v3120
        %v3122 = vpop.f32.mrb[0].mxu0
        %v3123 = vadd.f32 %v3080, %v3122
        %v3124 = vpop.f32.mrb[0].mxu0
        %v3125 = vadd.f32 %v3082, %v3124
        %v3126 = vpop.f32.mrb[0].mxu0
        %v3127 = vadd.f32 %v3084, %v3126
        %3128 = vdwg.mxu0
        %3129 = vmatprep.subr.bf16.mxu0 %v2014
        %3130 = vmatpush1.bf16.msra.mxu0 %v2013
        %3131 = vmatprep.subr.bf16.mxu0 %v2032
        %3132 = vmatpush1.bf16.msra.mxu0 %v2031
        %3133 = vmatprep.subr.bf16.mxu0 %v2050
        %3134 = vmatpush1.bf16.msra.mxu0 %v2049
        %3135 = vmatprep.subr.bf16.mxu0 %v2068
        %3136 = vmatpush1.bf16.msra.mxu0 %v2067
        %3137 = vmatprep.subr.bf16.mxu0 %v2086
        %3138 = vmatpush1.bf16.msra.mxu0 %v2085
        %3139 = vmatprep.subr.bf16.mxu0 %v2104
        %3140 = vmatpush1.bf16.msra.mxu0 %v2103
        %3141 = vmatprep.subr.bf16.mxu0 %v2122
        %3142 = vmatpush1.bf16.msra.mxu0 %v2121
        %3143 = vmatprep.subr.bf16.mxu0 %v2140
        %3144 = vmatpush1.bf16.msra.mxu0 %v2139
        %3145 = vmatprep.subr.bf16.mxu0 %v2158
        %3146 = vmatpush1.bf16.msra.mxu0 %v2157
        %3147 = vmatprep.subr.bf16.mxu0 %v2176
        %3148 = vmatpush1.bf16.msra.mxu0 %v2175
        %3149 = vmatprep.subr.bf16.mxu0 %v2194
        %3150 = vmatpush1.bf16.msra.mxu0 %v2193
        %3151 = vmatprep.subr.bf16.mxu0 %v2212
        %3152 = vmatpush1.bf16.msra.mxu0 %v2211
        %3153 = vmatprep.subr.bf16.mxu0 %v2230
        %3154 = vmatpush1.bf16.msra.mxu0 %v2229
        %3155 = vmatprep.subr.bf16.mxu0 %v2248
        %3156 = vmatpush1.bf16.msra.mxu0 %v2247
        %3157 = vmatprep.subr.bf16.mxu0 %v2266
        %3158 = vmatpush1.bf16.msra.mxu0 %v2265
        %3159 = vmatprep.subr.bf16.mxu0 %v2284
        %3160 = vmatpush1.bf16.msra.mxu0 %v2283
        %3161 = vmatprep.mubr.bf16.mxu0 %v706
        %3162 = vmatmul.mubr.bf16.gmra.mrb[0].mxu0 %v705
        %v3163 = vpop.f32.mrb[0].mxu0
        %v3164 = vadd.f32 0.0, %v3163
        %v3165 = vpop.f32.mrb[0].mxu0
        %v3166 = vadd.f32 0.0, %v3165
        %v3167 = vpop.f32.mrb[0].mxu0
        %v3168 = vadd.f32 0.0, %v3167
        %v3169 = vpop.f32.mrb[0].mxu0
        %v3170 = vadd.f32 0.0, %v3169
        %3171 = vdwg.mxu0
        %3172 = vmatprep.subr.bf16.mxu0 %v2302
        %3173 = vmatpush1.bf16.msra.mxu0 %v2301
        %3174 = vmatprep.subr.bf16.mxu0 %v2320
        %3175 = vmatpush1.bf16.msra.mxu0 %v2319
        %3176 = vmatprep.subr.bf16.mxu0 %v2338
        %3177 = vmatpush1.bf16.msra.mxu0 %v2337
        %3178 = vmatprep.subr.bf16.mxu0 %v2356
        %3179 = vmatpush1.bf16.msra.mxu0 %v2355
        %3180 = vmatprep.subr.bf16.mxu0 %v2374
        %3181 = vmatpush1.bf16.msra.mxu0 %v2373
        %3182 = vmatprep.subr.bf16.mxu0 %v2392
        %3183 = vmatpush1.bf16.msra.mxu0 %v2391
        %3184 = vmatprep.subr.bf16.mxu0 %v2410
        %3185 = vmatpush1.bf16.msra.mxu0 %v2409
        %3186 = vmatprep.subr.bf16.mxu0 %v2428
        %3187 = vmatpush1.bf16.msra.mxu0 %v2427
        %3188 = vmatprep.subr.bf16.mxu0 0
        %3189 = vmatpush1.bf16.msra.mxu0 0
        %3190 = vmatprep.subr.bf16.mxu0 0
        %3191 = vmatpush1.bf16.msra.mxu0 0
        %3192 = vmatprep.subr.bf16.mxu0 0
        %3193 = vmatpush1.bf16.msra.mxu0 0
        %3194 = vmatprep.subr.bf16.mxu0 0
        %3195 = vmatpush1.bf16.msra.mxu0 0
        %3196 = vmatprep.subr.bf16.mxu0 0
        %3197 = vmatpush1.bf16.msra.mxu0 0
        %3198 = vmatprep.subr.bf16.mxu0 0
        %3199 = vmatpush1.bf16.msra.mxu0 0
        %3200 = vmatprep.subr.bf16.mxu0 0
        %3201 = vmatpush1.bf16.msra.mxu0 0
        %3202 = vmatprep.subr.bf16.mxu0 0
        %3203 = vmatpush1.bf16.msra.mxu0 0
        %3204 = vmatprep.mubr.bf16.mxu0 0
        %3205 = vmatmul.mubr.bf16.gmra.mrb[0].mxu0 %v707
        %v3206 = vpop.f32.mrb[0].mxu0
        %v3207 = vadd.f32 %v3164, %v3206
        %v3208 = vpop.f32.mrb[0].mxu0
        %v3209 = vadd.f32 %v3166, %v3208
        %v3210 = vpop.f32.mrb[0].mxu0
        %v3211 = vadd.f32 %v3168, %v3210
        %v3212 = vpop.f32.mrb[0].mxu0
        %v3213 = vadd.f32 %v3170, %v3212
        %3214 = vdwg.mxu0
        %3215 = vmatprep.subr.bf16.mxu0 %v2016
        %3216 = vmatpush1.bf16.msra.mxu0 %v2015
        %3217 = vmatprep.subr.bf16.mxu0 %v2034
        %3218 = vmatpush1.bf16.msra.mxu0 %v2033
        %3219 = vmatprep.subr.bf16.mxu0 %v2052
        %3220 = vmatpush1.bf16.msra.mxu0 %v2051
        %3221 = vmatprep.subr.bf16.mxu0 %v2070
        %3222 = vmatpush1.bf16.msra.mxu0 %v2069
        %3223 = vmatprep.subr.bf16.mxu0 %v2088
        %3224 = vmatpush1.bf16.msra.mxu0 %v2087
        %3225 = vmatprep.subr.bf16.mxu0 %v2106
        %3226 = vmatpush1.bf16.msra.mxu0 %v2105
        %3227 = vmatprep.subr.bf16.mxu0 %v2124
        %3228 = vmatpush1.bf16.msra.mxu0 %v2123
        %3229 = vmatprep.subr.bf16.mxu0 %v2142
        %3230 = vmatpush1.bf16.msra.mxu0 %v2141
        %3231 = vmatprep.subr.bf16.mxu0 %v2160
        %3232 = vmatpush1.bf16.msra.mxu0 %v2159
        %3233 = vmatprep.subr.bf16.mxu0 %v2178
        %3234 = vmatpush1.bf16.msra.mxu0 %v2177
        %3235 = vmatprep.subr.bf16.mxu0 %v2196
        %3236 = vmatpush1.bf16.msra.mxu0 %v2195
        %3237 = vmatprep.subr.bf16.mxu0 %v2214
        %3238 = vmatpush1.bf16.msra.mxu0 %v2213
        %3239 = vmatprep.subr.bf16.mxu0 %v2232
        %3240 = vmatpush1.bf16.msra.mxu0 %v2231
        %3241 = vmatprep.subr.bf16.mxu0 %v2250
        %3242 = vmatpush1.bf16.msra.mxu0 %v2249
        %3243 = vmatprep.subr.bf16.mxu0 %v2268
        %3244 = vmatpush1.bf16.msra.mxu0 %v2267
        %3245 = vmatprep.subr.bf16.mxu0 %v2286
        %3246 = vmatpush1.bf16.msra.mxu0 %v2285
        %3247 = vmatprep.mubr.bf16.mxu0 %v706
        %3248 = vmatmul.mubr.bf16.gmra.mrb[0].mxu0 %v705
        %v3249 = vpop.f32.mrb[0].mxu0
        %v3250 = vadd.f32 0.0, %v3249
        %v3251 = vpop.f32.mrb[0].mxu0
        %v3252 = vadd.f32 0.0, %v3251
        %v3253 = vpop.f32.mrb[0].mxu0
        %v3254 = vadd.f32 0.0, %v3253
        %v3255 = vpop.f32.mrb[0].mxu0
        %v3256 = vadd.f32 0.0, %v3255
        %3257 = vdwg.mxu0
        %3258 = vmatprep.subr.bf16.mxu0 %v2304
        %3259 = vmatpush1.bf16.msra.mxu0 %v2303
        %3260 = vmatprep.subr.bf16.mxu0 %v2322
        %3261 = vmatpush1.bf16.msra.mxu0 %v2321
        %3262 = vmatprep.subr.bf16.mxu0 %v2340
        %3263 = vmatpush1.bf16.msra.mxu0 %v2339
        %3264 = vmatprep.subr.bf16.mxu0 %v2358
        %3265 = vmatpush1.bf16.msra.mxu0 %v2357
        %3266 = vmatprep.subr.bf16.mxu0 %v2376
        %3267 = vmatpush1.bf16.msra.mxu0 %v2375
        %3268 = vmatprep.subr.bf16.mxu0 %v2394
        %3269 = vmatpush1.bf16.msra.mxu0 %v2393
        %3270 = vmatprep.subr.bf16.mxu0 %v2412
        %3271 = vmatpush1.bf16.msra.mxu0 %v2411
        %3272 = vmatprep.subr.bf16.mxu0 %v2430
        %3273 = vmatpush1.bf16.msra.mxu0 %v2429
        %3274 = vmatprep.subr.bf16.mxu0 0
        %3275 = vmatpush1.bf16.msra.mxu0 0
        %3276 = vmatprep.subr.bf16.mxu0 0
        %3277 = vmatpush1.bf16.msra.mxu0 0
        %3278 = vmatprep.subr.bf16.mxu0 0
        %3279 = vmatpush1.bf16.msra.mxu0 0
        %3280 = vmatprep.subr.bf16.mxu0 0
        %3281 = vmatpush1.bf16.msra.mxu0 0
        %3282 = vmatprep.subr.bf16.mxu0 0
        %3283 = vmatpush1.bf16.msra.mxu0 0
        %3284 = vmatprep.subr.bf16.mxu0 0
        %3285 = vmatpush1.bf16.msra.mxu0 0
        %3286 = vmatprep.subr.bf16.mxu0 0
        %3287 = vmatpush1.bf16.msra.mxu0 0
        %3288 = vmatprep.subr.bf16.mxu0 0
        %3289 = vmatpush1.bf16.msra.mxu0 0
        %3290 = vmatprep.mubr.bf16.mxu0 0
        %3291 = vmatmul.mubr.bf16.gmra.mrb[0].mxu0 %v707
        %v3292 = vpop.f32.mrb[0].mxu0
        %v3293 = vadd.f32 %v3250, %v3292
        %v3294 = vpop.f32.mrb[0].mxu0
        %v3295 = vadd.f32 %v3252, %v3294
        %v3296 = vpop.f32.mrb[0].mxu0
        %v3297 = vadd.f32 %v3254, %v3296
        %v3298 = vpop.f32.mrb[0].mxu0
        %v3299 = vadd.f32 %v3256, %v3298
        %3300 = vdwg.mxu0
        %3301 = vmatprep.subr.bf16.mxu0 %v2018
        %3302 = vmatpush1.bf16.msra.mxu0 %v2017
        %3303 = vmatprep.subr.bf16.mxu0 %v2036
        %3304 = vmatpush1.bf16.msra.mxu0 %v2035
        %3305 = vmatprep.subr.bf16.mxu0 %v2054
        %3306 = vmatpush1.bf16.msra.mxu0 %v2053
        %3307 = vmatprep.subr.bf16.mxu0 %v2072
        %3308 = vmatpush1.bf16.msra.mxu0 %v2071
        %3309 = vmatprep.subr.bf16.mxu0 %v2090
        %3310 = vmatpush1.bf16.msra.mxu0 %v2089
        %3311 = vmatprep.subr.bf16.mxu0 %v2108
        %3312 = vmatpush1.bf16.msra.mxu0 %v2107
        %3313 = vmatprep.subr.bf16.mxu0 %v2126
        %3314 = vmatpush1.bf16.msra.mxu0 %v2125
        %3315 = vmatprep.subr.bf16.mxu0 %v2144
        %3316 = vmatpush1.bf16.msra.mxu0 %v2143
        %3317 = vmatprep.subr.bf16.mxu0 %v2162
        %3318 = vmatpush1.bf16.msra.mxu0 %v2161
        %3319 = vmatprep.subr.bf16.mxu0 %v2180
        %3320 = vmatpush1.bf16.msra.mxu0 %v2179
        %3321 = vmatprep.subr.bf16.mxu0 %v2198
        %3322 = vmatpush1.bf16.msra.mxu0 %v2197
        %3323 = vmatprep.subr.bf16.mxu0 %v2216
        %3324 = vmatpush1.bf16.msra.mxu0 %v2215
        %3325 = vmatprep.subr.bf16.mxu0 %v2234
        %3326 = vmatpush1.bf16.msra.mxu0 %v2233
        %3327 = vmatprep.subr.bf16.mxu0 %v2252
        %3328 = vmatpush1.bf16.msra.mxu0 %v2251
        %3329 = vmatprep.subr.bf16.mxu0 %v2270
        %3330 = vmatpush1.bf16.msra.mxu0 %v2269
        %3331 = vmatprep.subr.bf16.mxu0 %v2288
        %3332 = vmatpush1.bf16.msra.mxu0 %v2287
        %3333 = vmatprep.mubr.bf16.mxu0 %v706
        %3334 = vmatmul.mubr.bf16.gmra.mrb[0].mxu0 %v705
        %v3335 = vpop.f32.mrb[0].mxu0
        %v3336 = vadd.f32 0.0, %v3335
        %v3337 = vpop.f32.mrb[0].mxu0
        %v3338 = vadd.f32 0.0, %v3337
        %v3339 = vpop.f32.mrb[0].mxu0
        %v3340 = vadd.f32 0.0, %v3339
        %v3341 = vpop.f32.mrb[0].mxu0
        %v3342 = vadd.f32 0.0, %v3341
        %3343 = vdwg.mxu0
        %3344 = vmatprep.subr.bf16.mxu0 %v2306
        %3345 = vmatpush1.bf16.msra.mxu0 %v2305
        %3346 = vmatprep.subr.bf16.mxu0 %v2324
        %3347 = vmatpush1.bf16.msra.mxu0 %v2323
        %3348 = vmatprep.subr.bf16.mxu0 %v2342
        %3349 = vmatpush1.bf16.msra.mxu0 %v2341
        %3350 = vmatprep.subr.bf16.mxu0 %v2360
        %3351 = vmatpush1.bf16.msra.mxu0 %v2359
        %3352 = vmatprep.subr.bf16.mxu0 %v2378
        %3353 = vmatpush1.bf16.msra.mxu0 %v2377
        %3354 = vmatprep.subr.bf16.mxu0 %v2396
        %3355 = vmatpush1.bf16.msra.mxu0 %v2395
        %3356 = vmatprep.subr.bf16.mxu0 %v2414
        %3357 = vmatpush1.bf16.msra.mxu0 %v2413
        %3358 = vmatprep.subr.bf16.mxu0 %v2432
        %3359 = vmatpush1.bf16.msra.mxu0 %v2431
        %3360 = vmatprep.subr.bf16.mxu0 0
        %3361 = vmatpush1.bf16.msra.mxu0 0
        %3362 = vmatprep.subr.bf16.mxu0 0
        %3363 = vmatpush1.bf16.msra.mxu0 0
        %3364 = vmatprep.subr.bf16.mxu0 0
        %3365 = vmatpush1.bf16.msra.mxu0 0
        %3366 = vmatprep.subr.bf16.mxu0 0
        %3367 = vmatpush1.bf16.msra.mxu0 0
        %3368 = vmatprep.subr.bf16.mxu0 0
        %3369 = vmatpush1.bf16.msra.mxu0 0
        %3370 = vmatprep.subr.bf16.mxu0 0
        %3371 = vmatpush1.bf16.msra.mxu0 0
        %3372 = vmatprep.subr.bf16.mxu0 0
        %3373 = vmatpush1.bf16.msra.mxu0 0
        %3374 = vmatprep.subr.bf16.mxu0 0
        %3375 = vmatpush1.bf16.msra.mxu0 0
        %3376 = vmatprep.mubr.bf16.mxu0 0
        %3377 = vmatmul.mubr.bf16.gmra.mrb[0].mxu0 %v707
        %v3378 = vpop.f32.mrb[0].mxu0
        %v3379 = vadd.f32 %v3336, %v3378
        %v3380 = vpop.f32.mrb[0].mxu0
        %v3381 = vadd.f32 %v3338, %v3380
        %v3382 = vpop.f32.mrb[0].mxu0
        %v3383 = vadd.f32 %v3340, %v3382
        %v3384 = vpop.f32.mrb[0].mxu0
        %v3385 = vadd.f32 %v3342, %v3384
        %3386 = vdwg.mxu0
        %3387 = vmatprep.subr.bf16.mxu0 %v2020
        %3388 = vmatpush1.bf16.msra.mxu0 %v2019
        %3389 = vmatprep.subr.bf16.mxu0 %v2038
        %3390 = vmatpush1.bf16.msra.mxu0 %v2037
        %3391 = vmatprep.subr.bf16.mxu0 %v2056
        %3392 = vmatpush1.bf16.msra.mxu0 %v2055
        %3393 = vmatprep.subr.bf16.mxu0 %v2074
        %3394 = vmatpush1.bf16.msra.mxu0 %v2073
        %3395 = vmatprep.subr.bf16.mxu0 %v2092
        %3396 = vmatpush1.bf16.msra.mxu0 %v2091
        %3397 = vmatprep.subr.bf16.mxu0 %v2110
        %3398 = vmatpush1.bf16.msra.mxu0 %v2109
        %3399 = vmatprep.subr.bf16.mxu0 %v2128
        %3400 = vmatpush1.bf16.msra.mxu0 %v2127
        %3401 = vmatprep.subr.bf16.mxu0 %v2146
        %3402 = vmatpush1.bf16.msra.mxu0 %v2145
        %3403 = vmatprep.subr.bf16.mxu0 %v2164
        %3404 = vmatpush1.bf16.msra.mxu0 %v2163
        %3405 = vmatprep.subr.bf16.mxu0 %v2182
        %3406 = vmatpush1.bf16.msra.mxu0 %v2181
        %3407 = vmatprep.subr.bf16.mxu0 %v2200
        %3408 = vmatpush1.bf16.msra.mxu0 %v2199
        %3409 = vmatprep.subr.bf16.mxu0 %v2218
        %3410 = vmatpush1.bf16.msra.mxu0 %v2217
        %3411 = vmatprep.subr.bf16.mxu0 %v2236
        %3412 = vmatpush1.bf16.msra.mxu0 %v2235
        %3413 = vmatprep.subr.bf16.mxu0 %v2254
        %3414 = vmatpush1.bf16.msra.mxu0 %v2253
        %3415 = vmatprep.subr.bf16.mxu0 %v2272
        %3416 = vmatpush1.bf16.msra.mxu0 %v2271
        %3417 = vmatprep.subr.bf16.mxu0 %v2290
        %3418 = vmatpush1.bf16.msra.mxu0 %v2289
        %3419 = vmatprep.mubr.bf16.mxu0 %v706
        %3420 = vmatmul.mubr.bf16.gmra.mrb[0].mxu0 %v705
        %v3421 = vpop.f32.mrb[0].mxu0
        %v3422 = vadd.f32 0.0, %v3421
        %v3423 = vpop.f32.mrb[0].mxu0
        %v3424 = vadd.f32 0.0, %v3423
        %v3425 = vpop.f32.mrb[0].mxu0
        %v3426 = vadd.f32 0.0, %v3425
        %v3427 = vpop.f32.mrb[0].mxu0
        %v3428 = vadd.f32 0.0, %v3427
        %3429 = vdwg.mxu0
        %3430 = vmatprep.subr.bf16.mxu0 %v2308
        %3431 = vmatpush1.bf16.msra.mxu0 %v2307
        %3432 = vmatprep.subr.bf16.mxu0 %v2326
        %3433 = vmatpush1.bf16.msra.mxu0 %v2325
        %3434 = vmatprep.subr.bf16.mxu0 %v2344
        %3435 = vmatpush1.bf16.msra.mxu0 %v2343
        %3436 = vmatprep.subr.bf16.mxu0 %v2362
        %3437 = vmatpush1.bf16.msra.mxu0 %v2361
        %3438 = vmatprep.subr.bf16.mxu0 %v2380
        %3439 = vmatpush1.bf16.msra.mxu0 %v2379
        %3440 = vmatprep.subr.bf16.mxu0 %v2398
        %3441 = vmatpush1.bf16.msra.mxu0 %v2397
        %3442 = vmatprep.subr.bf16.mxu0 %v2416
        %3443 = vmatpush1.bf16.msra.mxu0 %v2415
        %3444 = vmatprep.subr.bf16.mxu0 %v2434
        %3445 = vmatpush1.bf16.msra.mxu0 %v2433
        %3446 = vmatprep.subr.bf16.mxu0 0
        %3447 = vmatpush1.bf16.msra.mxu0 0
        %3448 = vmatprep.subr.bf16.mxu0 0
        %3449 = vmatpush1.bf16.msra.mxu0 0
        %3450 = vmatprep.subr.bf16.mxu0 0
        %3451 = vmatpush1.bf16.msra.mxu0 0
        %3452 = vmatprep.subr.bf16.mxu0 0
        %3453 = vmatpush1.bf16.msra.mxu0 0
        %3454 = vmatprep.subr.bf16.mxu0 0
        %3455 = vmatpush1.bf16.msra.mxu0 0
        %3456 = vmatprep.subr.bf16.mxu0 0
        %3457 = vmatpush1.bf16.msra.mxu0 0
        %3458 = vmatprep.subr.bf16.mxu0 0
        %3459 = vmatpush1.bf16.msra.mxu0 0
        %3460 = vmatprep.subr.bf16.mxu0 0
        %3461 = vmatpush1.bf16.msra.mxu0 0
        %3462 = vmatprep.mubr.bf16.mxu0 0
        %3463 = vmatmul.mubr.bf16.gmra.mrb[0].mxu0 %v707
        %v3464 = vpop.f32.mrb[0].mxu0
        %v3465 = vadd.f32 %v3422, %v3464
        %v3466 = vpop.f32.mrb[0].mxu0
        %v3467 = vadd.f32 %v3424, %v3466
        %v3468 = vpop.f32.mrb[0].mxu0
        %v3469 = vadd.f32 %v3426, %v3468
        %v3470 = vpop.f32.mrb[0].mxu0
        %v3471 = vadd.f32 %v3428, %v3470
        %3472 = vdwg.mxu0
        %3473 = vmatprep.subr.bf16.mxu0 %v2022
        %3474 = vmatpush1.bf16.msra.mxu0 %v2021
        %3475 = vmatprep.subr.bf16.mxu0 %v2040
        %3476 = vmatpush1.bf16.msra.mxu0 %v2039
        %3477 = vmatprep.subr.bf16.mxu0 %v2058
        %3478 = vmatpush1.bf16.msra.mxu0 %v2057
        %3479 = vmatprep.subr.bf16.mxu0 %v2076
        %3480 = vmatpush1.bf16.msra.mxu0 %v2075
        %3481 = vmatprep.subr.bf16.mxu0 %v2094
        %3482 = vmatpush1.bf16.msra.mxu0 %v2093
        %3483 = vmatprep.subr.bf16.mxu0 %v2112
        %3484 = vmatpush1.bf16.msra.mxu0 %v2111
        %3485 = vmatprep.subr.bf16.mxu0 %v2130
        %3486 = vmatpush1.bf16.msra.mxu0 %v2129
        %3487 = vmatprep.subr.bf16.mxu0 %v2148
        %3488 = vmatpush1.bf16.msra.mxu0 %v2147
        %3489 = vmatprep.subr.bf16.mxu0 %v2166
        %3490 = vmatpush1.bf16.msra.mxu0 %v2165
        %3491 = vmatprep.subr.bf16.mxu0 %v2184
        %3492 = vmatpush1.bf16.msra.mxu0 %v2183
        %3493 = vmatprep.subr.bf16.mxu0 %v2202
        %3494 = vmatpush1.bf16.msra.mxu0 %v2201
        %3495 = vmatprep.subr.bf16.mxu0 %v2220
        %3496 = vmatpush1.bf16.msra.mxu0 %v2219
        %3497 = vmatprep.subr.bf16.mxu0 %v2238
        %3498 = vmatpush1.bf16.msra.mxu0 %v2237
        %3499 = vmatprep.subr.bf16.mxu0 %v2256
        %3500 = vmatpush1.bf16.msra.mxu0 %v2255
        %3501 = vmatprep.subr.bf16.mxu0 %v2274
        %3502 = vmatpush1.bf16.msra.mxu0 %v2273
        %3503 = vmatprep.subr.bf16.mxu0 %v2292
        %3504 = vmatpush1.bf16.msra.mxu0 %v2291
        %3505 = vmatprep.mubr.bf16.mxu0 %v706
        %3506 = vmatmul.mubr.bf16.gmra.mrb[0].mxu0 %v705
        %v3507 = vpop.f32.mrb[0].mxu0
        %v3508 = vadd.f32 0.0, %v3507
        %v3509 = vpop.f32.mrb[0].mxu0
        %v3510 = vadd.f32 0.0, %v3509
        %v3511 = vpop.f32.mrb[0].mxu0
        %v3512 = vadd.f32 0.0, %v3511
        %v3513 = vpop.f32.mrb[0].mxu0
        %v3514 = vadd.f32 0.0, %v3513
        %3515 = vdwg.mxu0
        %3516 = vmatprep.subr.bf16.mxu0 %v2310
        %3517 = vmatpush1.bf16.msra.mxu0 %v2309
        %3518 = vmatprep.subr.bf16.mxu0 %v2328
        %3519 = vmatpush1.bf16.msra.mxu0 %v2327
        %3520 = vmatprep.subr.bf16.mxu0 %v2346
        %3521 = vmatpush1.bf16.msra.mxu0 %v2345
        %3522 = vmatprep.subr.bf16.mxu0 %v2364
        %3523 = vmatpush1.bf16.msra.mxu0 %v2363
        %3524 = vmatprep.subr.bf16.mxu0 %v2382
        %3525 = vmatpush1.bf16.msra.mxu0 %v2381
        %3526 = vmatprep.subr.bf16.mxu0 %v2400
        %3527 = vmatpush1.bf16.msra.mxu0 %v2399
        %3528 = vmatprep.subr.bf16.mxu0 %v2418
        %3529 = vmatpush1.bf16.msra.mxu0 %v2417
        %3530 = vmatprep.subr.bf16.mxu0 %v2436
        %3531 = vmatpush1.bf16.msra.mxu0 %v2435
        %3532 = vmatprep.subr.bf16.mxu0 0
        %3533 = vmatpush1.bf16.msra.mxu0 0
        %3534 = vmatprep.subr.bf16.mxu0 0
        %3535 = vmatpush1.bf16.msra.mxu0 0
        %3536 = vmatprep.subr.bf16.mxu0 0
        %3537 = vmatpush1.bf16.msra.mxu0 0
        %3538 = vmatprep.subr.bf16.mxu0 0
        %3539 = vmatpush1.bf16.msra.mxu0 0
        %3540 = vmatprep.subr.bf16.mxu0 0
        %3541 = vmatpush1.bf16.msra.mxu0 0
        %3542 = vmatprep.subr.bf16.mxu0 0
        %3543 = vmatpush1.bf16.msra.mxu0 0
        %3544 = vmatprep.subr.bf16.mxu0 0
        %3545 = vmatpush1.bf16.msra.mxu0 0
        %3546 = vmatprep.subr.bf16.mxu0 0
        %3547 = vmatpush1.bf16.msra.mxu0 0
        %3548 = vmatprep.mubr.bf16.mxu0 0
        %3549 = vmatmul.mubr.bf16.gmra.mrb[0].mxu0 %v707
        %v3550 = vpop.f32.mrb[0].mxu0
        %v3551 = vadd.f32 %v3508, %v3550
        %v3552 = vpop.f32.mrb[0].mxu0
        %v3553 = vadd.f32 %v3510, %v3552
        %v3554 = vpop.f32.mrb[0].mxu0
        %v3555 = vadd.f32 %v3512, %v3554
        %v3556 = vpop.f32.mrb[0].mxu0
        %v3557 = vadd.f32 %v3514, %v3556
        %3558 = vdwg.mxu0
        %3559 = vmatprep.subr.bf16.mxu0 %v2024
        %3560 = vmatpush1.bf16.msra.mxu0 %v2023
        %3561 = vmatprep.subr.bf16.mxu0 %v2042
        %3562 = vmatpush1.bf16.msra.mxu0 %v2041
        %3563 = vmatprep.subr.bf16.mxu0 %v2060
        %3564 = vmatpush1.bf16.msra.mxu0 %v2059
        %3565 = vmatprep.subr.bf16.mxu0 %v2078
        %3566 = vmatpush1.bf16.msra.mxu0 %v2077
        %3567 = vmatprep.subr.bf16.mxu0 %v2096
        %3568 = vmatpush1.bf16.msra.mxu0 %v2095
        %3569 = vmatprep.subr.bf16.mxu0 %v2114
        %3570 = vmatpush1.bf16.msra.mxu0 %v2113
        %3571 = vmatprep.subr.bf16.mxu0 %v2132
        %3572 = vmatpush1.bf16.msra.mxu0 %v2131
        %3573 = vmatprep.subr.bf16.mxu0 %v2150
        %3574 = vmatpush1.bf16.msra.mxu0 %v2149
        %3575 = vmatprep.subr.bf16.mxu0 %v2168
        %3576 = vmatpush1.bf16.msra.mxu0 %v2167
        %3577 = vmatprep.subr.bf16.mxu0 %v2186
        %3578 = vmatpush1.bf16.msra.mxu0 %v2185
        %3579 = vmatprep.subr.bf16.mxu0 %v2204
        %3580 = vmatpush1.bf16.msra.mxu0 %v2203
        %3581 = vmatprep.subr.bf16.mxu0 %v2222
        %3582 = vmatpush1.bf16.msra.mxu0 %v2221
        %3583 = vmatprep.subr.bf16.mxu0 %v2240
        %3584 = vmatpush1.bf16.msra.mxu0 %v2239
        %3585 = vmatprep.subr.bf16.mxu0 %v2258
        %3586 = vmatpush1.bf16.msra.mxu0 %v2257
        %3587 = vmatprep.subr.bf16.mxu0 %v2276
        %3588 = vmatpush1.bf16.msra.mxu0 %v2275
        %3589 = vmatprep.subr.bf16.mxu0 %v2294
        %3590 = vmatpush1.bf16.msra.mxu0 %v2293
        %3591 = vmatprep.mubr.bf16.mxu0 %v706
        %3592 = vmatmul.mubr.bf16.gmra.mrb[0].mxu0 %v705
        %v3593 = vpop.f32.mrb[0].mxu0
        %v3594 = vadd.f32 0.0, %v3593
        %v3595 = vpop.f32.mrb[0].mxu0
        %v3596 = vadd.f32 0.0, %v3595
        %v3597 = vpop.f32.mrb[0].mxu0
        %v3598 = vadd.f32 0.0, %v3597
        %v3599 = vpop.f32.mrb[0].mxu0
        %v3600 = vadd.f32 0.0, %v3599
        %3601 = vdwg.mxu0
        %3602 = vmatprep.subr.bf16.mxu0 %v2312
        %3603 = vmatpush1.bf16.msra.mxu0 %v2311
        %3604 = vmatprep.subr.bf16.mxu0 %v2330
        %3605 = vmatpush1.bf16.msra.mxu0 %v2329
        %3606 = vmatprep.subr.bf16.mxu0 %v2348
        %3607 = vmatpush1.bf16.msra.mxu0 %v2347
        %3608 = vmatprep.subr.bf16.mxu0 %v2366
        %3609 = vmatpush1.bf16.msra.mxu0 %v2365
        %3610 = vmatprep.subr.bf16.mxu0 %v2384
        %3611 = vmatpush1.bf16.msra.mxu0 %v2383
        %3612 = vmatprep.subr.bf16.mxu0 %v2402
        %3613 = vmatpush1.bf16.msra.mxu0 %v2401
        %3614 = vmatprep.subr.bf16.mxu0 %v2420
        %3615 = vmatpush1.bf16.msra.mxu0 %v2419
        %3616 = vmatprep.subr.bf16.mxu0 %v2438
        %3617 = vmatpush1.bf16.msra.mxu0 %v2437
        %3618 = vmatprep.subr.bf16.mxu0 0
        %3619 = vmatpush1.bf16.msra.mxu0 0
        %3620 = vmatprep.subr.bf16.mxu0 0
        %3621 = vmatpush1.bf16.msra.mxu0 0
        %3622 = vmatprep.subr.bf16.mxu0 0
        %3623 = vmatpush1.bf16.msra.mxu0 0
        %3624 = vmatprep.subr.bf16.mxu0 0
        %3625 = vmatpush1.bf16.msra.mxu0 0
        %3626 = vmatprep.subr.bf16.mxu0 0
        %3627 = vmatpush1.bf16.msra.mxu0 0
        %3628 = vmatprep.subr.bf16.mxu0 0
        %3629 = vmatpush1.bf16.msra.mxu0 0
        %3630 = vmatprep.subr.bf16.mxu0 0
        %3631 = vmatpush1.bf16.msra.mxu0 0
        %3632 = vmatprep.subr.bf16.mxu0 0
        %3633 = vmatpush1.bf16.msra.mxu0 0
        %3634 = vmatprep.mubr.bf16.mxu0 0
        %3635 = vmatmul.mubr.bf16.gmra.mrb[0].mxu0 %v707
        %v3636 = vpop.f32.mrb[0].mxu0
        %v3637 = vadd.f32 %v3594, %v3636
        %v3638 = vpop.f32.mrb[0].mxu0
        %v3639 = vadd.f32 %v3596, %v3638
        %v3640 = vpop.f32.mrb[0].mxu0
        %v3641 = vadd.f32 %v3598, %v3640
        %v3642 = vpop.f32.mrb[0].mxu0
        %v3643 = vadd.f32 %v3600, %v3642
        %3644 = vdwg.mxu0
        %v3645 = vpack.c.bf16 %v2953, %v2949
        %v3646 = vpack.c.bf16 %v2955, %v2951
        %v3647 = vpack.c.bf16 %v3039, %v3035
        %v3648 = vpack.c.bf16 %v3041, %v3037
        %v3649 = vpack.c.bf16 %v3125, %v3121
        %v3650 = vpack.c.bf16 %v3127, %v3123
        %v3651 = vpack.c.bf16 %v3211, %v3207
        %v3652 = vpack.c.bf16 %v3213, %v3209
        %v3653 = vpack.c.bf16 %v3297, %v3293
        %v3654 = vpack.c.bf16 %v3299, %v3295
        %v3655 = vpack.c.bf16 %v3383, %v3379
        %v3656 = vpack.c.bf16 %v3385, %v3381
        %v3657 = vpack.c.bf16 %v3469, %v3465
        %v3658 = vpack.c.bf16 %v3471, %v3467
        %v3659 = vpack.c.bf16 %v3555, %v3551
        %v3660 = vpack.c.bf16 %v3557, %v3553
        %v3661 = vpack.c.bf16 %v3641, %v3637
        %v3662 = vpack.c.bf16 %v3643, %v3639
        %v3663 = vlaneseq
        %v3664 = vshrl.u32 %v3663, 7
        %v3665 = vadd.s32 %v3664, 8
        %v3666 = vlaneseq
        %v3667 = vand.u32 %v3666, 127
        %vm3668 = vcmp.le.s32.totalorder %v3667, %v3664
        %vm3669 = vcmp.le.s32.totalorder %v3667, %v3665
        %3670 = vmatprep.subr.bf16.mxu0 0
        %3671 = vmatpush1.bf16.xpose.msra.mxu0 %v3651
        %3672 = vmatprep.subr.bf16.mxu0 0
        %3673 = vmatpush1.bf16.xpose.msra.mxu0 0
        %3674 = vmatprep.subr.bf16.mxu0 0
        %3675 = vmatpush1.bf16.xpose.msra.mxu0 0
        %3676 = vmatprep.subr.bf16.mxu0 0
        %3677 = vmatpush1.bf16.xpose.msra.mxu0 0
        %3678 = vmatprep.subr.bf16.mxu0 0
        %3679 = vmatpush1.bf16.xpose.msra.mxu0 0
        %3680 = vmatprep.subr.bf16.mxu0 0
        %3681 = vmatpush1.bf16.xpose.msra.mxu0 0
        %3682 = vmatprep.subr.bf16.mxu0 0
        %3683 = vmatpush1.bf16.xpose.msra.mxu0 0
        %3684 = vmatprep.subr.bf16.mxu0 0
        %3685 = vmatpush1.bf16.xpose.msra.mxu0 0
        %3686 = vmatprep.subr.bf16.mxu0 0
        %3687 = vmatpush1.bf16.xpose.msra.mxu0 0
        %3688 = vmatprep.subr.bf16.mxu0 0
        %3689 = vmatpush1.bf16.xpose.msra.mxu0 0
        %3690 = vmatprep.subr.bf16.mxu0 0
        %3691 = vmatpush1.bf16.xpose.msra.mxu0 0
        %3692 = vmatprep.subr.bf16.mxu0 0
        %3693 = vmatpush1.bf16.xpose.msra.mxu0 0
        %3694 = vmatprep.subr.bf16.mxu0 0
        %3695 = vmatpush1.bf16.xpose.msra.mxu0 0
        %3696 = vmatprep.subr.bf16.mxu0 0
        %3697 = vmatpush1.bf16.xpose.msra.mxu0 0
        %3698 = vmatprep.subr.bf16.mxu0 0
        %3699 = vmatpush1.bf16.xpose.msra.mxu0 0
        %3700 = vmatprep.subr.bf16.mxu0 0
        %3701 = vmatpush1.bf16.xpose.msra.mxu0 0
        %3702 = vmatprep.mubr.bf16.mxu0 0
        %3703 = vmatmul.mubr.bf16.gmra.mrb[0].mxu0 %v3645
        %v3704 = vpop.f32.mrb[0].mxu0
        %v3705 = vadd.f32 0.0, %v3704
        %v3706 = vpop.f32.mrb[0].mxu0
        %v3707 = vpop.f32.mrb[0].mxu0
        %v3708 = vadd.f32 0.0, %v3707
        %v3709 = vpop.f32.mrb[0].mxu0
        %3710 = vdwg.mxu0
        %v3711 = vsel %vm3668, %v3705, -inf
        %v3712 = vsel %vm3669, %v3708, -inf
        %vm3713 = vcmask 130048
        %v3714 = vsel %vm3713, %v3711, -inf
        %3715 = vmax.xlane.f32.xlu0 %v3714
        %v3716 = vpop.xlane.xlu0 %3715
        %v3717 = vsel %vm3713, %v3712, -inf
        %3718 = vmax.xlane.f32.xlu0 %v3717
        %v3719 = vpop.xlane.xlu0 %3718
        %v3720 = vsub.f32 %v3711, %v3716
        %v3721 = vsub.f32 %v3712, %v3719
        %v3722 = vmul.f32 %v3720, 1.442695
        %v3723 = vpow.pop %v3722
        %v3724 = vmul.f32 %v3721, 1.442695
        %v3725 = vpow.pop %v3724
        %v3726 = vsel %vm3713, %v3723, 0.0
        %3727 = vadd.xlane.f32.xlu0 %v3726
        %v3728 = vpop.xlane.xlu0 %3727
        %v3729 = vsel %vm3713, %v3725, 0.0
        %3730 = vadd.xlane.f32.xlu0 %v3729
        %v3731 = vpop.xlane.xlu0 %3730
        %v3732 = vrcp.pop %v3728
        %v3733 = vrcp.pop %v3731
        %v3734 = vmul.f32 %v3723, %v3732
        %v3735 = vmul.f32 %v3725, %v3733
        %v3736 = vpack.c.bf16 %v3735, %v3734
        %v3738 = vsel %vm3713, %v3736, 0
        %3740 = vmatprep.subr.bf16.mxu0 0
        %3741 = vmatpush1.bf16.msra.mxu0 %v3657
        %3742 = vmatprep.subr.bf16.mxu0 0
        %3743 = vmatpush1.bf16.msra.mxu0 0
        %3744 = vmatprep.subr.bf16.mxu0 0
        %3745 = vmatpush1.bf16.msra.mxu0 0
        %3746 = vmatprep.subr.bf16.mxu0 0
        %3747 = vmatpush1.bf16.msra.mxu0 0
        %3748 = vmatprep.subr.bf16.mxu0 0
        %3749 = vmatpush1.bf16.msra.mxu0 0
        %3750 = vmatprep.subr.bf16.mxu0 0
        %3751 = vmatpush1.bf16.msra.mxu0 0
        %3752 = vmatprep.subr.bf16.mxu0 0
        %3753 = vmatpush1.bf16.msra.mxu0 0
        %3754 = vmatprep.subr.bf16.mxu0 0
        %3755 = vmatpush1.bf16.msra.mxu0 0
        %3756 = vmatprep.subr.bf16.mxu0 0
        %3757 = vmatpush1.bf16.msra.mxu0 0
        %3758 = vmatprep.subr.bf16.mxu0 0
        %3759 = vmatpush1.bf16.msra.mxu0 0
        %3760 = vmatprep.subr.bf16.mxu0 0
        %3761 = vmatpush1.bf16.msra.mxu0 0
        %3762 = vmatprep.subr.bf16.mxu0 0
        %3763 = vmatpush1.bf16.msra.mxu0 0
        %3764 = vmatprep.subr.bf16.mxu0 0
        %3765 = vmatpush1.bf16.msra.mxu0 0
        %3766 = vmatprep.subr.bf16.mxu0 0
        %3767 = vmatpush1.bf16.msra.mxu0 0
        %3768 = vmatprep.subr.bf16.mxu0 0
        %3769 = vmatpush1.bf16.msra.mxu0 0
        %3770 = vmatprep.subr.bf16.mxu0 0
        %3771 = vmatpush1.bf16.msra.mxu0 0
        %3772 = vmatprep.mubr.bf16.mxu0 0
        %3773 = vmatmul.mubr.bf16.gmra.mrb[0].mxu0 %v3738
        %v3774 = vpop.f32.mrb[0].mxu0
        %v3775 = vadd.f32 0.0, %v3774
        %v3776 = vpop.f32.mrb[0].mxu0
        %v3777 = vpop.f32.mrb[0].mxu0
        %v3778 = vadd.f32 0.0, %v3777
        %v3779 = vpop.f32.mrb[0].mxu0
        %3780 = vdwg.mxu0
        %3781 = vmatprep.subr.bf16.mxu0 0
        %3782 = vmatpush1.bf16.xpose.msra.mxu0 %v3652
        %3783 = vmatprep.subr.bf16.mxu0 0
        %3784 = vmatpush1.bf16.xpose.msra.mxu0 0
        %3785 = vmatprep.subr.bf16.mxu0 0
        %3786 = vmatpush1.bf16.xpose.msra.mxu0 0
        %3787 = vmatprep.subr.bf16.mxu0 0
        %3788 = vmatpush1.bf16.xpose.msra.mxu0 0
        %3789 = vmatprep.subr.bf16.mxu0 0
        %3790 = vmatpush1.bf16.xpose.msra.mxu0 0
        %3791 = vmatprep.subr.bf16.mxu0 0
        %3792 = vmatpush1.bf16.xpose.msra.mxu0 0
        %3793 = vmatprep.subr.bf16.mxu0 0
        %3794 = vmatpush1.bf16.xpose.msra.mxu0 0
        %3795 = vmatprep.subr.bf16.mxu0 0
        %3796 = vmatpush1.bf16.xpose.msra.mxu0 0
        %3797 = vmatprep.subr.bf16.mxu0 0
        %3798 = vmatpush1.bf16.xpose.msra.mxu0 0
        %3799 = vmatprep.subr.bf16.mxu0 0
        %3800 = vmatpush1.bf16.xpose.msra.mxu0 0
        %3801 = vmatprep.subr.bf16.mxu0 0
        %3802 = vmatpush1.bf16.xpose.msra.mxu0 0
        %3803 = vmatprep.subr.bf16.mxu0 0
        %3804 = vmatpush1.bf16.xpose.msra.mxu0 0
        %3805 = vmatprep.subr.bf16.mxu0 0
        %3806 = vmatpush1.bf16.xpose.msra.mxu0 0
        %3807 = vmatprep.subr.bf16.mxu0 0
        %3808 = vmatpush1.bf16.xpose.msra.mxu0 0
        %3809 = vmatprep.subr.bf16.mxu0 0
        %3810 = vmatpush1.bf16.xpose.msra.mxu0 0
        %3811 = vmatprep.subr.bf16.mxu0 0
        %3812 = vmatpush1.bf16.xpose.msra.mxu0 0
        %3813 = vmatprep.mubr.bf16.mxu0 0
        %3814 = vmatmul.mubr.bf16.gmra.mrb[0].mxu0 %v3646
        %v3815 = vpop.f32.mrb[0].mxu0
        %v3816 = vadd.f32 0.0, %v3815
        %v3817 = vpop.f32.mrb[0].mxu0
        %v3818 = vpop.f32.mrb[0].mxu0
        %v3819 = vadd.f32 0.0, %v3818
        %v3820 = vpop.f32.mrb[0].mxu0
        %3821 = vdwg.mxu0
        %v3822 = vsel %vm3668, %v3816, -inf
        %v3823 = vsel %vm3669, %v3819, -inf
        %v3824 = vsel %vm3713, %v3822, -inf
        %3825 = vmax.xlane.f32.xlu0 %v3824
        %v3826 = vpop.xlane.xlu0 %3825
        %v3827 = vsel %vm3713, %v3823, -inf
        %3828 = vmax.xlane.f32.xlu0 %v3827
        %v3829 = vpop.xlane.xlu0 %3828
        %v3830 = vsub.f32 %v3822, %v3826
        %v3831 = vsub.f32 %v3823, %v3829
        %v3832 = vmul.f32 %v3830, 1.442695
        %v3833 = vpow.pop %v3832
        %v3834 = vmul.f32 %v3831, 1.442695
        %v3835 = vpow.pop %v3834
        %v3836 = vsel %vm3713, %v3833, 0.0
        %3837 = vadd.xlane.f32.xlu0 %v3836
        %v3838 = vpop.xlane.xlu0 %3837
        %v3839 = vsel %vm3713, %v3835, 0.0
        %3840 = vadd.xlane.f32.xlu0 %v3839
        %v3841 = vpop.xlane.xlu0 %3840
        %v3842 = vrcp.pop %v3838
        %v3843 = vrcp.pop %v3841
        %v3844 = vmul.f32 %v3833, %v3842
        %v3845 = vmul.f32 %v3835, %v3843
        %v3846 = vpack.c.bf16 %v3845, %v3844
        %v3848 = vsel %vm3713, %v3846, 0
        %3850 = vmatprep.subr.bf16.mxu0 0
        %3851 = vmatpush1.bf16.msra.mxu0 %v3658
        %3852 = vmatprep.subr.bf16.mxu0 0
        %3853 = vmatpush1.bf16.msra.mxu0 0
        %3854 = vmatprep.subr.bf16.mxu0 0
        %3855 = vmatpush1.bf16.msra.mxu0 0
        %3856 = vmatprep.subr.bf16.mxu0 0
        %3857 = vmatpush1.bf16.msra.mxu0 0
        %3858 = vmatprep.subr.bf16.mxu0 0
        %3859 = vmatpush1.bf16.msra.mxu0 0
        %3860 = vmatprep.subr.bf16.mxu0 0
        %3861 = vmatpush1.bf16.msra.mxu0 0
        %3862 = vmatprep.subr.bf16.mxu0 0
        %3863 = vmatpush1.bf16.msra.mxu0 0
        %3864 = vmatprep.subr.bf16.mxu0 0
        %3865 = vmatpush1.bf16.msra.mxu0 0
        %3866 = vmatprep.subr.bf16.mxu0 0
        %3867 = vmatpush1.bf16.msra.mxu0 0
        %3868 = vmatprep.subr.bf16.mxu0 0
        %3869 = vmatpush1.bf16.msra.mxu0 0
        %3870 = vmatprep.subr.bf16.mxu0 0
        %3871 = vmatpush1.bf16.msra.mxu0 0
        %3872 = vmatprep.subr.bf16.mxu0 0
        %3873 = vmatpush1.bf16.msra.mxu0 0
        %3874 = vmatprep.subr.bf16.mxu0 0
        %3875 = vmatpush1.bf16.msra.mxu0 0
        %3876 = vmatprep.subr.bf16.mxu0 0
        %3877 = vmatpush1.bf16.msra.mxu0 0
        %3878 = vmatprep.subr.bf16.mxu0 0
        %3879 = vmatpush1.bf16.msra.mxu0 0
        %3880 = vmatprep.subr.bf16.mxu0 0
        %3881 = vmatpush1.bf16.msra.mxu0 0
        %3882 = vmatprep.mubr.bf16.mxu0 0
        %3883 = vmatmul.mubr.bf16.gmra.mrb[0].mxu0 %v3848
        %v3884 = vpop.f32.mrb[0].mxu0
        %v3885 = vadd.f32 0.0, %v3884
        %v3886 = vpop.f32.mrb[0].mxu0
        %v3887 = vpop.f32.mrb[0].mxu0
        %v3888 = vadd.f32 0.0, %v3887
        %v3889 = vpop.f32.mrb[0].mxu0
        %3890 = vdwg.mxu0
        %3891 = vmatprep.subr.bf16.mxu0 0
        %3892 = vmatpush1.bf16.xpose.msra.mxu0 %v3653
        %3893 = vmatprep.subr.bf16.mxu0 0
        %3894 = vmatpush1.bf16.xpose.msra.mxu0 0
        %3895 = vmatprep.subr.bf16.mxu0 0
        %3896 = vmatpush1.bf16.xpose.msra.mxu0 0
        %3897 = vmatprep.subr.bf16.mxu0 0
        %3898 = vmatpush1.bf16.xpose.msra.mxu0 0
        %3899 = vmatprep.subr.bf16.mxu0 0
        %3900 = vmatpush1.bf16.xpose.msra.mxu0 0
        %3901 = vmatprep.subr.bf16.mxu0 0
        %3902 = vmatpush1.bf16.xpose.msra.mxu0 0
        %3903 = vmatprep.subr.bf16.mxu0 0
        %3904 = vmatpush1.bf16.xpose.msra.mxu0 0
        %3905 = vmatprep.subr.bf16.mxu0 0
        %3906 = vmatpush1.bf16.xpose.msra.mxu0 0
        %3907 = vmatprep.subr.bf16.mxu0 0
        %3908 = vmatpush1.bf16.xpose.msra.mxu0 0
        %3909 = vmatprep.subr.bf16.mxu0 0
        %3910 = vmatpush1.bf16.xpose.msra.mxu0 0
        %3911 = vmatprep.subr.bf16.mxu0 0
        %3912 = vmatpush1.bf16.xpose.msra.mxu0 0
        %3913 = vmatprep.subr.bf16.mxu0 0
        %3914 = vmatpush1.bf16.xpose.msra.mxu0 0
        %3915 = vmatprep.subr.bf16.mxu0 0
        %3916 = vmatpush1.bf16.xpose.msra.mxu0 0
        %3917 = vmatprep.subr.bf16.mxu0 0
        %3918 = vmatpush1.bf16.xpose.msra.mxu0 0
        %3919 = vmatprep.subr.bf16.mxu0 0
        %3920 = vmatpush1.bf16.xpose.msra.mxu0 0
        %3921 = vmatprep.subr.bf16.mxu0 0
        %3922 = vmatpush1.bf16.xpose.msra.mxu0 0
        %3923 = vmatprep.mubr.bf16.mxu0 0
        %3924 = vmatmul.mubr.bf16.gmra.mrb[0].mxu0 %v3647
        %v3925 = vpop.f32.mrb[0].mxu0
        %v3926 = vadd.f32 0.0, %v3925
        %v3927 = vpop.f32.mrb[0].mxu0
        %v3928 = vpop.f32.mrb[0].mxu0
        %v3929 = vadd.f32 0.0, %v3928
        %v3930 = vpop.f32.mrb[0].mxu0
        %3931 = vdwg.mxu0
        %v3932 = vsel %vm3668, %v3926, -inf
        %v3933 = vsel %vm3669, %v3929, -inf
        %v3934 = vsel %vm3713, %v3932, -inf
        %3935 = vmax.xlane.f32.xlu0 %v3934
        %v3936 = vpop.xlane.xlu0 %3935
        %v3937 = vsel %vm3713, %v3933, -inf
        %3938 = vmax.xlane.f32.xlu0 %v3937
        %v3939 = vpop.xlane.xlu0 %3938
        %v3940 = vsub.f32 %v3932, %v3936
        %v3941 = vsub.f32 %v3933, %v3939
        %v3942 = vmul.f32 %v3940, 1.442695
        %v3943 = vpow.pop %v3942
        %v3944 = vmul.f32 %v3941, 1.442695
        %v3945 = vpow.pop %v3944
        %v3946 = vsel %vm3713, %v3943, 0.0
        %3947 = vadd.xlane.f32.xlu0 %v3946
        %v3948 = vpop.xlane.xlu0 %3947
        %v3949 = vsel %vm3713, %v3945, 0.0
        %3950 = vadd.xlane.f32.xlu0 %v3949
        %v3951 = vpop.xlane.xlu0 %3950
        %v3952 = vrcp.pop %v3948
        %v3953 = vrcp.pop %v3951
        %v3954 = vmul.f32 %v3943, %v3952
        %v3955 = vmul.f32 %v3945, %v3953
        %v3956 = vpack.c.bf16 %v3955, %v3954
        %v3958 = vsel %vm3713, %v3956, 0
        %3960 = vmatprep.subr.bf16.mxu0 0
        %3961 = vmatpush1.bf16.msra.mxu0 %v3659
        %3962 = vmatprep.subr.bf16.mxu0 0
        %3963 = vmatpush1.bf16.msra.mxu0 0
        %3964 = vmatprep.subr.bf16.mxu0 0
        %3965 = vmatpush1.bf16.msra.mxu0 0
        %3966 = vmatprep.subr.bf16.mxu0 0
        %3967 = vmatpush1.bf16.msra.mxu0 0
        %3968 = vmatprep.subr.bf16.mxu0 0
        %3969 = vmatpush1.bf16.msra.mxu0 0
        %3970 = vmatprep.subr.bf16.mxu0 0
        %3971 = vmatpush1.bf16.msra.mxu0 0
        %3972 = vmatprep.subr.bf16.mxu0 0
        %3973 = vmatpush1.bf16.msra.mxu0 0
        %3974 = vmatprep.subr.bf16.mxu0 0
        %3975 = vmatpush1.bf16.msra.mxu0 0
        %3976 = vmatprep.subr.bf16.mxu0 0
        %3977 = vmatpush1.bf16.msra.mxu0 0
        %3978 = vmatprep.subr.bf16.mxu0 0
        %3979 = vmatpush1.bf16.msra.mxu0 0
        %3980 = vmatprep.subr.bf16.mxu0 0
        %3981 = vmatpush1.bf16.msra.mxu0 0
        %3982 = vmatprep.subr.bf16.mxu0 0
        %3983 = vmatpush1.bf16.msra.mxu0 0
        %3984 = vmatprep.subr.bf16.mxu0 0
        %3985 = vmatpush1.bf16.msra.mxu0 0
        %3986 = vmatprep.subr.bf16.mxu0 0
        %3987 = vmatpush1.bf16.msra.mxu0 0
        %3988 = vmatprep.subr.bf16.mxu0 0
        %3989 = vmatpush1.bf16.msra.mxu0 0
        %3990 = vmatprep.subr.bf16.mxu0 0
        %3991 = vmatpush1.bf16.msra.mxu0 0
        %3992 = vmatprep.mubr.bf16.mxu0 0
        %3993 = vmatmul.mubr.bf16.gmra.mrb[0].mxu0 %v3958
        %v3994 = vpop.f32.mrb[0].mxu0
        %v3995 = vadd.f32 0.0, %v3994
        %v3996 = vpop.f32.mrb[0].mxu0
        %v3997 = vpop.f32.mrb[0].mxu0
        %v3998 = vadd.f32 0.0, %v3997
        %v3999 = vpop.f32.mrb[0].mxu0
        %4000 = vdwg.mxu0
        %4001 = vmatprep.subr.bf16.mxu0 0
        %4002 = vmatpush1.bf16.xpose.msra.mxu0 %v3654
        %4003 = vmatprep.subr.bf16.mxu0 0
        %4004 = vmatpush1.bf16.xpose.msra.mxu0 0
        %4005 = vmatprep.subr.bf16.mxu0 0
        %4006 = vmatpush1.bf16.xpose.msra.mxu0 0
        %4007 = vmatprep.subr.bf16.mxu0 0
        %4008 = vmatpush1.bf16.xpose.msra.mxu0 0
        %4009 = vmatprep.subr.bf16.mxu0 0
        %4010 = vmatpush1.bf16.xpose.msra.mxu0 0
        %4011 = vmatprep.subr.bf16.mxu0 0
        %4012 = vmatpush1.bf16.xpose.msra.mxu0 0
        %4013 = vmatprep.subr.bf16.mxu0 0
        %4014 = vmatpush1.bf16.xpose.msra.mxu0 0
        %4015 = vmatprep.subr.bf16.mxu0 0
        %4016 = vmatpush1.bf16.xpose.msra.mxu0 0
        %4017 = vmatprep.subr.bf16.mxu0 0
        %4018 = vmatpush1.bf16.xpose.msra.mxu0 0
        %4019 = vmatprep.subr.bf16.mxu0 0
        %4020 = vmatpush1.bf16.xpose.msra.mxu0 0
        %4021 = vmatprep.subr.bf16.mxu0 0
        %4022 = vmatpush1.bf16.xpose.msra.mxu0 0
        %4023 = vmatprep.subr.bf16.mxu0 0
        %4024 = vmatpush1.bf16.xpose.msra.mxu0 0
        %4025 = vmatprep.subr.bf16.mxu0 0
        %4026 = vmatpush1.bf16.xpose.msra.mxu0 0
        %4027 = vmatprep.subr.bf16.mxu0 0
        %4028 = vmatpush1.bf16.xpose.msra.mxu0 0
        %4029 = vmatprep.subr.bf16.mxu0 0
        %4030 = vmatpush1.bf16.xpose.msra.mxu0 0
        %4031 = vmatprep.subr.bf16.mxu0 0
        %4032 = vmatpush1.bf16.xpose.msra.mxu0 0
        %4033 = vmatprep.mubr.bf16.mxu0 0
        %4034 = vmatmul.mubr.bf16.gmra.mrb[0].mxu0 %v3648
        %v4035 = vpop.f32.mrb[0].mxu0
        %v4036 = vadd.f32 0.0, %v4035
        %v4037 = vpop.f32.mrb[0].mxu0
        %v4038 = vpop.f32.mrb[0].mxu0
        %v4039 = vadd.f32 0.0, %v4038
        %v4040 = vpop.f32.mrb[0].mxu0
        %4041 = vdwg.mxu0
        %v4042 = vsel %vm3668, %v4036, -inf
        %v4043 = vsel %vm3669, %v4039, -inf
        %v4044 = vsel %vm3713, %v4042, -inf
        %4045 = vmax.xlane.f32.xlu0 %v4044
        %v4046 = vpop.xlane.xlu0 %4045
        %v4047 = vsel %vm3713, %v4043, -inf
        %4048 = vmax.xlane.f32.xlu0 %v4047
        %v4049 = vpop.xlane.xlu0 %4048
        %v4050 = vsub.f32 %v4042, %v4046
        %v4051 = vsub.f32 %v4043, %v4049
        %v4052 = vmul.f32 %v4050, 1.442695
        %v4053 = vpow.pop %v4052
        %v4054 = vmul.f32 %v4051, 1.442695
        %v4055 = vpow.pop %v4054
        %v4056 = vsel %vm3713, %v4053, 0.0
        %4057 = vadd.xlane.f32.xlu0 %v4056
        %v4058 = vpop.xlane.xlu0 %4057
        %v4059 = vsel %vm3713, %v4055, 0.0
        %4060 = vadd.xlane.f32.xlu0 %v4059
        %v4061 = vpop.xlane.xlu0 %4060
        %v4062 = vrcp.pop %v4058
        %v4063 = vrcp.pop %v4061
        %v4064 = vmul.f32 %v4053, %v4062
        %v4065 = vmul.f32 %v4055, %v4063
        %v4066 = vpack.c.bf16 %v4065, %v4064
        %v4068 = vsel %vm3713, %v4066, 0
        %4070 = vmatprep.subr.bf16.mxu0 0
        %4071 = vmatpush1.bf16.msra.mxu0 %v3660
        %4072 = vmatprep.subr.bf16.mxu0 0
        %4073 = vmatpush1.bf16.msra.mxu0 0
        %4074 = vmatprep.subr.bf16.mxu0 0
        %4075 = vmatpush1.bf16.msra.mxu0 0
        %4076 = vmatprep.subr.bf16.mxu0 0
        %4077 = vmatpush1.bf16.msra.mxu0 0
        %4078 = vmatprep.subr.bf16.mxu0 0
        %4079 = vmatpush1.bf16.msra.mxu0 0
        %4080 = vmatprep.subr.bf16.mxu0 0
        %4081 = vmatpush1.bf16.msra.mxu0 0
        %4082 = vmatprep.subr.bf16.mxu0 0
        %4083 = vmatpush1.bf16.msra.mxu0 0
        %4084 = vmatprep.subr.bf16.mxu0 0
        %4085 = vmatpush1.bf16.msra.mxu0 0
        %4086 = vmatprep.subr.bf16.mxu0 0
        %4087 = vmatpush1.bf16.msra.mxu0 0
        %4088 = vmatprep.subr.bf16.mxu0 0
        %4089 = vmatpush1.bf16.msra.mxu0 0
        %4090 = vmatprep.subr.bf16.mxu0 0
        %4091 = vmatpush1.bf16.msra.mxu0 0
        %4092 = vmatprep.subr.bf16.mxu0 0
        %4093 = vmatpush1.bf16.msra.mxu0 0
        %4094 = vmatprep.subr.bf16.mxu0 0
        %4095 = vmatpush1.bf16.msra.mxu0 0
        %4096 = vmatprep.subr.bf16.mxu0 0
        %4097 = vmatpush1.bf16.msra.mxu0 0
        %4098 = vmatprep.subr.bf16.mxu0 0
        %4099 = vmatpush1.bf16.msra.mxu0 0
        %4100 = vmatprep.subr.bf16.mxu0 0
        %4101 = vmatpush1.bf16.msra.mxu0 0
        %4102 = vmatprep.mubr.bf16.mxu0 0
        %4103 = vmatmul.mubr.bf16.gmra.mrb[0].mxu0 %v4068
        %v4104 = vpop.f32.mrb[0].mxu0
        %v4105 = vadd.f32 0.0, %v4104
        %v4106 = vpop.f32.mrb[0].mxu0
        %v4107 = vpop.f32.mrb[0].mxu0
        %v4108 = vadd.f32 0.0, %v4107
        %v4109 = vpop.f32.mrb[0].mxu0
        %4110 = vdwg.mxu0
        %4111 = vmatprep.subr.bf16.mxu0 0
        %4112 = vmatpush1.bf16.xpose.msra.mxu0 %v3655
        %4113 = vmatprep.subr.bf16.mxu0 0
        %4114 = vmatpush1.bf16.xpose.msra.mxu0 0
        %4115 = vmatprep.subr.bf16.mxu0 0
        %4116 = vmatpush1.bf16.xpose.msra.mxu0 0
        %4117 = vmatprep.subr.bf16.mxu0 0
        %4118 = vmatpush1.bf16.xpose.msra.mxu0 0
        %4119 = vmatprep.subr.bf16.mxu0 0
        %4120 = vmatpush1.bf16.xpose.msra.mxu0 0
        %4121 = vmatprep.subr.bf16.mxu0 0
        %4122 = vmatpush1.bf16.xpose.msra.mxu0 0
        %4123 = vmatprep.subr.bf16.mxu0 0
        %4124 = vmatpush1.bf16.xpose.msra.mxu0 0
        %4125 = vmatprep.subr.bf16.mxu0 0
        %4126 = vmatpush1.bf16.xpose.msra.mxu0 0
        %4127 = vmatprep.subr.bf16.mxu0 0
        %4128 = vmatpush1.bf16.xpose.msra.mxu0 0
        %4129 = vmatprep.subr.bf16.mxu0 0
        %4130 = vmatpush1.bf16.xpose.msra.mxu0 0
        %4131 = vmatprep.subr.bf16.mxu0 0
        %4132 = vmatpush1.bf16.xpose.msra.mxu0 0
        %4133 = vmatprep.subr.bf16.mxu0 0
        %4134 = vmatpush1.bf16.xpose.msra.mxu0 0
        %4135 = vmatprep.subr.bf16.mxu0 0
        %4136 = vmatpush1.bf16.xpose.msra.mxu0 0
        %4137 = vmatprep.subr.bf16.mxu0 0
        %4138 = vmatpush1.bf16.xpose.msra.mxu0 0
        %4139 = vmatprep.subr.bf16.mxu0 0
        %4140 = vmatpush1.bf16.xpose.msra.mxu0 0
        %4141 = vmatprep.subr.bf16.mxu0 0
        %4142 = vmatpush1.bf16.xpose.msra.mxu0 0
        %4143 = vmatprep.mubr.bf16.mxu0 0
        %4144 = vmatmul.mubr.bf16.gmra.mrb[0].mxu0 %v3649
        %v4145 = vpop.f32.mrb[0].mxu0
        %v4146 = vadd.f32 0.0, %v4145
        %v4147 = vpop.f32.mrb[0].mxu0
        %v4148 = vpop.f32.mrb[0].mxu0
        %v4149 = vadd.f32 0.0, %v4148
        %v4150 = vpop.f32.mrb[0].mxu0
        %4151 = vdwg.mxu0
        %v4152 = vsel %vm3668, %v4146, -inf
        %v4153 = vsel %vm3669, %v4149, -inf
        %v4154 = vsel %vm3713, %v4152, -inf
        %4155 = vmax.xlane.f32.xlu0 %v4154
        %v4156 = vpop.xlane.xlu0 %4155
        %v4157 = vsel %vm3713, %v4153, -inf
        %4158 = vmax.xlane.f32.xlu0 %v4157
        %v4159 = vpop.xlane.xlu0 %4158
        %v4160 = vsub.f32 %v4152, %v4156
        %v4161 = vsub.f32 %v4153, %v4159
        %v4162 = vmul.f32 %v4160, 1.442695
        %v4163 = vpow.pop %v4162
        %v4164 = vmul.f32 %v4161, 1.442695
        %v4165 = vpow.pop %v4164
        %v4166 = vsel %vm3713, %v4163, 0.0
        %4167 = vadd.xlane.f32.xlu0 %v4166
        %v4168 = vpop.xlane.xlu0 %4167
        %v4169 = vsel %vm3713, %v4165, 0.0
        %4170 = vadd.xlane.f32.xlu0 %v4169
        %v4171 = vpop.xlane.xlu0 %4170
        %v4172 = vrcp.pop %v4168
        %v4173 = vrcp.pop %v4171
        %v4174 = vmul.f32 %v4163, %v4172
        %v4175 = vmul.f32 %v4165, %v4173
        %v4176 = vpack.c.bf16 %v4175, %v4174
        %v4178 = vsel %vm3713, %v4176, 0
        %4180 = vmatprep.subr.bf16.mxu0 0
        %4181 = vmatpush1.bf16.msra.mxu0 %v3661
        %4182 = vmatprep.subr.bf16.mxu0 0
        %4183 = vmatpush1.bf16.msra.mxu0 0
        %4184 = vmatprep.subr.bf16.mxu0 0
        %4185 = vmatpush1.bf16.msra.mxu0 0
        %4186 = vmatprep.subr.bf16.mxu0 0
        %4187 = vmatpush1.bf16.msra.mxu0 0
        %4188 = vmatprep.subr.bf16.mxu0 0
        %4189 = vmatpush1.bf16.msra.mxu0 0
        %4190 = vmatprep.subr.bf16.mxu0 0
        %4191 = vmatpush1.bf16.msra.mxu0 0
        %4192 = vmatprep.subr.bf16.mxu0 0
        %4193 = vmatpush1.bf16.msra.mxu0 0
        %4194 = vmatprep.subr.bf16.mxu0 0
        %4195 = vmatpush1.bf16.msra.mxu0 0
        %4196 = vmatprep.subr.bf16.mxu0 0
        %4197 = vmatpush1.bf16.msra.mxu0 0
        %4198 = vmatprep.subr.bf16.mxu0 0
        %4199 = vmatpush1.bf16.msra.mxu0 0
        %4200 = vmatprep.subr.bf16.mxu0 0
        %4201 = vmatpush1.bf16.msra.mxu0 0
        %4202 = vmatprep.subr.bf16.mxu0 0
        %4203 = vmatpush1.bf16.msra.mxu0 0
        %4204 = vmatprep.subr.bf16.mxu0 0
        %4205 = vmatpush1.bf16.msra.mxu0 0
        %4206 = vmatprep.subr.bf16.mxu0 0
        %4207 = vmatpush1.bf16.msra.mxu0 0
        %4208 = vmatprep.subr.bf16.mxu0 0
        %4209 = vmatpush1.bf16.msra.mxu0 0
        %4210 = vmatprep.subr.bf16.mxu0 0
        %4211 = vmatpush1.bf16.msra.mxu0 0
        %4212 = vmatprep.mubr.bf16.mxu0 0
        %4213 = vmatmul.mubr.bf16.gmra.mrb[0].mxu0 %v4178
        %v4214 = vpop.f32.mrb[0].mxu0
        %v4215 = vadd.f32 0.0, %v4214
        %v4216 = vpop.f32.mrb[0].mxu0
        %v4217 = vpop.f32.mrb[0].mxu0
        %v4218 = vadd.f32 0.0, %v4217
        %v4219 = vpop.f32.mrb[0].mxu0
        %4220 = vdwg.mxu0
        %4221 = vmatprep.subr.bf16.mxu0 0
        %4222 = vmatpush1.bf16.xpose.msra.mxu0 %v3656
        %4223 = vmatprep.subr.bf16.mxu0 0
        %4224 = vmatpush1.bf16.xpose.msra.mxu0 0
        %4225 = vmatprep.subr.bf16.mxu0 0
        %4226 = vmatpush1.bf16.xpose.msra.mxu0 0
        %4227 = vmatprep.subr.bf16.mxu0 0
        %4228 = vmatpush1.bf16.xpose.msra.mxu0 0
        %4229 = vmatprep.subr.bf16.mxu0 0
        %4230 = vmatpush1.bf16.xpose.msra.mxu0 0
        %4231 = vmatprep.subr.bf16.mxu0 0
        %4232 = vmatpush1.bf16.xpose.msra.mxu0 0
        %4233 = vmatprep.subr.bf16.mxu0 0
        %4234 = vmatpush1.bf16.xpose.msra.mxu0 0
        %4235 = vmatprep.subr.bf16.mxu0 0
        %4236 = vmatpush1.bf16.xpose.msra.mxu0 0
        %4237 = vmatprep.subr.bf16.mxu0 0
        %4238 = vmatpush1.bf16.xpose.msra.mxu0 0
        %4239 = vmatprep.subr.bf16.mxu0 0
        %4240 = vmatpush1.bf16.xpose.msra.mxu0 0
        %4241 = vmatprep.subr.bf16.mxu0 0
        %4242 = vmatpush1.bf16.xpose.msra.mxu0 0
        %4243 = vmatprep.subr.bf16.mxu0 0
        %4244 = vmatpush1.bf16.xpose.msra.mxu0 0
        %4245 = vmatprep.subr.bf16.mxu0 0
        %4246 = vmatpush1.bf16.xpose.msra.mxu0 0
        %4247 = vmatprep.subr.bf16.mxu0 0
        %4248 = vmatpush1.bf16.xpose.msra.mxu0 0
        %4249 = vmatprep.subr.bf16.mxu0 0
        %4250 = vmatpush1.bf16.xpose.msra.mxu0 0
        %4251 = vmatprep.subr.bf16.mxu0 0
        %4252 = vmatpush1.bf16.xpose.msra.mxu0 0
        %4253 = vmatprep.mubr.bf16.mxu0 0
        %4254 = vmatmul.mubr.bf16.gmra.mrb[0].mxu0 %v3650
        %v4255 = vpop.f32.mrb[0].mxu0
        %v4256 = vadd.f32 0.0, %v4255
        %v4257 = vpop.f32.mrb[0].mxu0
        %v4258 = vpop.f32.mrb[0].mxu0
        %v4259 = vadd.f32 0.0, %v4258
        %v4260 = vpop.f32.mrb[0].mxu0
        %4261 = vdwg.mxu0
        %v4262 = vsel %vm3668, %v4256, -inf
        %v4263 = vsel %vm3669, %v4259, -inf
        %v4264 = vsel %vm3713, %v4262, -inf
        %4265 = vmax.xlane.f32.xlu0 %v4264
        %v4266 = vpop.xlane.xlu0 %4265
        %v4267 = vsel %vm3713, %v4263, -inf
        %4268 = vmax.xlane.f32.xlu0 %v4267
        %v4269 = vpop.xlane.xlu0 %4268
        %v4270 = vsub.f32 %v4262, %v4266
        %v4271 = vsub.f32 %v4263, %v4269
        %v4272 = vmul.f32 %v4270, 1.442695
        %v4273 = vpow.pop %v4272
        %v4274 = vmul.f32 %v4271, 1.442695
        %v4275 = vpow.pop %v4274
        %v4276 = vsel %vm3713, %v4273, 0.0
        %4277 = vadd.xlane.f32.xlu0 %v4276
        %v4278 = vpop.xlane.xlu0 %4277
        %v4279 = vsel %vm3713, %v4275, 0.0
        %4280 = vadd.xlane.f32.xlu0 %v4279
        %v4281 = vpop.xlane.xlu0 %4280
        %v4282 = vrcp.pop %v4278
        %v4283 = vrcp.pop %v4281
        %v4284 = vmul.f32 %v4273, %v4282
        %v4285 = vmul.f32 %v4275, %v4283
        %v4286 = vpack.c.bf16 %v4285, %v4284
        %v4288 = vsel %vm3713, %v4286, 0
        %4290 = vmatprep.subr.bf16.mxu0 0
        %4291 = vmatpush1.bf16.msra.mxu0 %v3662
        %4292 = vmatprep.subr.bf16.mxu0 0
        %4293 = vmatpush1.bf16.msra.mxu0 0
        %4294 = vmatprep.subr.bf16.mxu0 0
        %4295 = vmatpush1.bf16.msra.mxu0 0
        %4296 = vmatprep.subr.bf16.mxu0 0
        %4297 = vmatpush1.bf16.msra.mxu0 0
        %4298 = vmatprep.subr.bf16.mxu0 0
        %4299 = vmatpush1.bf16.msra.mxu0 0
        %4300 = vmatprep.subr.bf16.mxu0 0
        %4301 = vmatpush1.bf16.msra.mxu0 0
        %4302 = vmatprep.subr.bf16.mxu0 0
        %4303 = vmatpush1.bf16.msra.mxu0 0
        %4304 = vmatprep.subr.bf16.mxu0 0
        %4305 = vmatpush1.bf16.msra.mxu0 0
        %4306 = vmatprep.subr.bf16.mxu0 0
        %4307 = vmatpush1.bf16.msra.mxu0 0
        %4308 = vmatprep.subr.bf16.mxu0 0
        %4309 = vmatpush1.bf16.msra.mxu0 0
        %4310 = vmatprep.subr.bf16.mxu0 0
        %4311 = vmatpush1.bf16.msra.mxu0 0
        %4312 = vmatprep.subr.bf16.mxu0 0
        %4313 = vmatpush1.bf16.msra.mxu0 0
        %4314 = vmatprep.subr.bf16.mxu0 0
        %4315 = vmatpush1.bf16.msra.mxu0 0
        %4316 = vmatprep.subr.bf16.mxu0 0
        %4317 = vmatpush1.bf16.msra.mxu0 0
        %4318 = vmatprep.subr.bf16.mxu0 0
        %4319 = vmatpush1.bf16.msra.mxu0 0
        %4320 = vmatprep.subr.bf16.mxu0 0
        %4321 = vmatpush1.bf16.msra.mxu0 0
        %4322 = vmatprep.mubr.bf16.mxu0 0
        %4323 = vmatmul.mubr.bf16.gmra.mrb[0].mxu0 %v4288
        %v4324 = vpop.f32.mrb[0].mxu0
        %v4325 = vadd.f32 0.0, %v4324
        %v4326 = vpop.f32.mrb[0].mxu0
        %v4327 = vpop.f32.mrb[0].mxu0
        %v4328 = vadd.f32 0.0, %v4327
        %v4329 = vpop.f32.mrb[0].mxu0
        %4330 = vdwg.mxu0
        %v4331 = vpack.c.bf16 %v3778, %v3775
        %v4332 = vpack.c.bf16 %v3888, %v3885
        %v4333 = vpack.c.bf16 %v3998, %v3995
        %v4334 = vpack.c.bf16 %v4108, %v4105
        %v4335 = vpack.c.bf16 %v4218, %v4215
        %v4336 = vpack.c.bf16 %v4328, %v4325
        %v4337 = vld [vmem:[#allocation7] sm:$0xff]
        %v4338 = vld [vmem:[#allocation7 + $0x8] sm:$0xf]
        %v4339 = vld [vmem:[#allocation7 + $0xc] sm:$0xff]
        %v4340 = vld [vmem:[#allocation7 + $0x14] sm:$0xf]
        %v4341 = vld [vmem:[#allocation7 + $0x18] sm:$0xff]
        %v4342 = vld [vmem:[#allocation7 + $0x20] sm:$0xf]
        %v4343 = vld [vmem:[#allocation7 + $0x24] sm:$0xff]
        %v4344 = vld [vmem:[#allocation7 + $0x2c] sm:$0xf]
        %v4345 = vld [vmem:[#allocation7 + $0x30] sm:$0xff]
        %v4346 = vld [vmem:[#allocation7 + $0x38] sm:$0xf]
        %v4347 = vld [vmem:[#allocation7 + $0x3c] sm:$0xff]
        %v4348 = vld [vmem:[#allocation7 + $0x44] sm:$0xf]
        %v4349 = vld [vmem:[#allocation7 + $0x48] sm:$0xff]
        %v4350 = vld [vmem:[#allocation7 + $0x50] sm:$0xf]
        %v4351 = vld [vmem:[#allocation7 + $0x54] sm:$0xff]
        %v4352 = vld [vmem:[#allocation7 + $0x5c] sm:$0xf]
        %v4353 = vld [vmem:[#allocation7 + $0x60] sm:$0xff]
        %v4354 = vld [vmem:[#allocation7 + $0x68] sm:$0xf]
        %v4355 = vld [vmem:[#allocation7 + $0x6c] sm:$0xff]
        %v4356 = vld [vmem:[#allocation7 + $0x74] sm:$0xf]
        %v4357 = vld [vmem:[#allocation7 + $0x78] sm:$0xff]
        %v4358 = vld [vmem:[#allocation7 + $0x80] sm:$0xf]
        %v4359 = vld [vmem:[#allocation7 + $0x84] sm:$0xff]
        %v4360 = vld [vmem:[#allocation7 + $0x8c] sm:$0xf]
        %v4361 = vld [vmem:[#allocation7 + $0x90] sm:$0xff]
        %v4362 = vld [vmem:[#allocation7 + $0x98] sm:$0xf]
        %v4363 = vld [vmem:[#allocation7 + $0x9c] sm:$0xff]
        %v4364 = vld [vmem:[#allocation7 + $0xa4] sm:$0xf]
        %v4365 = vld [vmem:[#allocation7 + $0xa8] sm:$0xff]
        %v4366 = vld [vmem:[#allocation7 + $0xb0] sm:$0xf]
        %v4367 = vld [vmem:[#allocation7 + $0xb4] sm:$0xff]
        %v4368 = vld [vmem:[#allocation7 + $0xbc] sm:$0xf]
        %v4369 = vld [vmem:[#allocation7 + $0xc0] sm:$0xff]
        %v4370 = vld [vmem:[#allocation7 + $0xc8] sm:$0xf]
        %v4371 = vld [vmem:[#allocation7 + $0xcc] sm:$0xff]
        %v4372 = vld [vmem:[#allocation7 + $0xd4] sm:$0xf]
        %v4373 = vld [vmem:[#allocation7 + $0xd8] sm:$0xff]
        %v4374 = vld [vmem:[#allocation7 + $0xe0] sm:$0xf]
        %v4375 = vld [vmem:[#allocation7 + $0xe4] sm:$0xff]
        %v4376 = vld [vmem:[#allocation7 + $0xec] sm:$0xf]
        %v4377 = vld [vmem:[#allocation7 + $0xf0] sm:$0xff]
        %v4378 = vld [vmem:[#allocation7 + $0xf8] sm:$0xf]
        %v4379 = vld [vmem:[#allocation7 + $0xfc] sm:$0xff]
        %v4380 = vld [vmem:[#allocation7 + $0x104] sm:$0xf]
        %v4381 = vld [vmem:[#allocation7 + $0x108] sm:$0xff]
        %v4382 = vld [vmem:[#allocation7 + $0x110] sm:$0xf]
        %v4383 = vld [vmem:[#allocation7 + $0x114] sm:$0xff]
        %v4384 = vld [vmem:[#allocation7 + $0x11c] sm:$0xf]
        %v4385 = vld [vmem:[#allocation7 + $0x120] sm:$0xff]
        %v4386 = vld [vmem:[#allocation7 + $0x128] sm:$0xf]
        %v4387 = vld [vmem:[#allocation7 + $0x12c] sm:$0xff]
        %v4388 = vld [vmem:[#allocation7 + $0x134] sm:$0xf]
        %v4389 = vld [vmem:[#allocation7 + $0x138] sm:$0xff]
        %v4390 = vld [vmem:[#allocation7 + $0x140] sm:$0xf]
        %v4391 = vld [vmem:[#allocation7 + $0x144] sm:$0xff]
        %v4392 = vld [vmem:[#allocation7 + $0x14c] sm:$0xf]
        %v4393 = vld [vmem:[#allocation7 + $0x150] sm:$0xff]
        %v4394 = vld [vmem:[#allocation7 + $0x158] sm:$0xf]
        %v4395 = vld [vmem:[#allocation7 + $0x15c] sm:$0xff]
        %v4396 = vld [vmem:[#allocation7 + $0x164] sm:$0xf]
        %v4397 = vld [vmem:[#allocation7 + $0x168] sm:$0xff]
        %v4398 = vld [vmem:[#allocation7 + $0x170] sm:$0xf]
        %v4399 = vld [vmem:[#allocation7 + $0x174] sm:$0xff]
        %v4400 = vld [vmem:[#allocation7 + $0x17c] sm:$0xf]
        %v4401 = vld [vmem:[#allocation7 + $0x180] sm:$0xff]
        %v4402 = vld [vmem:[#allocation7 + $0x188] sm:$0xf]
        %v4403 = vld [vmem:[#allocation7 + $0x18c] sm:$0xff]
        %v4404 = vld [vmem:[#allocation7 + $0x194] sm:$0xf]
        %v4405 = vld [vmem:[#allocation7 + $0x198] sm:$0xff]
        %v4406 = vld [vmem:[#allocation7 + $0x1a0] sm:$0xf]
        %v4407 = vld [vmem:[#allocation7 + $0x1a4] sm:$0xff]
        %v4408 = vld [vmem:[#allocation7 + $0x1ac] sm:$0xf]
        %v4409 = vld [vmem:[#allocation7 + $0x1b0] sm:$0xff]
        %v4410 = vld [vmem:[#allocation7 + $0x1b8] sm:$0xf]
        %v4411 = vld [vmem:[#allocation7 + $0x1bc] sm:$0xff]
        %v4412 = vld [vmem:[#allocation7 + $0x1c4] sm:$0xf]
        %v4413 = vld [vmem:[#allocation7 + $0x1c8] sm:$0xff]
        %v4414 = vld [vmem:[#allocation7 + $0x1d0] sm:$0xf]
        %v4415 = vld [vmem:[#allocation7 + $0x1d4] sm:$0xff]
        %v4416 = vld [vmem:[#allocation7 + $0x1dc] sm:$0xf]
        %v4417 = vld [vmem:[#allocation7 + $0x1e0] sm:$0xff]
        %v4418 = vld [vmem:[#allocation7 + $0x1e8] sm:$0xf]
        %v4419 = vld [vmem:[#allocation7 + $0x1ec] sm:$0xff]
        %v4420 = vld [vmem:[#allocation7 + $0x1f4] sm:$0xf]
        %v4421 = vld [vmem:[#allocation7 + $0x1f8] sm:$0xff]
        %v4422 = vld [vmem:[#allocation7 + $0x200] sm:$0xf]
        %v4423 = vld [vmem:[#allocation7 + $0x204] sm:$0xff]
        %v4424 = vld [vmem:[#allocation7 + $0x20c] sm:$0xf]
        %v4425 = vld [vmem:[#allocation7 + $0x210] sm:$0xff]
        %v4426 = vld [vmem:[#allocation7 + $0x218] sm:$0xf]
        %v4427 = vld [vmem:[#allocation7 + $0x21c] sm:$0xff]
        %v4428 = vld [vmem:[#allocation7 + $0x224] sm:$0xf]
        %v4429 = vld [vmem:[#allocation7 + $0x228] sm:$0xff]
        %v4430 = vld [vmem:[#allocation7 + $0x230] sm:$0xf]
        %v4431 = vld [vmem:[#allocation7 + $0x234] sm:$0xff]
        %v4432 = vld [vmem:[#allocation7 + $0x23c] sm:$0xf]
        %v4433 = vld [vmem:[#allocation7 + $0x240] sm:$0xff]
        %v4434 = vld [vmem:[#allocation7 + $0x248] sm:$0xf]
        %v4435 = vld [vmem:[#allocation7 + $0x24c] sm:$0xff]
        %v4436 = vld [vmem:[#allocation7 + $0x254] sm:$0xf]
        %v4437 = vld [vmem:[#allocation7 + $0x258] sm:$0xff]
        %v4438 = vld [vmem:[#allocation7 + $0x260] sm:$0xf]
        %v4439 = vld [vmem:[#allocation7 + $0x264] sm:$0xff]
        %v4440 = vld [vmem:[#allocation7 + $0x26c] sm:$0xf]
        %v4441 = vld [vmem:[#allocation7 + $0x270] sm:$0xff]
        %v4442 = vld [vmem:[#allocation7 + $0x278] sm:$0xf]
        %v4443 = vld [vmem:[#allocation7 + $0x27c] sm:$0xff]
        %v4444 = vld [vmem:[#allocation7 + $0x284] sm:$0xf]
        %v4445 = vld [vmem:[#allocation7 + $0x288] sm:$0xff]
        %v4446 = vld [vmem:[#allocation7 + $0x290] sm:$0xf]
        %v4447 = vld [vmem:[#allocation7 + $0x294] sm:$0xff]
        %v4448 = vld [vmem:[#allocation7 + $0x29c] sm:$0xf]
        %v4449 = vld [vmem:[#allocation7 + $0x2a0] sm:$0xff]
        %v4450 = vld [vmem:[#allocation7 + $0x2a8] sm:$0xf]
        %v4451 = vld [vmem:[#allocation7 + $0x2ac] sm:$0xff]
        %v4452 = vld [vmem:[#allocation7 + $0x2b4] sm:$0xf]
        %v4453 = vld [vmem:[#allocation7 + $0x2b8] sm:$0xff]
        %v4454 = vld [vmem:[#allocation7 + $0x2c0] sm:$0xf]
        %v4455 = vld [vmem:[#allocation7 + $0x2c4] sm:$0xff]
        %v4456 = vld [vmem:[#allocation7 + $0x2cc] sm:$0xf]
        %v4457 = vld [vmem:[#allocation7 + $0x2d0] sm:$0xff]
        %v4458 = vld [vmem:[#allocation7 + $0x2d8] sm:$0xf]
        %v4459 = vld [vmem:[#allocation7 + $0x2dc] sm:$0xff]
        %v4460 = vld [vmem:[#allocation7 + $0x2e4] sm:$0xf]
        %v4461 = vld [vmem:[#allocation7 + $0x2e8] sm:$0xff]
        %v4462 = vld [vmem:[#allocation7 + $0x2f0] sm:$0xf]
        %v4463 = vld [vmem:[#allocation7 + $0x2f4] sm:$0xff]
        %v4464 = vld [vmem:[#allocation7 + $0x2fc] sm:$0xf]
        %v4465 = vld [vmem:[#allocation7 + $0x300] sm:$0xff]
        %v4466 = vld [vmem:[#allocation7 + $0x308] sm:$0xf]
        %v4467 = vld [vmem:[#allocation7 + $0x30c] sm:$0xff]
        %v4468 = vld [vmem:[#allocation7 + $0x314] sm:$0xf]
        %v4469 = vld [vmem:[#allocation7 + $0x318] sm:$0xff]
        %v4470 = vld [vmem:[#allocation7 + $0x320] sm:$0xf]
        %v4471 = vld [vmem:[#allocation7 + $0x324] sm:$0xff]
        %v4472 = vld [vmem:[#allocation7 + $0x32c] sm:$0xf]
        %v4473 = vld [vmem:[#allocation7 + $0x330] sm:$0xff]
        %v4474 = vld [vmem:[#allocation7 + $0x338] sm:$0xf]
        %v4475 = vld [vmem:[#allocation7 + $0x33c] sm:$0xff]
        %v4476 = vld [vmem:[#allocation7 + $0x344] sm:$0xf]
        %v4477 = vld [vmem:[#allocation7 + $0x348] sm:$0xff]
        %v4478 = vld [vmem:[#allocation7 + $0x350] sm:$0xf]
        %v4479 = vld [vmem:[#allocation7 + $0x354] sm:$0xff]
        %v4480 = vld [vmem:[#allocation7 + $0x35c] sm:$0xf]
        %v4481 = vld [vmem:[#allocation7 + $0x360] sm:$0xff]
        %v4482 = vld [vmem:[#allocation7 + $0x368] sm:$0xf]
        %v4483 = vld [vmem:[#allocation7 + $0x36c] sm:$0xff]
        %v4484 = vld [vmem:[#allocation7 + $0x374] sm:$0xf]
        %v4485 = vld [vmem:[#allocation7 + $0x378] sm:$0xff]
        %v4486 = vld [vmem:[#allocation7 + $0x380] sm:$0xf]
        %v4487 = vld [vmem:[#allocation7 + $0x384] sm:$0xff]
        %v4488 = vld [vmem:[#allocation7 + $0x38c] sm:$0xf]
        %v4489 = vld [vmem:[#allocation7 + $0x390] sm:$0xff]
        %v4490 = vld [vmem:[#allocation7 + $0x398] sm:$0xf]
        %v4491 = vld [vmem:[#allocation7 + $0x39c] sm:$0xff]
        %v4492 = vld [vmem:[#allocation7 + $0x3a4] sm:$0xf]
        %v4493 = vld [vmem:[#allocation7 + $0x3a8] sm:$0xff]
        %v4494 = vld [vmem:[#allocation7 + $0x3b0] sm:$0xf]
        %v4495 = vld [vmem:[#allocation7 + $0x3b4] sm:$0xff]
        %v4496 = vld [vmem:[#allocation7 + $0x3bc] sm:$0xf]
        %v4497 = vld [vmem:[#allocation7 + $0x3c0] sm:$0xff]
        %v4498 = vld [vmem:[#allocation7 + $0x3c8] sm:$0xf]
        %v4499 = vld [vmem:[#allocation7 + $0x3cc] sm:$0xff]
        %v4500 = vld [vmem:[#allocation7 + $0x3d4] sm:$0xf]
        %v4501 = vld [vmem:[#allocation7 + $0x3d8] sm:$0xff]
        %v4502 = vld [vmem:[#allocation7 + $0x3e0] sm:$0xf]
        %v4503 = vld [vmem:[#allocation7 + $0x3e4] sm:$0xff]
        %v4504 = vld [vmem:[#allocation7 + $0x3ec] sm:$0xf]
        %v4505 = vld [vmem:[#allocation7 + $0x3f0] sm:$0xff]
        %v4506 = vld [vmem:[#allocation7 + $0x3f8] sm:$0xf]
        %v4507 = vld [vmem:[#allocation7 + $0x3fc] sm:$0xff]
        %v4508 = vld [vmem:[#allocation7 + $0x404] sm:$0xf]
        %v4509 = vld [vmem:[#allocation7 + $0x408] sm:$0xff]
        %v4510 = vld [vmem:[#allocation7 + $0x410] sm:$0xf]
        %v4511 = vld [vmem:[#allocation7 + $0x414] sm:$0xff]
        %v4512 = vld [vmem:[#allocation7 + $0x41c] sm:$0xf]
        %v4513 = vld [vmem:[#allocation7 + $0x420] sm:$0xff]
        %v4514 = vld [vmem:[#allocation7 + $0x428] sm:$0xf]
        %v4515 = vld [vmem:[#allocation7 + $0x42c] sm:$0xff]
        %v4516 = vld [vmem:[#allocation7 + $0x434] sm:$0xf]
        %v4517 = vld [vmem:[#allocation7 + $0x438] sm:$0xff]
        %v4518 = vld [vmem:[#allocation7 + $0x440] sm:$0xf]
        %v4519 = vld [vmem:[#allocation7 + $0x444] sm:$0xff]
        %v4520 = vld [vmem:[#allocation7 + $0x44c] sm:$0xf]
        %v4521 = vld [vmem:[#allocation7 + $0x450] sm:$0xff]
        %v4522 = vld [vmem:[#allocation7 + $0x458] sm:$0xf]
        %v4523 = vld [vmem:[#allocation7 + $0x45c] sm:$0xff]
        %v4524 = vld [vmem:[#allocation7 + $0x464] sm:$0xf]
        %v4525 = vld [vmem:[#allocation7 + $0x468] sm:$0xff]
        %v4526 = vld [vmem:[#allocation7 + $0x470] sm:$0xf]
        %v4527 = vld [vmem:[#allocation7 + $0x474] sm:$0xff]
        %v4528 = vld [vmem:[#allocation7 + $0x47c] sm:$0xf]
        %v4529 = vld [vmem:[#allocation8] sm:$0x7]
        %v4531 = vlaneseq
        %v4532 = vshrl.u32 %v4531, 7
        %v4533 = vsub.s32 0, %v4532
        %v4534 = vrot.slane %v4529, %v4533
        %v4535 = vlaneseq
        %v4536 = vshrl.u32 %v4535, 7
        %v4537 = vsub.s32 1, %v4536
        %v4538 = vrot.slane %v4529, %v4537
        %v4539 = vlaneseq
        %v4540 = vshrl.u32 %v4539, 7
        %v4541 = vsub.s32 2, %v4540
        %v4542 = vrot.slane %v4529, %v4541
        %v4738 = vunpack.c.l.b16 %v4337
        %v4739 = vunpack.c.h.b16 %v4337
        %v4740 = vunpack.c.l.b16 %v4338
        %v4741 = vunpack.c.l.b16 %v4339
        %v4742 = vunpack.c.h.b16 %v4339
        %v4743 = vunpack.c.l.b16 %v4340
        %v4744 = vunpack.c.l.b16 %v4341
        %v4745 = vunpack.c.h.b16 %v4341
        %v4746 = vunpack.c.l.b16 %v4342
        %v4747 = vunpack.c.l.b16 %v4343
        %v4748 = vunpack.c.h.b16 %v4343
        %v4749 = vunpack.c.l.b16 %v4344
        %v4750 = vunpack.c.l.b16 %v4345
        %v4751 = vunpack.c.h.b16 %v4345
        %v4752 = vunpack.c.l.b16 %v4346
        %v4753 = vunpack.c.l.b16 %v4347
        %v4754 = vunpack.c.h.b16 %v4347
        %v4755 = vunpack.c.l.b16 %v4348
        %v4756 = vunpack.c.l.b16 %v4349
        %v4757 = vunpack.c.h.b16 %v4349
        %v4758 = vunpack.c.l.b16 %v4350
        %v4759 = vunpack.c.l.b16 %v4351
        %v4760 = vunpack.c.h.b16 %v4351
        %v4761 = vunpack.c.l.b16 %v4352
        %v4762 = vunpack.c.l.b16 %v4353
        %v4763 = vunpack.c.h.b16 %v4353
        %v4764 = vunpack.c.l.b16 %v4354
        %v4765 = vunpack.c.l.b16 %v4355
        %v4766 = vunpack.c.h.b16 %v4355
        %v4767 = vunpack.c.l.b16 %v4356
        %v4768 = vunpack.c.l.b16 %v4357
        %v4769 = vunpack.c.h.b16 %v4357
        %v4770 = vunpack.c.l.b16 %v4358
        %v4771 = vunpack.c.l.b16 %v4359
        %v4772 = vunpack.c.h.b16 %v4359
        %v4773 = vunpack.c.l.b16 %v4360
        %v4774 = vunpack.c.l.b16 %v4361
        %v4775 = vunpack.c.h.b16 %v4361
        %v4776 = vunpack.c.l.b16 %v4362
        %v4777 = vunpack.c.l.b16 %v4363
        %v4778 = vunpack.c.h.b16 %v4363
        %v4779 = vunpack.c.l.b16 %v4364
        %v4780 = vunpack.c.l.b16 %v4365
        %v4781 = vunpack.c.h.b16 %v4365
        %v4782 = vunpack.c.l.b16 %v4366
        %v4783 = vunpack.c.l.b16 %v4367
        %v4784 = vunpack.c.h.b16 %v4367
        %v4785 = vunpack.c.l.b16 %v4368
        %v4786 = vunpack.c.l.b16 %v4369
        %v4787 = vunpack.c.h.b16 %v4369
        %v4788 = vunpack.c.l.b16 %v4370
        %v4789 = vunpack.c.l.b16 %v4371
        %v4790 = vunpack.c.h.b16 %v4371
        %v4791 = vunpack.c.l.b16 %v4372
        %v4792 = vunpack.c.l.b16 %v4373
        %v4793 = vunpack.c.h.b16 %v4373
        %v4794 = vunpack.c.l.b16 %v4374
        %v4795 = vunpack.c.l.b16 %v4375
        %v4796 = vunpack.c.h.b16 %v4375
        %v4797 = vunpack.c.l.b16 %v4376
        %v4798 = vunpack.c.l.b16 %v4377
        %v4799 = vunpack.c.h.b16 %v4377
        %v4800 = vunpack.c.l.b16 %v4378
        %v4801 = vunpack.c.l.b16 %v4379
        %v4802 = vunpack.c.h.b16 %v4379
        %v4803 = vunpack.c.l.b16 %v4380
        %v4804 = vunpack.c.l.b16 %v4381
        %v4805 = vunpack.c.h.b16 %v4381
        %v4806 = vunpack.c.l.b16 %v4382
        %v4807 = vunpack.c.l.b16 %v4383
        %v4808 = vunpack.c.h.b16 %v4383
        %v4809 = vunpack.c.l.b16 %v4384
        %v4810 = vunpack.c.l.b16 %v4385
        %v4811 = vunpack.c.h.b16 %v4385
        %v4812 = vunpack.c.l.b16 %v4386
        %v4813 = vunpack.c.l.b16 %v4387
        %v4814 = vunpack.c.h.b16 %v4387
        %v4815 = vunpack.c.l.b16 %v4388
        %v4816 = vunpack.c.l.b16 %v4389
        %v4817 = vunpack.c.h.b16 %v4389
        %v4818 = vunpack.c.l.b16 %v4390
        %v4819 = vunpack.c.l.b16 %v4391
        %v4820 = vunpack.c.h.b16 %v4391
        %v4821 = vunpack.c.l.b16 %v4392
        %v4822 = vunpack.c.l.b16 %v4393
        %v4823 = vunpack.c.h.b16 %v4393
        %v4824 = vunpack.c.l.b16 %v4394
        %v4825 = vunpack.c.l.b16 %v4395
        %v4826 = vunpack.c.h.b16 %v4395
        %v4827 = vunpack.c.l.b16 %v4396
        %v4828 = vunpack.c.l.b16 %v4397
        %v4829 = vunpack.c.h.b16 %v4397
        %v4830 = vunpack.c.l.b16 %v4398
        %v4831 = vunpack.c.l.b16 %v4399
        %v4832 = vunpack.c.h.b16 %v4399
        %v4833 = vunpack.c.l.b16 %v4400
        %v4834 = vunpack.c.l.b16 %v4401
        %v4835 = vunpack.c.h.b16 %v4401
        %v4836 = vunpack.c.l.b16 %v4402
        %v4837 = vunpack.c.l.b16 %v4403
        %v4838 = vunpack.c.h.b16 %v4403
        %v4839 = vunpack.c.l.b16 %v4404
        %v4840 = vunpack.c.l.b16 %v4405
        %v4841 = vunpack.c.h.b16 %v4405
        %v4842 = vunpack.c.l.b16 %v4406
        %v4843 = vunpack.c.l.b16 %v4407
        %v4844 = vunpack.c.h.b16 %v4407
        %v4845 = vunpack.c.l.b16 %v4408
        %v4846 = vunpack.c.l.b16 %v4409
        %v4847 = vunpack.c.h.b16 %v4409
        %v4848 = vunpack.c.l.b16 %v4410
        %v4849 = vunpack.c.l.b16 %v4411
        %v4850 = vunpack.c.h.b16 %v4411
        %v4851 = vunpack.c.l.b16 %v4412
        %v4852 = vunpack.c.l.b16 %v4413
        %v4853 = vunpack.c.h.b16 %v4413
        %v4854 = vunpack.c.l.b16 %v4414
        %v4855 = vunpack.c.l.b16 %v4415
        %v4856 = vunpack.c.h.b16 %v4415
        %v4857 = vunpack.c.l.b16 %v4416
        %v4858 = vunpack.c.l.b16 %v4417
        %v4859 = vunpack.c.h.b16 %v4417
        %v4860 = vunpack.c.l.b16 %v4418
        %v4861 = vunpack.c.l.b16 %v4419
        %v4862 = vunpack.c.h.b16 %v4419
        %v4863 = vunpack.c.l.b16 %v4420
        %v4864 = vunpack.c.l.b16 %v4421
        %v4865 = vunpack.c.h.b16 %v4421
        %v4866 = vunpack.c.l.b16 %v4422
        %v4867 = vunpack.c.l.b16 %v4423
        %v4868 = vunpack.c.h.b16 %v4423
        %v4869 = vunpack.c.l.b16 %v4424
        %v4870 = vunpack.c.l.b16 %v4425
        %v4871 = vunpack.c.h.b16 %v4425
        %v4872 = vunpack.c.l.b16 %v4426
        %v4873 = vunpack.c.l.b16 %v4427
        %v4874 = vunpack.c.h.b16 %v4427
        %v4875 = vunpack.c.l.b16 %v4428
        %v4876 = vunpack.c.l.b16 %v4429
        %v4877 = vunpack.c.h.b16 %v4429
        %v4878 = vunpack.c.l.b16 %v4430
        %v4879 = vunpack.c.l.b16 %v4431
        %v4880 = vunpack.c.h.b16 %v4431
        %v4881 = vunpack.c.l.b16 %v4432
        %v4882 = vunpack.c.l.b16 %v4433
        %v4883 = vunpack.c.h.b16 %v4433
        %v4884 = vunpack.c.l.b16 %v4434
        %v4885 = vunpack.c.l.b16 %v4435
        %v4886 = vunpack.c.h.b16 %v4435
        %v4887 = vunpack.c.l.b16 %v4436
        %v4888 = vunpack.c.l.b16 %v4437
        %v4889 = vunpack.c.h.b16 %v4437
        %v4890 = vunpack.c.l.b16 %v4438
        %v4891 = vunpack.c.l.b16 %v4439
        %v4892 = vunpack.c.h.b16 %v4439
        %v4893 = vunpack.c.l.b16 %v4440
        %v4894 = vunpack.c.l.b16 %v4441
        %v4895 = vunpack.c.h.b16 %v4441
        %v4896 = vunpack.c.l.b16 %v4442
        %v4897 = vunpack.c.l.b16 %v4443
        %v4898 = vunpack.c.h.b16 %v4443
        %v4899 = vunpack.c.l.b16 %v4444
        %v4900 = vunpack.c.l.b16 %v4445
        %v4901 = vunpack.c.h.b16 %v4445
        %v4902 = vunpack.c.l.b16 %v4446
        %v4903 = vunpack.c.l.b16 %v4447
        %v4904 = vunpack.c.h.b16 %v4447
        %v4905 = vunpack.c.l.b16 %v4448
        %v4906 = vunpack.c.l.b16 %v4449
        %v4907 = vunpack.c.h.b16 %v4449
        %v4908 = vunpack.c.l.b16 %v4450
        %v4909 = vunpack.c.l.b16 %v4451
        %v4910 = vunpack.c.h.b16 %v4451
        %v4911 = vunpack.c.l.b16 %v4452
        %v4912 = vunpack.c.l.b16 %v4453
        %v4913 = vunpack.c.h.b16 %v4453
        %v4914 = vunpack.c.l.b16 %v4454
        %v4915 = vunpack.c.l.b16 %v4455
        %v4916 = vunpack.c.h.b16 %v4455
        %v4917 = vunpack.c.l.b16 %v4456
        %v4918 = vunpack.c.l.b16 %v4457
        %v4919 = vunpack.c.h.b16 %v4457
        %v4920 = vunpack.c.l.b16 %v4458
        %v4921 = vunpack.c.l.b16 %v4459
        %v4922 = vunpack.c.h.b16 %v4459
        %v4923 = vunpack.c.l.b16 %v4460
        %v4924 = vunpack.c.l.b16 %v4461
        %v4925 = vunpack.c.h.b16 %v4461
        %v4926 = vunpack.c.l.b16 %v4462
        %v4927 = vunpack.c.l.b16 %v4463
        %v4928 = vunpack.c.h.b16 %v4463
        %v4929 = vunpack.c.l.b16 %v4464
        %v4930 = vunpack.c.l.b16 %v4465
        %v4931 = vunpack.c.h.b16 %v4465
        %v4932 = vunpack.c.l.b16 %v4466
        %v4933 = vunpack.c.l.b16 %v4467
        %v4934 = vunpack.c.h.b16 %v4467
        %v4935 = vunpack.c.l.b16 %v4468
        %v4936 = vunpack.c.l.b16 %v4469
        %v4937 = vunpack.c.h.b16 %v4469
        %v4938 = vunpack.c.l.b16 %v4470
        %v4939 = vunpack.c.l.b16 %v4471
        %v4940 = vunpack.c.h.b16 %v4471
        %v4941 = vunpack.c.l.b16 %v4472
        %v4942 = vunpack.c.l.b16 %v4473
        %v4943 = vunpack.c.h.b16 %v4473
        %v4944 = vunpack.c.l.b16 %v4474
        %v4945 = vunpack.c.l.b16 %v4475
        %v4946 = vunpack.c.h.b16 %v4475
        %v4947 = vunpack.c.l.b16 %v4476
        %v4948 = vunpack.c.l.b16 %v4477
        %v4949 = vunpack.c.h.b16 %v4477
        %v4950 = vunpack.c.l.b16 %v4478
        %v4951 = vunpack.c.l.b16 %v4479
        %v4952 = vunpack.c.h.b16 %v4479
        %v4953 = vunpack.c.l.b16 %v4480
        %v4954 = vunpack.c.l.b16 %v4481
        %v4955 = vunpack.c.h.b16 %v4481
        %v4956 = vunpack.c.l.b16 %v4482
        %v4957 = vunpack.c.l.b16 %v4483
        %v4958 = vunpack.c.h.b16 %v4483
        %v4959 = vunpack.c.l.b16 %v4484
        %v4960 = vunpack.c.l.b16 %v4485
        %v4961 = vunpack.c.h.b16 %v4485
        %v4962 = vunpack.c.l.b16 %v4486
        %v4963 = vunpack.c.l.b16 %v4487
        %v4964 = vunpack.c.h.b16 %v4487
        %v4965 = vunpack.c.l.b16 %v4488
        %v4966 = vunpack.c.l.b16 %v4489
        %v4967 = vunpack.c.h.b16 %v4489
        %v4968 = vunpack.c.l.b16 %v4490
        %v4969 = vunpack.c.l.b16 %v4491
        %v4970 = vunpack.c.h.b16 %v4491
        %v4971 = vunpack.c.l.b16 %v4492
        %v4972 = vunpack.c.l.b16 %v4493
        %v4973 = vunpack.c.h.b16 %v4493
        %v4974 = vunpack.c.l.b16 %v4494
        %v4975 = vunpack.c.l.b16 %v4495
        %v4976 = vunpack.c.h.b16 %v4495
        %v4977 = vunpack.c.l.b16 %v4496
        %v4978 = vunpack.c.l.b16 %v4497
        %v4979 = vunpack.c.h.b16 %v4497
        %v4980 = vunpack.c.l.b16 %v4498
        %v4981 = vunpack.c.l.b16 %v4499
        %v4982 = vunpack.c.h.b16 %v4499
        %v4983 = vunpack.c.l.b16 %v4500
        %v4984 = vunpack.c.l.b16 %v4501
        %v4985 = vunpack.c.h.b16 %v4501
        %v4986 = vunpack.c.l.b16 %v4502
        %v4987 = vunpack.c.l.b16 %v4503
        %v4988 = vunpack.c.h.b16 %v4503
        %v4989 = vunpack.c.l.b16 %v4504
        %v4990 = vunpack.c.l.b16 %v4505
        %v4991 = vunpack.c.h.b16 %v4505
        %v4992 = vunpack.c.l.b16 %v4506
        %v4993 = vunpack.c.l.b16 %v4507
        %v4994 = vunpack.c.h.b16 %v4507
        %v4995 = vunpack.c.l.b16 %v4508
        %v4996 = vunpack.c.l.b16 %v4509
        %v4997 = vunpack.c.h.b16 %v4509
        %v4998 = vunpack.c.l.b16 %v4510
        %v4999 = vunpack.c.l.b16 %v4511
        %v5000 = vunpack.c.h.b16 %v4511
        %v5001 = vunpack.c.l.b16 %v4512
        %v5002 = vunpack.c.l.b16 %v4513
        %v5003 = vunpack.c.h.b16 %v4513
        %v5004 = vunpack.c.l.b16 %v4514
        %v5005 = vunpack.c.l.b16 %v4515
        %v5006 = vunpack.c.h.b16 %v4515
        %v5007 = vunpack.c.l.b16 %v4516
        %v5008 = vunpack.c.l.b16 %v4517
        %v5009 = vunpack.c.h.b16 %v4517
        %v5010 = vunpack.c.l.b16 %v4518
        %v5011 = vunpack.c.l.b16 %v4519
        %v5012 = vunpack.c.h.b16 %v4519
        %v5013 = vunpack.c.l.b16 %v4520
        %v5014 = vunpack.c.l.b16 %v4521
        %v5015 = vunpack.c.h.b16 %v4521
        %v5016 = vunpack.c.l.b16 %v4522
        %v5017 = vunpack.c.l.b16 %v4523
        %v5018 = vunpack.c.h.b16 %v4523
        %v5019 = vunpack.c.l.b16 %v4524
        %v5020 = vunpack.c.l.b16 %v4525
        %v5021 = vunpack.c.h.b16 %v4525
        %v5022 = vunpack.c.l.b16 %v4526
        %v5023 = vunpack.c.l.b16 %v4527
        %v5024 = vunpack.c.h.b16 %v4527
        %v5025 = vunpack.c.l.b16 %v4528
        %v5026 = vpack.c.b16 %v4741, %v4738
        %v5027 = vpack.c.b16 %v4742, %v4739
        %v5028 = vpack.c.b16 %v4743, %v4740
        %v5029 = vpack.c.b16 %v4747, %v4744
        %v5030 = vpack.c.b16 %v4748, %v4745
        %v5031 = vpack.c.b16 %v4749, %v4746
        %v5032 = vpack.c.b16 %v4753, %v4750
        %v5033 = vpack.c.b16 %v4754, %v4751
        %v5034 = vpack.c.b16 %v4755, %v4752
        %v5035 = vpack.c.b16 %v4759, %v4756
        %v5036 = vpack.c.b16 %v4760, %v4757
        %v5037 = vpack.c.b16 %v4761, %v4758
        %v5038 = vpack.c.b16 %v4765, %v4762
        %v5039 = vpack.c.b16 %v4766, %v4763
        %v5040 = vpack.c.b16 %v4767, %v4764
        %v5041 = vpack.c.b16 %v4771, %v4768
        %v5042 = vpack.c.b16 %v4772, %v4769
        %v5043 = vpack.c.b16 %v4773, %v4770
        %v5044 = vpack.c.b16 %v4777, %v4774
        %v5045 = vpack.c.b16 %v4778, %v4775
        %v5046 = vpack.c.b16 %v4779, %v4776
        %v5047 = vpack.c.b16 %v4783, %v4780
        %v5048 = vpack.c.b16 %v4784, %v4781
        %v5049 = vpack.c.b16 %v4785, %v4782
        %v5050 = vpack.c.b16 %v4789, %v4786
        %v5051 = vpack.c.b16 %v4790, %v4787
        %v5052 = vpack.c.b16 %v4791, %v4788
        %v5053 = vpack.c.b16 %v4795, %v4792
        %v5054 = vpack.c.b16 %v4796, %v4793
        %v5055 = vpack.c.b16 %v4797, %v4794
        %v5056 = vpack.c.b16 %v4801, %v4798
        %v5057 = vpack.c.b16 %v4802, %v4799
        %v5058 = vpack.c.b16 %v4803, %v4800
        %v5059 = vpack.c.b16 %v4807, %v4804
        %v5060 = vpack.c.b16 %v4808, %v4805
        %v5061 = vpack.c.b16 %v4809, %v4806
        %v5062 = vpack.c.b16 %v4813, %v4810
        %v5063 = vpack.c.b16 %v4814, %v4811
        %v5064 = vpack.c.b16 %v4815, %v4812
        %v5065 = vpack.c.b16 %v4819, %v4816
        %v5066 = vpack.c.b16 %v4820, %v4817
        %v5067 = vpack.c.b16 %v4821, %v4818
        %v5068 = vpack.c.b16 %v4825, %v4822
        %v5069 = vpack.c.b16 %v4826, %v4823
        %v5070 = vpack.c.b16 %v4827, %v4824
        %v5071 = vpack.c.b16 %v4831, %v4828
        %v5072 = vpack.c.b16 %v4832, %v4829
        %v5073 = vpack.c.b16 %v4833, %v4830
        %v5074 = vpack.c.b16 %v4837, %v4834
        %v5075 = vpack.c.b16 %v4838, %v4835
        %v5076 = vpack.c.b16 %v4839, %v4836
        %v5077 = vpack.c.b16 %v4843, %v4840
        %v5078 = vpack.c.b16 %v4844, %v4841
        %v5079 = vpack.c.b16 %v4845, %v4842
        %v5080 = vpack.c.b16 %v4849, %v4846
        %v5081 = vpack.c.b16 %v4850, %v4847
        %v5082 = vpack.c.b16 %v4851, %v4848
        %v5083 = vpack.c.b16 %v4855, %v4852
        %v5084 = vpack.c.b16 %v4856, %v4853
        %v5085 = vpack.c.b16 %v4857, %v4854
        %v5086 = vpack.c.b16 %v4861, %v4858
        %v5087 = vpack.c.b16 %v4862, %v4859
        %v5088 = vpack.c.b16 %v4863, %v4860
        %v5089 = vpack.c.b16 %v4867, %v4864
        %v5090 = vpack.c.b16 %v4868, %v4865
        %v5091 = vpack.c.b16 %v4869, %v4866
        %v5092 = vpack.c.b16 %v4873, %v4870
        %v5093 = vpack.c.b16 %v4874, %v4871
        %v5094 = vpack.c.b16 %v4875, %v4872
        %v5095 = vpack.c.b16 %v4879, %v4876
        %v5096 = vpack.c.b16 %v4880, %v4877
        %v5097 = vpack.c.b16 %v4881, %v4878
        %v5098 = vpack.c.b16 %v4885, %v4882
        %v5099 = vpack.c.b16 %v4886, %v4883
        %v5100 = vpack.c.b16 %v4887, %v4884
        %v5101 = vpack.c.b16 %v4891, %v4888
        %v5102 = vpack.c.b16 %v4892, %v4889
        %v5103 = vpack.c.b16 %v4893, %v4890
        %v5104 = vpack.c.b16 %v4897, %v4894
        %v5105 = vpack.c.b16 %v4898, %v4895
        %v5106 = vpack.c.b16 %v4899, %v4896
        %v5107 = vpack.c.b16 %v4903, %v4900
        %v5108 = vpack.c.b16 %v4904, %v4901
        %v5109 = vpack.c.b16 %v4905, %v4902
        %v5110 = vpack.c.b16 %v4909, %v4906
        %v5111 = vpack.c.b16 %v4910, %v4907
        %v5112 = vpack.c.b16 %v4911, %v4908
        %v5113 = vpack.c.b16 %v4915, %v4912
        %v5114 = vpack.c.b16 %v4916, %v4913
        %v5115 = vpack.c.b16 %v4917, %v4914
        %v5116 = vpack.c.b16 %v4921, %v4918
        %v5117 = vpack.c.b16 %v4922, %v4919
        %v5118 = vpack.c.b16 %v4923, %v4920
        %v5119 = vpack.c.b16 %v4927, %v4924
        %v5120 = vpack.c.b16 %v4928, %v4925
        %v5121 = vpack.c.b16 %v4929, %v4926
        %v5122 = vpack.c.b16 %v4933, %v4930
        %v5123 = vpack.c.b16 %v4934, %v4931
        %v5124 = vpack.c.b16 %v4935, %v4932
        %v5125 = vpack.c.b16 %v4939, %v4936
        %v5126 = vpack.c.b16 %v4940, %v4937
        %v5127 = vpack.c.b16 %v4941, %v4938
        %v5128 = vpack.c.b16 %v4945, %v4942
        %v5129 = vpack.c.b16 %v4946, %v4943
        %v5130 = vpack.c.b16 %v4947, %v4944
        %v5131 = vpack.c.b16 %v4951, %v4948
        %v5132 = vpack.c.b16 %v4952, %v4949
        %v5133 = vpack.c.b16 %v4953, %v4950
        %v5134 = vpack.c.b16 %v4957, %v4954
        %v5135 = vpack.c.b16 %v4958, %v4955
        %v5136 = vpack.c.b16 %v4959, %v4956
        %v5137 = vpack.c.b16 %v4963, %v4960
        %v5138 = vpack.c.b16 %v4964, %v4961
        %v5139 = vpack.c.b16 %v4965, %v4962
        %v5140 = vpack.c.b16 %v4969, %v4966
        %v5141 = vpack.c.b16 %v4970, %v4967
        %v5142 = vpack.c.b16 %v4971, %v4968
        %v5143 = vpack.c.b16 %v4975, %v4972
        %v5144 = vpack.c.b16 %v4976, %v4973
        %v5145 = vpack.c.b16 %v4977, %v4974
        %v5146 = vpack.c.b16 %v4981, %v4978
        %v5147 = vpack.c.b16 %v4982, %v4979
        %v5148 = vpack.c.b16 %v4983, %v4980
        %v5149 = vpack.c.b16 %v4987, %v4984
        %v5150 = vpack.c.b16 %v4988, %v4985
        %v5151 = vpack.c.b16 %v4989, %v4986
        %v5152 = vpack.c.b16 %v4993, %v4990
        %v5153 = vpack.c.b16 %v4994, %v4991
        %v5154 = vpack.c.b16 %v4995, %v4992
        %v5155 = vpack.c.b16 %v4999, %v4996
        %v5156 = vpack.c.b16 %v5000, %v4997
        %v5157 = vpack.c.b16 %v5001, %v4998
        %v5158 = vpack.c.b16 %v5005, %v5002
        %v5159 = vpack.c.b16 %v5006, %v5003
        %v5160 = vpack.c.b16 %v5007, %v5004
        %v5161 = vpack.c.b16 %v5011, %v5008
        %v5162 = vpack.c.b16 %v5012, %v5009
        %v5163 = vpack.c.b16 %v5013, %v5010
        %v5164 = vpack.c.b16 %v5017, %v5014
        %v5165 = vpack.c.b16 %v5018, %v5015
        %v5166 = vpack.c.b16 %v5019, %v5016
        %v5167 = vpack.c.b16 %v5023, %v5020
        %v5168 = vpack.c.b16 %v5024, %v5021
        %v5169 = vpack.c.b16 %v5025, %v5022
        %5314 = vmatprep.subr.bf16.mxu0 %v5027
        %5315 = vmatpush1.bf16.msra.mxu0 %v5026
        %5316 = vmatprep.subr.bf16.mxu0 %v5030
        %5317 = vmatpush1.bf16.msra.mxu0 %v5029
        %5318 = vmatprep.subr.bf16.mxu0 %v5033
        %5319 = vmatpush1.bf16.msra.mxu0 %v5032
        %5320 = vmatprep.subr.bf16.mxu0 %v5036
        %5321 = vmatpush1.bf16.msra.mxu0 %v5035
        %5322 = vmatprep.subr.bf16.mxu0 %v5039
        %5323 = vmatpush1.bf16.msra.mxu0 %v5038
        %5324 = vmatprep.subr.bf16.mxu0 %v5042
        %5325 = vmatpush1.bf16.msra.mxu0 %v5041
        %5326 = vmatprep.subr.bf16.mxu0 %v5045
        %5327 = vmatpush1.bf16.msra.mxu0 %v5044
        %5328 = vmatprep.subr.bf16.mxu0 %v5048
        %5329 = vmatpush1.bf16.msra.mxu0 %v5047
        %5330 = vmatprep.subr.bf16.mxu0 %v5051
        %5331 = vmatpush1.bf16.msra.mxu0 %v5050
        %5332 = vmatprep.subr.bf16.mxu0 %v5054
        %5333 = vmatpush1.bf16.msra.mxu0 %v5053
        %5334 = vmatprep.subr.bf16.mxu0 %v5057
        %5335 = vmatpush1.bf16.msra.mxu0 %v5056
        %5336 = vmatprep.subr.bf16.mxu0 %v5060
        %5337 = vmatpush1.bf16.msra.mxu0 %v5059
        %5338 = vmatprep.subr.bf16.mxu0 %v5063
        %5339 = vmatpush1.bf16.msra.mxu0 %v5062
        %5340 = vmatprep.subr.bf16.mxu0 %v5066
        %5341 = vmatpush1.bf16.msra.mxu0 %v5065
        %5342 = vmatprep.subr.bf16.mxu0 %v5069
        %5343 = vmatpush1.bf16.msra.mxu0 %v5068
        %5344 = vmatprep.subr.bf16.mxu0 %v5072
        %5345 = vmatpush1.bf16.msra.mxu0 %v5071
        %5346 = vmatprep.mubr.bf16.mxu0 %v4332
        %5347 = vmatmul.mubr.bf16.gmra.mrb[0].mxu0 %v4331
        %v5348 = vpop.f32.mrb[0].mxu0
        %v5349 = vadd.f32 %v4534, %v5348
        %v5350 = vpop.f32.mrb[0].mxu0
        %v5351 = vadd.f32 %v4538, %v5350
        %v5352 = vpop.f32.mrb[0].mxu0
        %v5353 = vadd.f32 %v4534, %v5352
        %v5354 = vpop.f32.mrb[0].mxu0
        %v5355 = vadd.f32 %v4538, %v5354
        %5356 = vdwg.mxu0
        %5357 = vmatprep.subr.bf16.mxu0 %v5075
        %5358 = vmatpush1.bf16.msra.mxu0 %v5074
        %5359 = vmatprep.subr.bf16.mxu0 %v5078
        %5360 = vmatpush1.bf16.msra.mxu0 %v5077
        %5361 = vmatprep.subr.bf16.mxu0 %v5081
        %5362 = vmatpush1.bf16.msra.mxu0 %v5080
        %5363 = vmatprep.subr.bf16.mxu0 %v5084
        %5364 = vmatpush1.bf16.msra.mxu0 %v5083
        %5365 = vmatprep.subr.bf16.mxu0 %v5087
        %5366 = vmatpush1.bf16.msra.mxu0 %v5086
        %5367 = vmatprep.subr.bf16.mxu0 %v5090
        %5368 = vmatpush1.bf16.msra.mxu0 %v5089
        %5369 = vmatprep.subr.bf16.mxu0 %v5093
        %5370 = vmatpush1.bf16.msra.mxu0 %v5092
        %5371 = vmatprep.subr.bf16.mxu0 %v5096
        %5372 = vmatpush1.bf16.msra.mxu0 %v5095
        %5373 = vmatprep.subr.bf16.mxu0 %v5099
        %5374 = vmatpush1.bf16.msra.mxu0 %v5098
        %5375 = vmatprep.subr.bf16.mxu0 %v5102
        %5376 = vmatpush1.bf16.msra.mxu0 %v5101
        %5377 = vmatprep.subr.bf16.mxu0 %v5105
        %5378 = vmatpush1.bf16.msra.mxu0 %v5104
        %5379 = vmatprep.subr.bf16.mxu0 %v5108
        %5380 = vmatpush1.bf16.msra.mxu0 %v5107
        %5381 = vmatprep.subr.bf16.mxu0 %v5111
        %5382 = vmatpush1.bf16.msra.mxu0 %v5110
        %5383 = vmatprep.subr.bf16.mxu0 %v5114
        %5384 = vmatpush1.bf16.msra.mxu0 %v5113
        %5385 = vmatprep.subr.bf16.mxu0 %v5117
        %5386 = vmatpush1.bf16.msra.mxu0 %v5116
        %5387 = vmatprep.subr.bf16.mxu0 %v5120
        %5388 = vmatpush1.bf16.msra.mxu0 %v5119
        %5389 = vmatprep.mubr.bf16.mxu0 %v4334
        %5390 = vmatmul.mubr.bf16.gmra.mrb[0].mxu0 %v4333
        %v5391 = vpop.f32.mrb[0].mxu0
        %v5392 = vadd.f32 %v5349, %v5391
        %v5393 = vpop.f32.mrb[0].mxu0
        %v5394 = vadd.f32 %v5351, %v5393
        %v5395 = vpop.f32.mrb[0].mxu0
        %v5396 = vadd.f32 %v5353, %v5395
        %v5397 = vpop.f32.mrb[0].mxu0
        %v5398 = vadd.f32 %v5355, %v5397
        %5399 = vdwg.mxu0
        %5400 = vmatprep.subr.bf16.mxu0 %v5123
        %5401 = vmatpush1.bf16.msra.mxu0 %v5122
        %5402 = vmatprep.subr.bf16.mxu0 %v5126
        %5403 = vmatpush1.bf16.msra.mxu0 %v5125
        %5404 = vmatprep.subr.bf16.mxu0 %v5129
        %5405 = vmatpush1.bf16.msra.mxu0 %v5128
        %5406 = vmatprep.subr.bf16.mxu0 %v5132
        %5407 = vmatpush1.bf16.msra.mxu0 %v5131
        %5408 = vmatprep.subr.bf16.mxu0 %v5135
        %5409 = vmatpush1.bf16.msra.mxu0 %v5134
        %5410 = vmatprep.subr.bf16.mxu0 %v5138
        %5411 = vmatpush1.bf16.msra.mxu0 %v5137
        %5412 = vmatprep.subr.bf16.mxu0 %v5141
        %5413 = vmatpush1.bf16.msra.mxu0 %v5140
        %5414 = vmatprep.subr.bf16.mxu0 %v5144
        %5415 = vmatpush1.bf16.msra.mxu0 %v5143
        %5416 = vmatprep.subr.bf16.mxu0 %v5147
        %5417 = vmatpush1.bf16.msra.mxu0 %v5146
        %5418 = vmatprep.subr.bf16.mxu0 %v5150
        %5419 = vmatpush1.bf16.msra.mxu0 %v5149
        %5420 = vmatprep.subr.bf16.mxu0 %v5153
        %5421 = vmatpush1.bf16.msra.mxu0 %v5152
        %5422 = vmatprep.subr.bf16.mxu0 %v5156
        %5423 = vmatpush1.bf16.msra.mxu0 %v5155
        %5424 = vmatprep.subr.bf16.mxu0 %v5159
        %5425 = vmatpush1.bf16.msra.mxu0 %v5158
        %5426 = vmatprep.subr.bf16.mxu0 %v5162
        %5427 = vmatpush1.bf16.msra.mxu0 %v5161
        %5428 = vmatprep.subr.bf16.mxu0 %v5165
        %5429 = vmatpush1.bf16.msra.mxu0 %v5164
        %5430 = vmatprep.subr.bf16.mxu0 %v5168
        %5431 = vmatpush1.bf16.msra.mxu0 %v5167
        %5432 = vmatprep.mubr.bf16.mxu0 %v4336
        %5433 = vmatmul.mubr.bf16.gmra.mrb[0].mxu0 %v4335
        %v5434 = vpop.f32.mrb[0].mxu0
        %v5435 = vadd.f32 %v5392, %v5434
        %v5436 = vpop.f32.mrb[0].mxu0
        %v5437 = vadd.f32 %v5394, %v5436
        %v5438 = vpop.f32.mrb[0].mxu0
        %v5439 = vadd.f32 %v5396, %v5438
        %v5440 = vpop.f32.mrb[0].mxu0
        %v5441 = vadd.f32 %v5398, %v5440
        %5442 = vdwg.mxu0
        %5443 = vmatprep.subr.bf16.mxu0 0
        %5444 = vmatpush1.bf16.msra.mxu0 %v5028
        %5445 = vmatprep.subr.bf16.mxu0 0
        %5446 = vmatpush1.bf16.msra.mxu0 %v5031
        %5447 = vmatprep.subr.bf16.mxu0 0
        %5448 = vmatpush1.bf16.msra.mxu0 %v5034
        %5449 = vmatprep.subr.bf16.mxu0 0
        %5450 = vmatpush1.bf16.msra.mxu0 %v5037
        %5451 = vmatprep.subr.bf16.mxu0 0
        %5452 = vmatpush1.bf16.msra.mxu0 %v5040
        %5453 = vmatprep.subr.bf16.mxu0 0
        %5454 = vmatpush1.bf16.msra.mxu0 %v5043
        %5455 = vmatprep.subr.bf16.mxu0 0
        %5456 = vmatpush1.bf16.msra.mxu0 %v5046
        %5457 = vmatprep.subr.bf16.mxu0 0
        %5458 = vmatpush1.bf16.msra.mxu0 %v5049
        %5459 = vmatprep.subr.bf16.mxu0 0
        %5460 = vmatpush1.bf16.msra.mxu0 %v5052
        %5461 = vmatprep.subr.bf16.mxu0 0
        %5462 = vmatpush1.bf16.msra.mxu0 %v5055
        %5463 = vmatprep.subr.bf16.mxu0 0
        %5464 = vmatpush1.bf16.msra.mxu0 %v5058
        %5465 = vmatprep.subr.bf16.mxu0 0
        %5466 = vmatpush1.bf16.msra.mxu0 %v5061
        %5467 = vmatprep.subr.bf16.mxu0 0
        %5468 = vmatpush1.bf16.msra.mxu0 %v5064
        %5469 = vmatprep.subr.bf16.mxu0 0
        %5470 = vmatpush1.bf16.msra.mxu0 %v5067
        %5471 = vmatprep.subr.bf16.mxu0 0
        %5472 = vmatpush1.bf16.msra.mxu0 %v5070
        %5473 = vmatprep.subr.bf16.mxu0 0
        %5474 = vmatpush1.bf16.msra.mxu0 %v5073
        %5475 = vmatprep.mubr.bf16.mxu0 %v4332
        %5476 = vmatmul.mubr.bf16.gmra.mrb[0].mxu0 %v4331
        %v5477 = vpop.f32.mrb[0].mxu0
        %v5478 = vadd.f32 %v4542, %v5477
        %v5479 = vpop.f32.mrb[0].mxu0
        %v5480 = vpop.f32.mrb[0].mxu0
        %v5481 = vadd.f32 %v4542, %v5480
        %v5482 = vpop.f32.mrb[0].mxu0
        %5483 = vdwg.mxu0
        %5484 = vmatprep.subr.bf16.mxu0 0
        %5485 = vmatpush1.bf16.msra.mxu0 %v5076
        %5486 = vmatprep.subr.bf16.mxu0 0
        %5487 = vmatpush1.bf16.msra.mxu0 %v5079
        %5488 = vmatprep.subr.bf16.mxu0 0
        %5489 = vmatpush1.bf16.msra.mxu0 %v5082
        %5490 = vmatprep.subr.bf16.mxu0 0
        %5491 = vmatpush1.bf16.msra.mxu0 %v5085
        %5492 = vmatprep.subr.bf16.mxu0 0
        %5493 = vmatpush1.bf16.msra.mxu0 %v5088
        %5494 = vmatprep.subr.bf16.mxu0 0
        %5495 = vmatpush1.bf16.msra.mxu0 %v5091
        %5496 = vmatprep.subr.bf16.mxu0 0
        %5497 = vmatpush1.bf16.msra.mxu0 %v5094
        %5498 = vmatprep.subr.bf16.mxu0 0
        %5499 = vmatpush1.bf16.msra.mxu0 %v5097
        %5500 = vmatprep.subr.bf16.mxu0 0
        %5501 = vmatpush1.bf16.msra.mxu0 %v5100
        %5502 = vmatprep.subr.bf16.mxu0 0
        %5503 = vmatpush1.bf16.msra.mxu0 %v5103
        %5504 = vmatprep.subr.bf16.mxu0 0
        %5505 = vmatpush1.bf16.msra.mxu0 %v5106
        %5506 = vmatprep.subr.bf16.mxu0 0
        %5507 = vmatpush1.bf16.msra.mxu0 %v5109
        %5508 = vmatprep.subr.bf16.mxu0 0
        %5509 = vmatpush1.bf16.msra.mxu0 %v5112
        %5510 = vmatprep.subr.bf16.mxu0 0
        %5511 = vmatpush1.bf16.msra.mxu0 %v5115
        %5512 = vmatprep.subr.bf16.mxu0 0
        %5513 = vmatpush1.bf16.msra.mxu0 %v5118
        %5514 = vmatprep.subr.bf16.mxu0 0
        %5515 = vmatpush1.bf16.msra.mxu0 %v5121
        %5516 = vmatprep.mubr.bf16.mxu0 %v4334
        %5517 = vmatmul.mubr.bf16.gmra.mrb[0].mxu0 %v4333
        %v5518 = vpop.f32.mrb[0].mxu0
        %v5519 = vadd.f32 %v5478, %v5518
        %v5520 = vpop.f32.mrb[0].mxu0
        %v5521 = vpop.f32.mrb[0].mxu0
        %v5522 = vadd.f32 %v5481, %v5521
        %v5523 = vpop.f32.mrb[0].mxu0
        %5524 = vdwg.mxu0
        %5525 = vmatprep.subr.bf16.mxu0 0
        %5526 = vmatpush1.bf16.msra.mxu0 %v5124
        %5527 = vmatprep.subr.bf16.mxu0 0
        %5528 = vmatpush1.bf16.msra.mxu0 %v5127
        %5529 = vmatprep.subr.bf16.mxu0 0
        %5530 = vmatpush1.bf16.msra.mxu0 %v5130
        %5531 = vmatprep.subr.bf16.mxu0 0
        %5532 = vmatpush1.bf16.msra.mxu0 %v5133
        %5533 = vmatprep.subr.bf16.mxu0 0
        %5534 = vmatpush1.bf16.msra.mxu0 %v5136
        %5535 = vmatprep.subr.bf16.mxu0 0
        %5536 = vmatpush1.bf16.msra.mxu0 %v5139
        %5537 = vmatprep.subr.bf16.mxu0 0
        %5538 = vmatpush1.bf16.msra.mxu0 %v5142
        %5539 = vmatprep.subr.bf16.mxu0 0
        %5540 = vmatpush1.bf16.msra.mxu0 %v5145
        %5541 = vmatprep.subr.bf16.mxu0 0
        %5542 = vmatpush1.bf16.msra.mxu0 %v5148
        %5543 = vmatprep.subr.bf16.mxu0 0
        %5544 = vmatpush1.bf16.msra.mxu0 %v5151
        %5545 = vmatprep.subr.bf16.mxu0 0
        %5546 = vmatpush1.bf16.msra.mxu0 %v5154
        %5547 = vmatprep.subr.bf16.mxu0 0
        %5548 = vmatpush1.bf16.msra.mxu0 %v5157
        %5549 = vmatprep.subr.bf16.mxu0 0
        %5550 = vmatpush1.bf16.msra.mxu0 %v5160
        %5551 = vmatprep.subr.bf16.mxu0 0
        %5552 = vmatpush1.bf16.msra.mxu0 %v5163
        %5553 = vmatprep.subr.bf16.mxu0 0
        %5554 = vmatpush1.bf16.msra.mxu0 %v5166
        %5555 = vmatprep.subr.bf16.mxu0 0
        %5556 = vmatpush1.bf16.msra.mxu0 %v5169
        %5557 = vmatprep.mubr.bf16.mxu0 %v4336
        %5558 = vmatmul.mubr.bf16.gmra.mrb[0].mxu0 %v4335
        %v5559 = vpop.f32.mrb[0].mxu0
        %v5560 = vadd.f32 %v5519, %v5559
        %v5561 = vpop.f32.mrb[0].mxu0
        %v5562 = vpop.f32.mrb[0].mxu0
        %v5563 = vadd.f32 %v5522, %v5562
        %v5564 = vpop.f32.mrb[0].mxu0
        %5565 = vdwg.mxu0
        %v5566 = vpack.c.bf16 %v5439, %v5435
        %v5567 = vpack.c.bf16 %v5441, %v5437
        %v5568 = vpack.c.bf16 %v5563, %v5560
        %v5572 = vunpack.c.l.b16 %v5566
        %v5573 = vunpack.c.l.b16 %v5567
        %v5574 = vunpack.c.l.b16 %v5568
        %v5575 = vunpack.c.h.b16 %v5566
        %v5576 = vunpack.c.h.b16 %v5567
        %v5577 = vunpack.c.h.b16 %v5568
        %v5578 = vpack.c.b16 %v5573, %v5572
        %v5579 = vpack.c.b16 %v5574, %v5574
        %v5580 = vpack.c.b16 %v5576, %v5575
        %v5581 = vpack.c.b16 %v5577, %v5577
        %5586 = vst [vmem:[%s257] sm:$0xff] %v5578
        %5587 = vst [vmem:[%s257 + $0x8] sm:$0xf] %v5579
        %5588 = vst [vmem:[%s257 + $0xc] sm:$0xff] %v5580
        %5589 = vst [vmem:[%s257 + $0x14] sm:$0xf] %v5581
        %s5590 = sand.u32 %s120, 1
        %s5591 = scalar_lea.sflag [#allocation4], %s5590
        %s5592 = sand.u32 %s120, 1
        %s5593 = smul.addr %s5592, 24
        %s5594 = scalar_lea.vmem [#allocation10], %s5593
        // Predicated region
        $region53: #{tpu_custom_call.1} parent=35 // pred_check
          %p5595 = pneg %p130
        $region54: #{tpu_custom_call.1} parent=35 // pred_check_branch
          %5597 = sbr.rel (%p5595) target = $region56
        $region55: #{tpu_custom_call.1} parent=35 // pred_region
          %s5599 = ssub.s32 384, 384
          %5600 = vsyncadd %s5591, %s5599
          %s5601 = smul.addr %s23, 6
          %s5602 = smul.addr %s5601, 64
          %s5603 = scalar_lea.hbm %s4, %s5602
          %s5604 = sshll.u32 %s5594, 4
          %s5605 = int_to_ptr.vmem [resolvable:$true] %s5604
          %5610 = dma.vmem_to_hbm [thread:$0]  %s5605, 384, %s5603, %s5591, 192, 192, 12
        $region56: #{tpu_custom_call.1} parent=35 // pred_fallthru
          _
      $region36: #{tpu_custom_call.1} parent=5 // pred_fallthru
        _
      %p5611 = scmp.le.s32.totalorder 2, %s18
      // Predicated region
      $region57: #{tpu_custom_call.1} parent=5 // pred_check
        %p5612 = pneg %p5611
      $region58: #{tpu_custom_call.1} parent=5 // pred_check_branch
        %5614 = sbr.rel (%p5612) target = $region60
      $region59: #{tpu_custom_call.1} parent=5 // pred_region
        %s5615 = ssub.s32 %s18, 2
        // Predicated region
        $region61: #{tpu_custom_call.1} parent=59 // pred_check
          %p5616 = pneg %p136
        $region62: #{tpu_custom_call.1} parent=59 // pred_check_branch
          %5618 = sbr.rel (%p5616) target = $region64
        $region63: #{tpu_custom_call.1} parent=59 // pred_region
          %s5619 = sand.u32 %s121, 1
          %s5620 = scalar_lea.sflag [#allocation4], %s5619
          %s5621 = sand.u32 %s121, 1
          %s5622 = smul.addr %s5621, 24
          %s5623 = scalar_lea.vmem [#allocation10], %s5622
          %5624 = dma.done %s5620, 384
        $region64: #{tpu_custom_call.1} parent=59 // pred_fallthru
          _
      $region60: #{tpu_custom_call.1} parent=5 // pred_fallthru
        _
    $region6: #{tpu_custom_call.1} parent=1 // loop_footer
      %s22 = sadd.s32 1, %s18
    $region7: #{tpu_custom_call.1} parent=1 // loop_footer_branch
      %17 = sbr.rel target = $region3
    $region8: #{tpu_custom_call.1} parent=1 // loop_exit
      _
    %5625 = vsyncpa [#allocation3], 1
    %s5626 = scalar_lea.sflag [#allocation3], 1
    %5627 = vsyncpa %s5626, 1
    %5628 = vsyncpa [#allocation6], 1
    %5629 = vsyncpa [#allocation9], 1
    %5630 = vsyncpa [#allocation4], 1
    %s5631 = scalar_lea.sflag [#allocation4], 1
    %5632 = vsyncpa %s5631, 1

</llo_original>
